<compile_context>
chip_gen: v7x
topology: tpu7x:2x2x1
jax: 0.10.0
libtpu: 0.0.40
codegen_flags: <defaults>
</compile_context>

<pallas_src>
import jax
import jax.numpy as jnp
import numpy as np
from jax import lax
from jax.experimental import pallas as pl
from jax.experimental.pallas import tpu as pltpu

CP = 128  # every conv channel count / classifier-output count is padded to 128 lanes


# ---------------------------------------------------------------------------
# fused kernel: 6 x [Conv2d((1,3), pad (0,1)) + ReLU + MaxPool(1,2)]  ->  MLP
# ---------------------------------------------------------------------------
def audionet_kernel(x_ref, wc_ref, bc_ref, w1_hbm, b1_ref, w2_hbm, b2_ref,
                    w3_ref, b3_ref, o_ref,
                    pad_ref, w1v_ref, w2v_ref, dma_sem):
    """Whole AudioNet forward, VMEM-resident.

    x_ref   : (B, L0, 1)        f32   raw input (Cin == 1)
    wc_ref  : (NL, 3, CP, CP)   bf16  conv weights per layer / tap (cin, cout)
    bc_ref  : (NL, 1, CP)       f32   conv biases (zero in padded lanes)
    w1_hbm  : (Lf, CP, H1)      bf16  fc1 (HBM; DMA'd in-kernel), channel-major flatten folded in
    b1_ref  : (1, H1)           f32
    w2_hbm  : (H1, H2)          bf16  fc2 (HBM; DMA'd in-kernel)     b2_ref: (1, H2) f32
    w3_ref  : (H2, CP)          bf16  fc3, classes padded to 128      b3_ref: (1, CP) f32
    o_ref   : (B, 1, CP)        f32   lane-padded logits
    pad_ref : (B, L0+16, CP)    f32   scratch for in-kernel "same" padding
    w1v_ref / w2v_ref           bf16  VMEM landing buffers for the fc-weight DMA
    dma_sem : DMA semaphores (2,)
    """
    B, L0, _ = x_ref.shape
    n_layers = wc_ref.shape[0]
    cp = wc_ref.shape[-1]
    f32, bf16 = jnp.float32, jnp.bfloat16
    dn = (((2,), (0,)), ((), ()))            # contract lanes of (B,M,K) with (K,N)

    # ---- kick off FC-weight DMA; it hides behind the whole conv stack -------
    w1_copy = pltpu.make_async_copy(w1_hbm, w1v_ref, dma_sem.at[0])
    w2_copy = pltpu.make_async_copy(w2_hbm, w2v_ref, dma_sem.at[1])
    w1_copy.start()
    w2_copy.start()

    # hoisted zero blocks (JAX does not CSE broadcasts inside the unrolled loop)
    zpad8 = jnp.zeros((B, 8, cp), f32)
    zrow1 = jnp.zeros((B, 1, cp), f32)
    pad_ref[:, 0:8, :] = zpad8               # left "same" pad (taps read row 7)

    # Layer-0 input (Cin == 1): lane-broadcast x; only cin-row 0 of wc[0] is
    # non-zero, so the replicated lanes contribute nothing to the matmul.
    h = jnp.broadcast_to(x_ref[...], (B, L0, cp))
    L = L0
    for layer in range(n_layers):
        # ---- activations into the pad buffer at sublane-aligned offset 8 ----
        pad_ref[:, 8:8 + L, :] = h
        pad_ref[:, 8 + L:9 + L, :] = zrow1   # single right "same"-pad zero row
        Lh = L // 2

        # ---- Conv(1,3) + bias + ReLU + MaxPool(1,2), fused ------------------
        # even conv outputs y[2m] read pad rows {7,8,9}+2m, odd y[2m+1] read
        # {8,9,10}+2m: four shared stride-2 tap views, six K=128 MXU passes,
        # then pool = one VPU max (monotone bias+ReLU commutes with max).
        t = [pad_ref[:, pl.ds(7 + s, Lh, stride=2), :].astype(bf16)
             for s in range(4)]              # (B, Lh, CP) each
        w = [wc_ref[layer, k] for k in range(3)]
        ye = (lax.dot_general(t[0], w[0], dn, preferred_element_type=f32)
              + lax.dot_general(t[1], w[1], dn, preferred_element_type=f32)
              + lax.dot_general(t[2], w[2], dn, preferred_element_type=f32))
        yo = (lax.dot_general(t[1], w[0], dn, preferred_element_type=f32)
              + lax.dot_general(t[2], w[1], dn, preferred_element_type=f32)
              + lax.dot_general(t[3], w[2], dn, preferred_element_type=f32))
        h = jnp.maximum(jnp.maximum(ye, yo) + bc_ref[layer], 0.0)   # (B, Lh, CP)
        L = Lh

    # ---- classifier: Linear/ReLU/Dropout x2 + Linear (Dropout = identity) ----
    # TODO(synk): training-mode Dropout RNG masking not implemented (inference forward).
    # PyTorch flattens (B, C, 1, Lf) channel-major; w1 is packed as (Lf, CP, H1)
    # so the flatten is Lf lane-contracting matmuls (Lf == 1 for input_len 64).
    w1_copy.wait()                                                   # fc1 weights landed
    hf = h.astype(bf16)                                              # (B, Lf, CP)
    h1 = None
    for l in range(hf.shape[1]):
        p = lax.dot_general(hf[:, l:l + 1, :], w1v_ref[l], dn,
                            preferred_element_type=f32)
        h1 = p if h1 is None else h1 + p
    h1 = jnp.maximum(h1 + b1_ref[...], 0.0)                          # (B, 1, H1)

    w2_copy.wait()                                                   # fc2 weights landed
    h2 = lax.dot_general(h1.astype(bf16), w2v_ref[...], dn,
                         preferred_element_type=f32)
    h2 = jnp.maximum(h2 + b2_ref[...], 0.0)                          # (B, 1, H2)

    o_ref[...] = lax.dot_general(h2.astype(bf16), w3_ref[...], dn,
                                 preferred_element_type=f32) + b3_ref[...]


# ---------------------------------------------------------------------------
# wrapper: one pallas_call, grid=(), everything whole-array resident
# ---------------------------------------------------------------------------
def audionet_forward(x, packed, *, num_classes):
    """x: (B, Cin, 1, L) NCHW input with H == 1 (AudioNet's 4-D no-transpose branch)."""
    B, cin, _, L0 = x.shape
    assert cin == 1
    cp = packed["wconv"].shape[-1]
    n_layers = packed["wconv"].shape[0]
    Lf, _, H1 = packed["w1"].shape
    H2 = packed["b2"].shape[-1]
    ncp = packed["b3"].shape[-1]

    xk = x.reshape(B, L0, 1).astype(jnp.float32)     # tiny; no 128-lane host pad

    # advisory cost hint for XLA scheduling around this very small custom call
    flops, Lc = 0, L0
    for _ in range(n_layers):
        flops += 2 * B * Lc * 3 * cp * cp
        Lc //= 2
    flops += 2 * B * (Lf * cp * H1 + H1 * H2 + H2 * ncp)
    bytes_accessed = int(sum(int(v.size) * v.dtype.itemsize for v in packed.values())
                         + xk.size * 4 + B * ncp * 4)

    out = pl.pallas_call(
        audionet_kernel,
        out_shape=jax.ShapeDtypeStruct((B, 1, ncp), jnp.float32),
        in_specs=[
            pl.BlockSpec(memory_space=pltpu.MemorySpace.VMEM),   # x
            pl.BlockSpec(memory_space=pltpu.MemorySpace.VMEM),   # wconv
            pl.BlockSpec(memory_space=pltpu.MemorySpace.VMEM),   # bconv
            pl.BlockSpec(memory_space=pl.ANY),                   # w1 (DMA'd in-kernel)
            pl.BlockSpec(memory_space=pltpu.MemorySpace.VMEM),   # b1
            pl.BlockSpec(memory_space=pl.ANY),                   # w2 (DMA'd in-kernel)
            pl.BlockSpec(memory_space=pltpu.MemorySpace.VMEM),   # b2
            pl.BlockSpec(memory_space=pltpu.MemorySpace.VMEM),   # w3
            pl.BlockSpec(memory_space=pltpu.MemorySpace.VMEM),   # b3
        ],
        out_specs=pl.BlockSpec(memory_space=pltpu.MemorySpace.VMEM),
        scratch_shapes=[
            pltpu.VMEM((B, L0 + 16, cp), jnp.float32),           # pad buffer
            pltpu.VMEM((Lf, cp, H1), jnp.bfloat16),              # fc1 landing buffer
            pltpu.VMEM((H1, H2), jnp.bfloat16),                  # fc2 landing buffer
            pltpu.SemaphoreType.DMA((2,)),
        ],
        compiler_params=pltpu.CompilerParams(vmem_limit_bytes=16 << 20),
        cost_estimate=pl.CostEstimate(flops=int(flops), transcendentals=0,
                                      bytes_accessed=bytes_accessed),
    )(xk, packed["wconv"], packed["bconv"], packed["w1"], packed["b1"],
      packed["w2"], packed["b2"], packed["w3"], packed["b3"])
    return out[:, 0, :num_classes]


# ---------------------------------------------------------------------------
# parameter packing: pad channels / classes to 128 lanes, bf16 weights
# ---------------------------------------------------------------------------
def pack_params(conv_params, fc_params, cp=CP, ncp=CP):
    wstack, bstack = [], []
    for w, b in conv_params:                 # w: (3, Cin, Cout), b: (Cout,)
        k, cin, cout = w.shape
        assert cin <= cp and cout <= cp
        wp = jnp.zeros((k, cp, cp), jnp.float32).at[:, :cin, :cout].set(w)
        bp = jnp.zeros((cp,), jnp.float32).at[:cout].set(b)
        wstack.append(wp)                    # (3, CP, CP): [tap, cin, cout]
        bstack.append(bp.reshape(1, cp))
    w1, b1, w2, b2, w3, b3 = fc_params
    cout_last = conv_params[-1][0].shape[2]
    lf = w1.shape[0] // cout_last
    # PyTorch NCHW flatten is channel-major: fc1 row index = c*Lf + l -> (Lf, CP, H1)
    w1p = w1.reshape(cout_last, lf, w1.shape[1])
    w1p = jnp.zeros((cp, lf, w1.shape[1]), jnp.float32).at[:cout_last].set(w1p)
    w1p = jnp.transpose(w1p, (1, 0, 2))
    nc = w3.shape[1]
    assert nc <= ncp
    w3p = jnp.zeros((w3.shape[0], ncp), jnp.float32).at[:, :nc].set(w3)
    b3p = jnp.zeros((ncp,), jnp.float32).at[:nc].set(b3)
    return dict(
        wconv=jnp.stack(wstack).astype(jnp.bfloat16),   # (NL, 3, CP, CP)
        bconv=jnp.stack(bstack),                        # (NL, 1, CP) f32
        w1=w1p.astype(jnp.bfloat16), b1=b1.reshape(1, -1).astype(jnp.float32),
        w2=w2.astype(jnp.bfloat16), b2=b2.reshape(1, -1).astype(jnp.float32),
        w3=w3p.astype(jnp.bfloat16), b3=b3p.reshape(1, -1).astype(jnp.float32),
    )


# ---------------------------------------------------------------------------
# deterministic synthetic init (PyTorch-like uniform(-1/sqrt(fan_in)))
# ---------------------------------------------------------------------------
def init_params(key, in_channels, input_len, num_classes):
    channels = [in_channels, 100, 64, 128, 128, 128, 128]
    conv_params = []
    L = input_len
    for i in range(len(channels) - 1):
        cin, cout = channels[i], channels[i + 1]
        key, kw, kb = jax.random.split(key, 3)
        bound = 1.0 / float(np.sqrt(cin * 3))
        w = jax.random.uniform(kw, (3, cin, cout), jnp.float32, -bound, bound)
        b = jax.random.uniform(kb, (cout,), jnp.float32, -bound, bound)
        conv_params.append((w, b))
        L = (L + 2 - 2 - 1) // 1 + 1          # conv (same length)
        L = (L - 2) // 2 + 1                  # maxpool (1,2)/(1,2)
    dims = [128 * L, 1024, 512, num_classes]
    fc_params = []
    for i in range(3):
        key, kw, kb = jax.random.split(key, 3)
        bound = 1.0 / float(np.sqrt(dims[i]))
        w = jax.random.uniform(kw, (dims[i], dims[i + 1]), jnp.float32, -bound, bound)
        b = jax.random.uniform(kb, (dims[i + 1],), jnp.float32, -bound, bound)
        fc_params.extend([w, b])
    return conv_params, tuple(fc_params)


# ---------------------------------------------------------------------------
# pure-JAX f32 reference (exact PyTorch eval-mode semantics) for a sanity check
# ---------------------------------------------------------------------------
def reference_forward(x, conv_params, fc_params):
    hp = lax.Precision.HIGHEST
    h = jnp.transpose(x[:, :, 0, :], (0, 2, 1)).astype(jnp.float32)   # (B, L, Cin)
    for w, b in conv_params:
        B, L, _ = h.shape
        xp = jnp.pad(h, ((0, 0), (1, 1), (0, 0)))
        y = sum(jnp.einsum("blc,co->blo", xp[:, k:k + L, :], w[k], precision=hp)
                for k in range(3)) + b
        y = jnp.maximum(y, 0.0)
        h = jnp.max(y.reshape(B, L // 2, 2, -1), axis=2)
    feats = jnp.transpose(h, (0, 2, 1)).reshape(h.shape[0], -1)        # NCHW flatten
    w1, b1, w2, b2, w3, b3 = fc_params
    h1 = jnp.maximum(jnp.dot(feats, w1, precision=hp) + b1, 0.0)
    h2 = jnp.maximum(jnp.dot(h1, w2, precision=hp) + b2, 0.0)
    return jnp.dot(h2, w3, precision=hp) + b3


if __name__ == "__main__":
    B, C_IN, L_IN, NUM_CLASSES = 2, 1, 64, 10       # AudioNet(input_shape=(1, 64), 10)
    key = jax.random.PRNGKey(0)
    kx, kp = jax.random.split(key)
    x = jax.random.normal(kx, (B, C_IN, 1, L_IN), jnp.float32)   # NCHW, H == 1
    conv_params, fc_params = init_params(kp, C_IN, L_IN, NUM_CLASSES)
    packed = pack_params(conv_params, fc_params)

    fwd = jax.jit(audionet_forward, static_argnames=("num_classes",))
    logits = fwd(x, packed, num_classes=NUM_CLASSES)
    jax.block_until_ready(logits)
    assert logits.shape == (B, NUM_CLASSES), logits.shape
    assert bool(jnp.all(jnp.isfinite(logits)))

    ref = reference_forward(x, conv_params, fc_params)
    # bf16 weight storage (f32 accumulation) is the dominant error source.
    np.testing.assert_allclose(np.asarray(logits), np.asarray(ref), rtol=0.1, atol=0.02)
    print("KERNEL_OK")
</pallas_src>

<mosaic_0001>
module attributes {stable_mosaic.version = 11 : i64} {
  func.func @audionet_kernel(%arg0: memref<2x64x1xf32, #tpu.memory_space<vmem>>, %arg1: memref<6x3x128x128xbf16, #tpu.memory_space<vmem>>, %arg2: memref<6x1x128xf32, #tpu.memory_space<vmem>>, %arg3: memref<1x128x1024xbf16, #tpu.memory_space<any>>, %arg4: memref<1x1024xf32, #tpu.memory_space<vmem>>, %arg5: memref<1024x512xbf16, #tpu.memory_space<any>>, %arg6: memref<1x512xf32, #tpu.memory_space<vmem>>, %arg7: memref<512x128xbf16, #tpu.memory_space<vmem>>, %arg8: memref<1x128xf32, #tpu.memory_space<vmem>>, %arg9: memref<2x1x128xf32, #tpu.memory_space<vmem>>, %arg10: memref<2x80x128xf32, #tpu.memory_space<vmem>>, %arg11: memref<1x128x1024xbf16, #tpu.memory_space<vmem>>, %arg12: memref<1024x512xbf16, #tpu.memory_space<vmem>>, %arg13: memref<2x!tpu.dma_semaphore, #tpu.memory_space<semaphore_mem>>) attributes {dimension_semantics = [], scalar_prefetch = 0 : i64, scratch_operands = 4 : i64, tpu.core_type = #tpu.core_type<tc>} {
    %c0_i32 = arith.constant 0 : i32
    %0 = tpu.memref_slice %arg13[%c0_i32] : memref<2x!tpu.dma_semaphore, #tpu.memory_space<semaphore_mem>> -> memref<1x!tpu.dma_semaphore, #tpu.memory_space<semaphore_mem>>
    %1 = tpu.memref_squeeze %0 : memref<1x!tpu.dma_semaphore, #tpu.memory_space<semaphore_mem>> -> memref<!tpu.dma_semaphore, #tpu.memory_space<semaphore_mem>>
    tpu.enqueue_dma source(%arg3 : memref<1x128x1024xbf16, #tpu.memory_space<any>>) target(%arg11 : memref<1x128x1024xbf16, #tpu.memory_space<vmem>>) target_semaphore(%1 : memref<!tpu.dma_semaphore, #tpu.memory_space<semaphore_mem>>)
    %c1_i32 = arith.constant 1 : i32
    %2 = tpu.memref_slice %arg13[%c1_i32] : memref<2x!tpu.dma_semaphore, #tpu.memory_space<semaphore_mem>> -> memref<1x!tpu.dma_semaphore, #tpu.memory_space<semaphore_mem>>
    %3 = tpu.memref_squeeze %2 : memref<1x!tpu.dma_semaphore, #tpu.memory_space<semaphore_mem>> -> memref<!tpu.dma_semaphore, #tpu.memory_space<semaphore_mem>>
    tpu.enqueue_dma source(%arg5 : memref<1024x512xbf16, #tpu.memory_space<any>>) target(%arg12 : memref<1024x512xbf16, #tpu.memory_space<vmem>>) target_semaphore(%3 : memref<!tpu.dma_semaphore, #tpu.memory_space<semaphore_mem>>)
    %cst = arith.constant 0.000000e+00 : f32
    %4 = vector.broadcast %cst : f32 to vector<2x8x128xf32>
    %cst_0 = arith.constant 0.000000e+00 : f32
    %5 = vector.broadcast %cst_0 : f32 to vector<2x1x128xf32>
    %c0 = arith.constant 0 : index
    %c0_1 = arith.constant 0 : index
    %c0_2 = arith.constant 0 : index
    %6 = vector.load %arg10[%c0, %c0_1, %c0_2] : memref<2x80x128xf32, #tpu.memory_space<vmem>>, vector<2x8x128xf32>
    tpu.vector_store %arg10[%c0, %c0_1, %c0_2], %4 {strides = array<i32>} : memref<2x80x128xf32, #tpu.memory_space<vmem>>, vector<2x8x128xf32>,
    %c0_3 = arith.constant 0 : index
    %c0_4 = arith.constant 0 : index
    %c0_5 = arith.constant 0 : index
    %7 = vector.load %arg0[%c0_3, %c0_4, %c0_5] : memref<2x64x1xf32, #tpu.memory_space<vmem>>, vector<2x64x1xf32>
    %8 = vector.shape_cast %7 : vector<2x64x1xf32> to vector<2x64x1xf32>
    %9 = vector.broadcast %8 : vector<2x64x1xf32> to vector<2x64x128xf32>
    %c0_6 = arith.constant 0 : index
    %c8 = arith.constant 8 : index
    %c0_7 = arith.constant 0 : index
    %10 = vector.load %arg10[%c0_6, %c8, %c0_7] : memref<2x80x128xf32, #tpu.memory_space<vmem>>, vector<2x64x128xf32>
    tpu.vector_store %arg10[%c0_6, %c8, %c0_7], %9 {strides = array<i32>} : memref<2x80x128xf32, #tpu.memory_space<vmem>>, vector<2x64x128xf32>,
    %c0_8 = arith.constant 0 : index
    %c72 = arith.constant 72 : index
    %c0_9 = arith.constant 0 : index
    %11 = vector.load %arg10[%c0_8, %c72, %c0_9] : memref<2x80x128xf32, #tpu.memory_space<vmem>>, vector<2x1x128xf32>
    tpu.vector_store %arg10[%c0_8, %c72, %c0_9], %5 {strides = array<i32>} : memref<2x80x128xf32, #tpu.memory_space<vmem>>, vector<2x1x128xf32>,
    %c0_10 = arith.constant 0 : index
    %c7 = arith.constant 7 : index
    %c0_11 = arith.constant 0 : index
    %12 = tpu.strided_load %arg10[%c0_10, %c7, %c0_11] {strides = array<i32: 1, 2, 1>} : memref<2x80x128xf32, #tpu.memory_space<vmem>>, vector<2x32x128xf32>
    %13 = arith.truncf %12 : vector<2x32x128xf32> to vector<2x32x128xbf16>
    %c0_12 = arith.constant 0 : index
    %c8_13 = arith.constant 8 : index
    %c0_14 = arith.constant 0 : index
    %14 = tpu.strided_load %arg10[%c0_12, %c8_13, %c0_14] {strides = array<i32: 1, 2, 1>} : memref<2x80x128xf32, #tpu.memory_space<vmem>>, vector<2x32x128xf32>
    %15 = arith.truncf %14 : vector<2x32x128xf32> to vector<2x32x128xbf16>
    %c0_15 = arith.constant 0 : index
    %c9 = arith.constant 9 : index
    %c0_16 = arith.constant 0 : index
    %16 = tpu.strided_load %arg10[%c0_15, %c9, %c0_16] {strides = array<i32: 1, 2, 1>} : memref<2x80x128xf32, #tpu.memory_space<vmem>>, vector<2x32x128xf32>
    %17 = arith.truncf %16 : vector<2x32x128xf32> to vector<2x32x128xbf16>
    %c0_17 = arith.constant 0 : index
    %c10 = arith.constant 10 : index
    %c0_18 = arith.constant 0 : index
    %18 = tpu.strided_load %arg10[%c0_17, %c10, %c0_18] {strides = array<i32: 1, 2, 1>} : memref<2x80x128xf32, #tpu.memory_space<vmem>>, vector<2x32x128xf32>
    %19 = arith.truncf %18 : vector<2x32x128xf32> to vector<2x32x128xbf16>
    %c0_19 = arith.constant 0 : index
    %c0_20 = arith.constant 0 : index
    %c0_21 = arith.constant 0 : index
    %c0_22 = arith.constant 0 : index
    %20 = vector.load %arg1[%c0_19, %c0_20, %c0_21, %c0_22] : memref<6x3x128x128xbf16, #tpu.memory_space<vmem>>, vector<1x1x128x128xbf16>
    %21 = vector.shape_cast %20 : vector<1x1x128x128xbf16> to vector<128x128xbf16>
    %c0_23 = arith.constant 0 : index
    %c1 = arith.constant 1 : index
    %c0_24 = arith.constant 0 : index
    %c0_25 = arith.constant 0 : index
    %22 = vector.load %arg1[%c0_23, %c1, %c0_24, %c0_25] : memref<6x3x128x128xbf16, #tpu.memory_space<vmem>>, vector<1x1x128x128xbf16>
    %23 = vector.shape_cast %22 : vector<1x1x128x128xbf16> to vector<128x128xbf16>
    %c0_26 = arith.constant 0 : index
    %c2 = arith.constant 2 : index
    %c0_27 = arith.constant 0 : index
    %c0_28 = arith.constant 0 : index
    %24 = vector.load %arg1[%c0_26, %c2, %c0_27, %c0_28] : memref<6x3x128x128xbf16, #tpu.memory_space<vmem>>, vector<1x1x128x128xbf16>
    %25 = vector.shape_cast %24 : vector<1x1x128x128xbf16> to vector<128x128xbf16>
    %cst_29 = arith.constant dense<0.000000e+00> : vector<2x32x128xf32>
    %26 = tpu.matmul %13, %21, %cst_29 {dimension_numbers = #tpu.dot_dimension_numbers<[2], [0], [0, 1], [1], [0, 0, 0, 1, 1, 1], [], []>} : vector<2x32x128xbf16>, vector<128x128xbf16>, vector<2x32x128xf32> -> vector<2x32x128xf32>
    %cst_30 = arith.constant dense<0.000000e+00> : vector<2x32x128xf32>
    %27 = tpu.matmul %15, %23, %cst_30 {dimension_numbers = #tpu.dot_dimension_numbers<[2], [0], [0, 1], [1], [0, 0, 0, 1, 1, 1], [], []>} : vector<2x32x128xbf16>, vector<128x128xbf16>, vector<2x32x128xf32> -> vector<2x32x128xf32>
    %28 = arith.addf %26, %27 : vector<2x32x128xf32>
    %cst_31 = arith.constant dense<0.000000e+00> : vector<2x32x128xf32>
    %29 = tpu.matmul %17, %25, %cst_31 {dimension_numbers = #tpu.dot_dimension_numbers<[2], [0], [0, 1], [1], [0, 0, 0, 1, 1, 1], [], []>} : vector<2x32x128xbf16>, vector<128x128xbf16>, vector<2x32x128xf32> -> vector<2x32x128xf32>
    %30 = arith.addf %28, %29 : vector<2x32x128xf32>
    %cst_32 = arith.constant dense<0.000000e+00> : vector<2x32x128xf32>
    %31 = tpu.matmul %15, %21, %cst_32 {dimension_numbers = #tpu.dot_dimension_numbers<[2], [0], [0, 1], [1], [0, 0, 0, 1, 1, 1], [], []>} : vector<2x32x128xbf16>, vector<128x128xbf16>, vector<2x32x128xf32> -> vector<2x32x128xf32>
    %cst_33 = arith.constant dense<0.000000e+00> : vector<2x32x128xf32>
    %32 = tpu.matmul %17, %23, %cst_33 {dimension_numbers = #tpu.dot_dimension_numbers<[2], [0], [0, 1], [1], [0, 0, 0, 1, 1, 1], [], []>} : vector<2x32x128xbf16>, vector<128x128xbf16>, vector<2x32x128xf32> -> vector<2x32x128xf32>
    %33 = arith.addf %31, %32 : vector<2x32x128xf32>
    %cst_34 = arith.constant dense<0.000000e+00> : vector<2x32x128xf32>
    %34 = tpu.matmul %19, %25, %cst_34 {dimension_numbers = #tpu.dot_dimension_numbers<[2], [0], [0, 1], [1], [0, 0, 0, 1, 1, 1], [], []>} : vector<2x32x128xbf16>, vector<128x128xbf16>, vector<2x32x128xf32> -> vector<2x32x128xf32>
    %35 = arith.addf %33, %34 : vector<2x32x128xf32>
    %36 = arith.maximumf %30, %35 : vector<2x32x128xf32>
    %c0_35 = arith.constant 0 : index
    %c0_36 = arith.constant 0 : index
    %c0_37 = arith.constant 0 : index
    %37 = vector.load %arg2[%c0_35, %c0_36, %c0_37] : memref<6x1x128xf32, #tpu.memory_space<vmem>>, vector<1x1x128xf32>
    %38 = vector.shape_cast %37 : vector<1x1x128xf32> to vector<1x128xf32>
    %39 = vector.shape_cast %38 : vector<1x128xf32> to vector<1x1x128xf32>
    %40 = vector.broadcast %39 : vector<1x1x128xf32> to vector<2x32x128xf32>
    %41 = arith.addf %36, %40 : vector<2x32x128xf32>
    %cst_38 = arith.constant 0.000000e+00 : f32
    %42 = vector.broadcast %cst_38 : f32 to vector<2x32x128xf32>
    %43 = arith.maximumf %41, %42 : vector<2x32x128xf32>
    %c0_39 = arith.constant 0 : index
    %c8_40 = arith.constant 8 : index
    %c0_41 = arith.constant 0 : index
    %44 = vector.load %arg10[%c0_39, %c8_40, %c0_41] : memref<2x80x128xf32, #tpu.memory_space<vmem>>, vector<2x32x128xf32>
    tpu.vector_store %arg10[%c0_39, %c8_40, %c0_41], %43 {strides = array<i32>} : memref<2x80x128xf32, #tpu.memory_space<vmem>>, vector<2x32x128xf32>,
    %c0_42 = arith.constant 0 : index
    %c40 = arith.constant 40 : index
    %c0_43 = arith.constant 0 : index
    %45 = vector.load %arg10[%c0_42, %c40, %c0_43] : memref<2x80x128xf32, #tpu.memory_space<vmem>>, vector<2x1x128xf32>
    tpu.vector_store %arg10[%c0_42, %c40, %c0_43], %5 {strides = array<i32>} : memref<2x80x128xf32, #tpu.memory_space<vmem>>, vector<2x1x128xf32>,
    %c0_44 = arith.constant 0 : index
    %c7_45 = arith.constant 7 : index
    %c0_46 = arith.constant 0 : index
    %46 = tpu.strided_load %arg10[%c0_44, %c7_45, %c0_46] {strides = array<i32: 1, 2, 1>} : memref<2x80x128xf32, #tpu.memory_space<vmem>>, vector<2x16x128xf32>
    %47 = arith.truncf %46 : vector<2x16x128xf32> to vector<2x16x128xbf16>
    %c0_47 = arith.constant 0 : index
    %c8_48 = arith.constant 8 : index
    %c0_49 = arith.constant 0 : index
    %48 = tpu.strided_load %arg10[%c0_47, %c8_48, %c0_49] {strides = array<i32: 1, 2, 1>} : memref<2x80x128xf32, #tpu.memory_space<vmem>>, vector<2x16x128xf32>
    %49 = arith.truncf %48 : vector<2x16x128xf32> to vector<2x16x128xbf16>
    %c0_50 = arith.constant 0 : index
    %c9_51 = arith.constant 9 : index
    %c0_52 = arith.constant 0 : index
    %50 = tpu.strided_load %arg10[%c0_50, %c9_51, %c0_52] {strides = array<i32: 1, 2, 1>} : memref<2x80x128xf32, #tpu.memory_space<vmem>>, vector<2x16x128xf32>
    %51 = arith.truncf %50 : vector<2x16x128xf32> to vector<2x16x128xbf16>
    %c0_53 = arith.constant 0 : index
    %c10_54 = arith.constant 10 : index
    %c0_55 = arith.constant 0 : index
    %52 = tpu.strided_load %arg10[%c0_53, %c10_54, %c0_55] {strides = array<i32: 1, 2, 1>} : memref<2x80x128xf32, #tpu.memory_space<vmem>>, vector<2x16x128xf32>
    %53 = arith.truncf %52 : vector<2x16x128xf32> to vector<2x16x128xbf16>
    %c1_56 = arith.constant 1 : index
    %c0_57 = arith.constant 0 : index
    %c0_58 = arith.constant 0 : index
    %c0_59 = arith.constant 0 : index
    %54 = vector.load %arg1[%c1_56, %c0_57, %c0_58, %c0_59] : memref<6x3x128x128xbf16, #tpu.memory_space<vmem>>, vector<1x1x128x128xbf16>
    %55 = vector.shape_cast %54 : vector<1x1x128x128xbf16> to vector<128x128xbf16>
    %c1_60 = arith.constant 1 : index
    %c1_61 = arith.constant 1 : index
    %c0_62 = arith.constant 0 : index
    %c0_63 = arith.constant 0 : index
    %56 = vector.load %arg1[%c1_60, %c1_61, %c0_62, %c0_63] : memref<6x3x128x128xbf16, #tpu.memory_space<vmem>>, vector<1x1x128x128xbf16>
    %57 = vector.shape_cast %56 : vector<1x1x128x128xbf16> to vector<128x128xbf16>
    %c1_64 = arith.constant 1 : index
    %c2_65 = arith.constant 2 : index
    %c0_66 = arith.constant 0 : index
    %c0_67 = arith.constant 0 : index
    %58 = vector.load %arg1[%c1_64, %c2_65, %c0_66, %c0_67] : memref<6x3x128x128xbf16, #tpu.memory_space<vmem>>, vector<1x1x128x128xbf16>
    %59 = vector.shape_cast %58 : vector<1x1x128x128xbf16> to vector<128x128xbf16>
    %cst_68 = arith.constant dense<0.000000e+00> : vector<2x16x128xf32>
    %60 = tpu.matmul %47, %55, %cst_68 {dimension_numbers = #tpu.dot_dimension_numbers<[2], [0], [0, 1], [1], [0, 0, 0, 1, 1, 1], [], []>} : vector<2x16x128xbf16>, vector<128x128xbf16>, vector<2x16x128xf32> -> vector<2x16x128xf32>
    %cst_69 = arith.constant dense<0.000000e+00> : vector<2x16x128xf32>
    %61 = tpu.matmul %49, %57, %cst_69 {dimension_numbers = #tpu.dot_dimension_numbers<[2], [0], [0, 1], [1], [0, 0, 0, 1, 1, 1], [], []>} : vector<2x16x128xbf16>, vector<128x128xbf16>, vector<2x16x128xf32> -> vector<2x16x128xf32>
    %62 = arith.addf %60, %61 : vector<2x16x128xf32>
    %cst_70 = arith.constant dense<0.000000e+00> : vector<2x16x128xf32>
    %63 = tpu.matmul %51, %59, %cst_70 {dimension_numbers = #tpu.dot_dimension_numbers<[2], [0], [0, 1], [1], [0, 0, 0, 1, 1, 1], [], []>} : vector<2x16x128xbf16>, vector<128x128xbf16>, vector<2x16x128xf32> -> vector<2x16x128xf32>
    %64 = arith.addf %62, %63 : vector<2x16x128xf32>
    %cst_71 = arith.constant dense<0.000000e+00> : vector<2x16x128xf32>
    %65 = tpu.matmul %49, %55, %cst_71 {dimension_numbers = #tpu.dot_dimension_numbers<[2], [0], [0, 1], [1], [0, 0, 0, 1, 1, 1], [], []>} : vector<2x16x128xbf16>, vector<128x128xbf16>, vector<2x16x128xf32> -> vector<2x16x128xf32>
    %cst_72 = arith.constant dense<0.000000e+00> : vector<2x16x128xf32>
    %66 = tpu.matmul %51, %57, %cst_72 {dimension_numbers = #tpu.dot_dimension_numbers<[2], [0], [0, 1], [1], [0, 0, 0, 1, 1, 1], [], []>} : vector<2x16x128xbf16>, vector<128x128xbf16>, vector<2x16x128xf32> -> vector<2x16x128xf32>
    %67 = arith.addf %65, %66 : vector<2x16x128xf32>
    %cst_73 = arith.constant dense<0.000000e+00> : vector<2x16x128xf32>
    %68 = tpu.matmul %53, %59, %cst_73 {dimension_numbers = #tpu.dot_dimension_numbers<[2], [0], [0, 1], [1], [0, 0, 0, 1, 1, 1], [], []>} : vector<2x16x128xbf16>, vector<128x128xbf16>, vector<2x16x128xf32> -> vector<2x16x128xf32>
    %69 = arith.addf %67, %68 : vector<2x16x128xf32>
    %70 = arith.maximumf %64, %69 : vector<2x16x128xf32>
    %c1_74 = arith.constant 1 : index
    %c0_75 = arith.constant 0 : index
    %c0_76 = arith.constant 0 : index
    %71 = vector.load %arg2[%c1_74, %c0_75, %c0_76] : memref<6x1x128xf32, #tpu.memory_space<vmem>>, vector<1x1x128xf32>
    %72 = vector.shape_cast %71 : vector<1x1x128xf32> to vector<1x128xf32>
    %73 = vector.shape_cast %72 : vector<1x128xf32> to vector<1x1x128xf32>
    %74 = vector.broadcast %73 : vector<1x1x128xf32> to vector<2x16x128xf32>
    %75 = arith.addf %70, %74 : vector<2x16x128xf32>
    %cst_77 = arith.constant 0.000000e+00 : f32
    %76 = vector.broadcast %cst_77 : f32 to vector<2x16x128xf32>
    %77 = arith.maximumf %75, %76 : vector<2x16x128xf32>
    %c0_78 = arith.constant 0 : index
    %c8_79 = arith.constant 8 : index
    %c0_80 = arith.constant 0 : index
    %78 = vector.load %arg10[%c0_78, %c8_79, %c0_80] : memref<2x80x128xf32, #tpu.memory_space<vmem>>, vector<2x16x128xf32>
    tpu.vector_store %arg10[%c0_78, %c8_79, %c0_80], %77 {strides = array<i32>} : memref<2x80x128xf32, #tpu.memory_space<vmem>>, vector<2x16x128xf32>,
    %c0_81 = arith.constant 0 : index
    %c24 = arith.constant 24 : index
    %c0_82 = arith.constant 0 : index
    %79 = vector.load %arg10[%c0_81, %c24, %c0_82] : memref<2x80x128xf32, #tpu.memory_space<vmem>>, vector<2x1x128xf32>
    tpu.vector_store %arg10[%c0_81, %c24, %c0_82], %5 {strides = array<i32>} : memref<2x80x128xf32, #tpu.memory_space<vmem>>, vector<2x1x128xf32>,
    %c0_83 = arith.constant 0 : index
    %c7_84 = arith.constant 7 : index
    %c0_85 = arith.constant 0 : index
    %80 = tpu.strided_load %arg10[%c0_83, %c7_84, %c0_85] {strides = array<i32: 1, 2, 1>} : memref<2x80x128xf32, #tpu.memory_space<vmem>>, vector<2x8x128xf32>
    %81 = arith.truncf %80 : vector<2x8x128xf32> to vector<2x8x128xbf16>
    %c0_86 = arith.constant 0 : index
    %c8_87 = arith.constant 8 : index
    %c0_88 = arith.constant 0 : index
    %82 = tpu.strided_load %arg10[%c0_86, %c8_87, %c0_88] {strides = array<i32: 1, 2, 1>} : memref<2x80x128xf32, #tpu.memory_space<vmem>>, vector<2x8x128xf32>
    %83 = arith.truncf %82 : vector<2x8x128xf32> to vector<2x8x128xbf16>
    %c0_89 = arith.constant 0 : index
    %c9_90 = arith.constant 9 : index
    %c0_91 = arith.constant 0 : index
    %84 = tpu.strided_load %arg10[%c0_89, %c9_90, %c0_91] {strides = array<i32: 1, 2, 1>} : memref<2x80x128xf32, #tpu.memory_space<vmem>>, vector<2x8x128xf32>
    %85 = arith.truncf %84 : vector<2x8x128xf32> to vector<2x8x128xbf16>
    %c0_92 = arith.constant 0 : index
    %c10_93 = arith.constant 10 : index
    %c0_94 = arith.constant 0 : index
    %86 = tpu.strided_load %arg10[%c0_92, %c10_93, %c0_94] {strides = array<i32: 1, 2, 1>} : memref<2x80x128xf32, #tpu.memory_space<vmem>>, vector<2x8x128xf32>
    %87 = arith.truncf %86 : vector<2x8x128xf32> to vector<2x8x128xbf16>
    %c2_95 = arith.constant 2 : index
    %c0_96 = arith.constant 0 : index
    %c0_97 = arith.constant 0 : index
    %c0_98 = arith.constant 0 : index
    %88 = vector.load %arg1[%c2_95, %c0_96, %c0_97, %c0_98] : memref<6x3x128x128xbf16, #tpu.memory_space<vmem>>, vector<1x1x128x128xbf16>
    %89 = vector.shape_cast %88 : vector<1x1x128x128xbf16> to vector<128x128xbf16>
    %c2_99 = arith.constant 2 : index
    %c1_100 = arith.constant 1 : index
    %c0_101 = arith.constant 0 : index
    %c0_102 = arith.constant 0 : index
    %90 = vector.load %arg1[%c2_99, %c1_100, %c0_101, %c0_102] : memref<6x3x128x128xbf16, #tpu.memory_space<vmem>>, vector<1x1x128x128xbf16>
    %91 = vector.shape_cast %90 : vector<1x1x128x128xbf16> to vector<128x128xbf16>
    %c2_103 = arith.constant 2 : index
    %c2_104 = arith.constant 2 : index
    %c0_105 = arith.constant 0 : index
    %c0_106 = arith.constant 0 : index
    %92 = vector.load %arg1[%c2_103, %c2_104, %c0_105, %c0_106] : memref<6x3x128x128xbf16, #tpu.memory_space<vmem>>, vector<1x1x128x128xbf16>
    %93 = vector.shape_cast %92 : vector<1x1x128x128xbf16> to vector<128x128xbf16>
    %cst_107 = arith.constant dense<0.000000e+00> : vector<2x8x128xf32>
    %94 = tpu.matmul %81, %89, %cst_107 {dimension_numbers = #tpu.dot_dimension_numbers<[2], [0], [0, 1], [1], [0, 0, 0, 1, 1, 1], [], []>} : vector<2x8x128xbf16>, vector<128x128xbf16>, vector<2x8x128xf32> -> vector<2x8x128xf32>
    %cst_108 = arith.constant dense<0.000000e+00> : vector<2x8x128xf32>
    %95 = tpu.matmul %83, %91, %cst_108 {dimension_numbers = #tpu.dot_dimension_numbers<[2], [0], [0, 1], [1], [0, 0, 0, 1, 1, 1], [], []>} : vector<2x8x128xbf16>, vector<128x128xbf16>, vector<2x8x128xf32> -> vector<2x8x128xf32>
    %96 = arith.addf %94, %95 : vector<2x8x128xf32>
    %cst_109 = arith.constant dense<0.000000e+00> : vector<2x8x128xf32>
    %97 = tpu.matmul %85, %93, %cst_109 {dimension_numbers = #tpu.dot_dimension_numbers<[2], [0], [0, 1], [1], [0, 0, 0, 1, 1, 1], [], []>} : vector<2x8x128xbf16>, vector<128x128xbf16>, vector<2x8x128xf32> -> vector<2x8x128xf32>
    %98 = arith.addf %96, %97 : vector<2x8x128xf32>
    %cst_110 = arith.constant dense<0.000000e+00> : vector<2x8x128xf32>
    %99 = tpu.matmul %83, %89, %cst_110 {dimension_numbers = #tpu.dot_dimension_numbers<[2], [0], [0, 1], [1], [0, 0, 0, 1, 1, 1], [], []>} : vector<2x8x128xbf16>, vector<128x128xbf16>, vector<2x8x128xf32> -> vector<2x8x128xf32>
    %cst_111 = arith.constant dense<0.000000e+00> : vector<2x8x128xf32>
    %100 = tpu.matmul %85, %91, %cst_111 {dimension_numbers = #tpu.dot_dimension_numbers<[2], [0], [0, 1], [1], [0, 0, 0, 1, 1, 1], [], []>} : vector<2x8x128xbf16>, vector<128x128xbf16>, vector<2x8x128xf32> -> vector<2x8x128xf32>
    %101 = arith.addf %99, %100 : vector<2x8x128xf32>
    %cst_112 = arith.constant dense<0.000000e+00> : vector<2x8x128xf32>
    %102 = tpu.matmul %87, %93, %cst_112 {dimension_numbers = #tpu.dot_dimension_numbers<[2], [0], [0, 1], [1], [0, 0, 0, 1, 1, 1], [], []>} : vector<2x8x128xbf16>, vector<128x128xbf16>, vector<2x8x128xf32> -> vector<2x8x128xf32>
    %103 = arith.addf %101, %102 : vector<2x8x128xf32>
    %104 = arith.maximumf %98, %103 : vector<2x8x128xf32>
    %c2_113 = arith.constant 2 : index
    %c0_114 = arith.constant 0 : index
    %c0_115 = arith.constant 0 : index
    %105 = vector.load %arg2[%c2_113, %c0_114, %c0_115] : memref<6x1x128xf32, #tpu.memory_space<vmem>>, vector<1x1x128xf32>
    %106 = vector.shape_cast %105 : vector<1x1x128xf32> to vector<1x128xf32>
    %107 = vector.shape_cast %106 : vector<1x128xf32> to vector<1x1x128xf32>
    %108 = vector.broadcast %107 : vector<1x1x128xf32> to vector<2x8x128xf32>
    %109 = arith.addf %104, %108 : vector<2x8x128xf32>
    %cst_116 = arith.constant 0.000000e+00 : f32
    %110 = vector.broadcast %cst_116 : f32 to vector<2x8x128xf32>
    %111 = arith.maximumf %109, %110 : vector<2x8x128xf32>
    %c0_117 = arith.constant 0 : index
    %c8_118 = arith.constant 8 : index
    %c0_119 = arith.constant 0 : index
    %112 = vector.load %arg10[%c0_117, %c8_118, %c0_119] : memref<2x80x128xf32, #tpu.memory_space<vmem>>, vector<2x8x128xf32>
    tpu.vector_store %arg10[%c0_117, %c8_118, %c0_119], %111 {strides = array<i32>} : memref<2x80x128xf32, #tpu.memory_space<vmem>>, vector<2x8x128xf32>,
    %c0_120 = arith.constant 0 : index
    %c16 = arith.constant 16 : index
    %c0_121 = arith.constant 0 : index
    %113 = vector.load %arg10[%c0_120, %c16, %c0_121] : memref<2x80x128xf32, #tpu.memory_space<vmem>>, vector<2x1x128xf32>
    tpu.vector_store %arg10[%c0_120, %c16, %c0_121], %5 {strides = array<i32>} : memref<2x80x128xf32, #tpu.memory_space<vmem>>, vector<2x1x128xf32>,
    %c0_122 = arith.constant 0 : index
    %c7_123 = arith.constant 7 : index
    %c0_124 = arith.constant 0 : index
    %114 = tpu.strided_load %arg10[%c0_122, %c7_123, %c0_124] {strides = array<i32: 1, 2, 1>} : memref<2x80x128xf32, #tpu.memory_space<vmem>>, vector<2x4x128xf32>
    %115 = arith.truncf %114 : vector<2x4x128xf32> to vector<2x4x128xbf16>
    %c0_125 = arith.constant 0 : index
    %c8_126 = arith.constant 8 : index
    %c0_127 = arith.constant 0 : index
    %116 = tpu.strided_load %arg10[%c0_125, %c8_126, %c0_127] {strides = array<i32: 1, 2, 1>} : memref<2x80x128xf32, #tpu.memory_space<vmem>>, vector<2x4x128xf32>
    %117 = arith.truncf %116 : vector<2x4x128xf32> to vector<2x4x128xbf16>
    %c0_128 = arith.constant 0 : index
    %c9_129 = arith.constant 9 : index
    %c0_130 = arith.constant 0 : index
    %118 = tpu.strided_load %arg10[%c0_128, %c9_129, %c0_130] {strides = array<i32: 1, 2, 1>} : memref<2x80x128xf32, #tpu.memory_space<vmem>>, vector<2x4x128xf32>
    %119 = arith.truncf %118 : vector<2x4x128xf32> to vector<2x4x128xbf16>
    %c0_131 = arith.constant 0 : index
    %c10_132 = arith.constant 10 : index
    %c0_133 = arith.constant 0 : index
    %120 = tpu.strided_load %arg10[%c0_131, %c10_132, %c0_133] {strides = array<i32: 1, 2, 1>} : memref<2x80x128xf32, #tpu.memory_space<vmem>>, vector<2x4x128xf32>
    %121 = arith.truncf %120 : vector<2x4x128xf32> to vector<2x4x128xbf16>
    %c3 = arith.constant 3 : index
    %c0_134 = arith.constant 0 : index
    %c0_135 = arith.constant 0 : index
    %c0_136 = arith.constant 0 : index
    %122 = vector.load %arg1[%c3, %c0_134, %c0_135, %c0_136] : memref<6x3x128x128xbf16, #tpu.memory_space<vmem>>, vector<1x1x128x128xbf16>
    %123 = vector.shape_cast %122 : vector<1x1x128x128xbf16> to vector<128x128xbf16>
    %c3_137 = arith.constant 3 : index
    %c1_138 = arith.constant 1 : index
    %c0_139 = arith.constant 0 : index
    %c0_140 = arith.constant 0 : index
    %124 = vector.load %arg1[%c3_137, %c1_138, %c0_139, %c0_140] : memref<6x3x128x128xbf16, #tpu.memory_space<vmem>>, vector<1x1x128x128xbf16>
    %125 = vector.shape_cast %124 : vector<1x1x128x128xbf16> to vector<128x128xbf16>
    %c3_141 = arith.constant 3 : index
    %c2_142 = arith.constant 2 : index
    %c0_143 = arith.constant 0 : index
    %c0_144 = arith.constant 0 : index
    %126 = vector.load %arg1[%c3_141, %c2_142, %c0_143, %c0_144] : memref<6x3x128x128xbf16, #tpu.memory_space<vmem>>, vector<1x1x128x128xbf16>
    %127 = vector.shape_cast %126 : vector<1x1x128x128xbf16> to vector<128x128xbf16>
    %cst_145 = arith.constant dense<0.000000e+00> : vector<2x4x128xf32>
    %128 = tpu.matmul %115, %123, %cst_145 {dimension_numbers = #tpu.dot_dimension_numbers<[2], [0], [0, 1], [1], [0, 0, 0, 1, 1, 1], [], []>} : vector<2x4x128xbf16>, vector<128x128xbf16>, vector<2x4x128xf32> -> vector<2x4x128xf32>
    %cst_146 = arith.constant dense<0.000000e+00> : vector<2x4x128xf32>
    %129 = tpu.matmul %117, %125, %cst_146 {dimension_numbers = #tpu.dot_dimension_numbers<[2], [0], [0, 1], [1], [0, 0, 0, 1, 1, 1], [], []>} : vector<2x4x128xbf16>, vector<128x128xbf16>, vector<2x4x128xf32> -> vector<2x4x128xf32>
    %130 = arith.addf %128, %129 : vector<2x4x128xf32>
    %cst_147 = arith.constant dense<0.000000e+00> : vector<2x4x128xf32>
    %131 = tpu.matmul %119, %127, %cst_147 {dimension_numbers = #tpu.dot_dimension_numbers<[2], [0], [0, 1], [1], [0, 0, 0, 1, 1, 1], [], []>} : vector<2x4x128xbf16>, vector<128x128xbf16>, vector<2x4x128xf32> -> vector<2x4x128xf32>
    %132 = arith.addf %130, %131 : vector<2x4x128xf32>
    %cst_148 = arith.constant dense<0.000000e+00> : vector<2x4x128xf32>
    %133 = tpu.matmul %117, %123, %cst_148 {dimension_numbers = #tpu.dot_dimension_numbers<[2], [0], [0, 1], [1], [0, 0, 0, 1, 1, 1], [], []>} : vector<2x4x128xbf16>, vector<128x128xbf16>, vector<2x4x128xf32> -> vector<2x4x128xf32>
    %cst_149 = arith.constant dense<0.000000e+00> : vector<2x4x128xf32>
    %134 = tpu.matmul %119, %125, %cst_149 {dimension_numbers = #tpu.dot_dimension_numbers<[2], [0], [0, 1], [1], [0, 0, 0, 1, 1, 1], [], []>} : vector<2x4x128xbf16>, vector<128x128xbf16>, vector<2x4x128xf32> -> vector<2x4x128xf32>
    %135 = arith.addf %133, %134 : vector<2x4x128xf32>
    %cst_150 = arith.constant dense<0.000000e+00> : vector<2x4x128xf32>
    %136 = tpu.matmul %121, %127, %cst_150 {dimension_numbers = #tpu.dot_dimension_numbers<[2], [0], [0, 1], [1], [0, 0, 0, 1, 1, 1], [], []>} : vector<2x4x128xbf16>, vector<128x128xbf16>, vector<2x4x128xf32> -> vector<2x4x128xf32>
    %137 = arith.addf %135, %136 : vector<2x4x128xf32>
    %138 = arith.maximumf %132, %137 : vector<2x4x128xf32>
    %c3_151 = arith.constant 3 : index
    %c0_152 = arith.constant 0 : index
    %c0_153 = arith.constant 0 : index
    %139 = vector.load %arg2[%c3_151, %c0_152, %c0_153] : memref<6x1x128xf32, #tpu.memory_space<vmem>>, vector<1x1x128xf32>
    %140 = vector.shape_cast %139 : vector<1x1x128xf32> to vector<1x128xf32>
    %141 = vector.shape_cast %140 : vector<1x128xf32> to vector<1x1x128xf32>
    %142 = vector.broadcast %141 : vector<1x1x128xf32> to vector<2x4x128xf32>
    %143 = arith.addf %138, %142 : vector<2x4x128xf32>
    %cst_154 = arith.constant 0.000000e+00 : f32
    %144 = vector.broadcast %cst_154 : f32 to vector<2x4x128xf32>
    %145 = arith.maximumf %143, %144 : vector<2x4x128xf32>
    %c0_155 = arith.constant 0 : index
    %c8_156 = arith.constant 8 : index
    %c0_157 = arith.constant 0 : index
    %146 = vector.load %arg10[%c0_155, %c8_156, %c0_157] : memref<2x80x128xf32, #tpu.memory_space<vmem>>, vector<2x4x128xf32>
    tpu.vector_store %arg10[%c0_155, %c8_156, %c0_157], %145 {strides = array<i32>} : memref<2x80x128xf32, #tpu.memory_space<vmem>>, vector<2x4x128xf32>,
    %c0_158 = arith.constant 0 : index
    %c12 = arith.constant 12 : index
    %c0_159 = arith.constant 0 : index
    %147 = vector.load %arg10[%c0_158, %c12, %c0_159] : memref<2x80x128xf32, #tpu.memory_space<vmem>>, vector<2x1x128xf32>
    tpu.vector_store %arg10[%c0_158, %c12, %c0_159], %5 {strides = array<i32>} : memref<2x80x128xf32, #tpu.memory_space<vmem>>, vector<2x1x128xf32>,
    %c0_160 = arith.constant 0 : index
    %c7_161 = arith.constant 7 : index
    %c0_162 = arith.constant 0 : index
    %148 = tpu.strided_load %arg10[%c0_160, %c7_161, %c0_162] {strides = array<i32: 1, 2, 1>} : memref<2x80x128xf32, #tpu.memory_space<vmem>>, vector<2x2x128xf32>
    %149 = arith.truncf %148 : vector<2x2x128xf32> to vector<2x2x128xbf16>
    %c0_163 = arith.constant 0 : index
    %c8_164 = arith.constant 8 : index
    %c0_165 = arith.constant 0 : index
    %150 = tpu.strided_load %arg10[%c0_163, %c8_164, %c0_165] {strides = array<i32: 1, 2, 1>} : memref<2x80x128xf32, #tpu.memory_space<vmem>>, vector<2x2x128xf32>
    %151 = arith.truncf %150 : vector<2x2x128xf32> to vector<2x2x128xbf16>
    %c0_166 = arith.constant 0 : index
    %c9_167 = arith.constant 9 : index
    %c0_168 = arith.constant 0 : index
    %152 = tpu.strided_load %arg10[%c0_166, %c9_167, %c0_168] {strides = array<i32: 1, 2, 1>} : memref<2x80x128xf32, #tpu.memory_space<vmem>>, vector<2x2x128xf32>
    %153 = arith.truncf %152 : vector<2x2x128xf32> to vector<2x2x128xbf16>
    %c0_169 = arith.constant 0 : index
    %c10_170 = arith.constant 10 : index
    %c0_171 = arith.constant 0 : index
    %154 = tpu.strided_load %arg10[%c0_169, %c10_170, %c0_171] {strides = array<i32: 1, 2, 1>} : memref<2x80x128xf32, #tpu.memory_space<vmem>>, vector<2x2x128xf32>
    %155 = arith.truncf %154 : vector<2x2x128xf32> to vector<2x2x128xbf16>
    %c4 = arith.constant 4 : index
    %c0_172 = arith.constant 0 : index
    %c0_173 = arith.constant 0 : index
    %c0_174 = arith.constant 0 : index
    %156 = vector.load %arg1[%c4, %c0_172, %c0_173, %c0_174] : memref<6x3x128x128xbf16, #tpu.memory_space<vmem>>, vector<1x1x128x128xbf16>
    %157 = vector.shape_cast %156 : vector<1x1x128x128xbf16> to vector<128x128xbf16>
    %c4_175 = arith.constant 4 : index
    %c1_176 = arith.constant 1 : index
    %c0_177 = arith.constant 0 : index
    %c0_178 = arith.constant 0 : index
    %158 = vector.load %arg1[%c4_175, %c1_176, %c0_177, %c0_178] : memref<6x3x128x128xbf16, #tpu.memory_space<vmem>>, vector<1x1x128x128xbf16>
    %159 = vector.shape_cast %158 : vector<1x1x128x128xbf16> to vector<128x128xbf16>
    %c4_179 = arith.constant 4 : index
    %c2_180 = arith.constant 2 : index
    %c0_181 = arith.constant 0 : index
    %c0_182 = arith.constant 0 : index
    %160 = vector.load %arg1[%c4_179, %c2_180, %c0_181, %c0_182] : memref<6x3x128x128xbf16, #tpu.memory_space<vmem>>, vector<1x1x128x128xbf16>
    %161 = vector.shape_cast %160 : vector<1x1x128x128xbf16> to vector<128x128xbf16>
    %cst_183 = arith.constant dense<0.000000e+00> : vector<2x2x128xf32>
    %162 = tpu.matmul %149, %157, %cst_183 {dimension_numbers = #tpu.dot_dimension_numbers<[2], [0], [0, 1], [1], [0, 0, 0, 1, 1, 1], [], []>} : vector<2x2x128xbf16>, vector<128x128xbf16>, vector<2x2x128xf32> -> vector<2x2x128xf32>
    %cst_184 = arith.constant dense<0.000000e+00> : vector<2x2x128xf32>
    %163 = tpu.matmul %151, %159, %cst_184 {dimension_numbers = #tpu.dot_dimension_numbers<[2], [0], [0, 1], [1], [0, 0, 0, 1, 1, 1], [], []>} : vector<2x2x128xbf16>, vector<128x128xbf16>, vector<2x2x128xf32> -> vector<2x2x128xf32>
    %164 = arith.addf %162, %163 : vector<2x2x128xf32>
    %cst_185 = arith.constant dense<0.000000e+00> : vector<2x2x128xf32>
    %165 = tpu.matmul %153, %161, %cst_185 {dimension_numbers = #tpu.dot_dimension_numbers<[2], [0], [0, 1], [1], [0, 0, 0, 1, 1, 1], [], []>} : vector<2x2x128xbf16>, vector<128x128xbf16>, vector<2x2x128xf32> -> vector<2x2x128xf32>
    %166 = arith.addf %164, %165 : vector<2x2x128xf32>
    %cst_186 = arith.constant dense<0.000000e+00> : vector<2x2x128xf32>
    %167 = tpu.matmul %151, %157, %cst_186 {dimension_numbers = #tpu.dot_dimension_numbers<[2], [0], [0, 1], [1], [0, 0, 0, 1, 1, 1], [], []>} : vector<2x2x128xbf16>, vector<128x128xbf16>, vector<2x2x128xf32> -> vector<2x2x128xf32>
    %cst_187 = arith.constant dense<0.000000e+00> : vector<2x2x128xf32>
    %168 = tpu.matmul %153, %159, %cst_187 {dimension_numbers = #tpu.dot_dimension_numbers<[2], [0], [0, 1], [1], [0, 0, 0, 1, 1, 1], [], []>} : vector<2x2x128xbf16>, vector<128x128xbf16>, vector<2x2x128xf32> -> vector<2x2x128xf32>
    %169 = arith.addf %167, %168 : vector<2x2x128xf32>
    %cst_188 = arith.constant dense<0.000000e+00> : vector<2x2x128xf32>
    %170 = tpu.matmul %155, %161, %cst_188 {dimension_numbers = #tpu.dot_dimension_numbers<[2], [0], [0, 1], [1], [0, 0, 0, 1, 1, 1], [], []>} : vector<2x2x128xbf16>, vector<128x128xbf16>, vector<2x2x128xf32> -> vector<2x2x128xf32>
    %171 = arith.addf %169, %170 : vector<2x2x128xf32>
    %172 = arith.maximumf %166, %171 : vector<2x2x128xf32>
    %c4_189 = arith.constant 4 : index
    %c0_190 = arith.constant 0 : index
    %c0_191 = arith.constant 0 : index
    %173 = vector.load %arg2[%c4_189, %c0_190, %c0_191] : memref<6x1x128xf32, #tpu.memory_space<vmem>>, vector<1x1x128xf32>
    %174 = vector.shape_cast %173 : vector<1x1x128xf32> to vector<1x128xf32>
    %175 = vector.shape_cast %174 : vector<1x128xf32> to vector<1x1x128xf32>
    %176 = vector.broadcast %175 : vector<1x1x128xf32> to vector<2x2x128xf32>
    %177 = arith.addf %172, %176 : vector<2x2x128xf32>
    %cst_192 = arith.constant 0.000000e+00 : f32
    %178 = vector.broadcast %cst_192 : f32 to vector<2x2x128xf32>
    %179 = arith.maximumf %177, %178 : vector<2x2x128xf32>
    %c0_193 = arith.constant 0 : index
    %c8_194 = arith.constant 8 : index
    %c0_195 = arith.constant 0 : index
    %180 = vector.load %arg10[%c0_193, %c8_194, %c0_195] : memref<2x80x128xf32, #tpu.memory_space<vmem>>, vector<2x2x128xf32>
    tpu.vector_store %arg10[%c0_193, %c8_194, %c0_195], %179 {strides = array<i32>} : memref<2x80x128xf32, #tpu.memory_space<vmem>>, vector<2x2x128xf32>,
    %c0_196 = arith.constant 0 : index
    %c10_197 = arith.constant 10 : index
    %c0_198 = arith.constant 0 : index
    %181 = vector.load %arg10[%c0_196, %c10_197, %c0_198] : memref<2x80x128xf32, #tpu.memory_space<vmem>>, vector<2x1x128xf32>
    tpu.vector_store %arg10[%c0_196, %c10_197, %c0_198], %5 {strides = array<i32>} : memref<2x80x128xf32, #tpu.memory_space<vmem>>, vector<2x1x128xf32>,
    %c0_199 = arith.constant 0 : index
    %c7_200 = arith.constant 7 : index
    %c0_201 = arith.constant 0 : index
    %182 = tpu.strided_load %arg10[%c0_199, %c7_200, %c0_201] {strides = array<i32: 1, 2, 1>} : memref<2x80x128xf32, #tpu.memory_space<vmem>>, vector<2x1x128xf32>
    %183 = arith.truncf %182 : vector<2x1x128xf32> to vector<2x1x128xbf16>
    %c0_202 = arith.constant 0 : index
    %c8_203 = arith.constant 8 : index
    %c0_204 = arith.constant 0 : index
    %184 = tpu.strided_load %arg10[%c0_202, %c8_203, %c0_204] {strides = array<i32: 1, 2, 1>} : memref<2x80x128xf32, #tpu.memory_space<vmem>>, vector<2x1x128xf32>
    %185 = arith.truncf %184 : vector<2x1x128xf32> to vector<2x1x128xbf16>
    %c0_205 = arith.constant 0 : index
    %c9_206 = arith.constant 9 : index
    %c0_207 = arith.constant 0 : index
    %186 = tpu.strided_load %arg10[%c0_205, %c9_206, %c0_207] {strides = array<i32: 1, 2, 1>} : memref<2x80x128xf32, #tpu.memory_space<vmem>>, vector<2x1x128xf32>
    %187 = arith.truncf %186 : vector<2x1x128xf32> to vector<2x1x128xbf16>
    %c0_208 = arith.constant 0 : index
    %c10_209 = arith.constant 10 : index
    %c0_210 = arith.constant 0 : index
    %188 = tpu.strided_load %arg10[%c0_208, %c10_209, %c0_210] {strides = array<i32: 1, 2, 1>} : memref<2x80x128xf32, #tpu.memory_space<vmem>>, vector<2x1x128xf32>
    %189 = arith.truncf %188 : vector<2x1x128xf32> to vector<2x1x128xbf16>
    %c5 = arith.constant 5 : index
    %c0_211 = arith.constant 0 : index
    %c0_212 = arith.constant 0 : index
    %c0_213 = arith.constant 0 : index
    %190 = vector.load %arg1[%c5, %c0_211, %c0_212, %c0_213] : memref<6x3x128x128xbf16, #tpu.memory_space<vmem>>, vector<1x1x128x128xbf16>
    %191 = vector.shape_cast %190 : vector<1x1x128x128xbf16> to vector<128x128xbf16>
    %c5_214 = arith.constant 5 : index
    %c1_215 = arith.constant 1 : index
    %c0_216 = arith.constant 0 : index
    %c0_217 = arith.constant 0 : index
    %192 = vector.load %arg1[%c5_214, %c1_215, %c0_216, %c0_217] : memref<6x3x128x128xbf16, #tpu.memory_space<vmem>>, vector<1x1x128x128xbf16>
    %193 = vector.shape_cast %192 : vector<1x1x128x128xbf16> to vector<128x128xbf16>
    %c5_218 = arith.constant 5 : index
    %c2_219 = arith.constant 2 : index
    %c0_220 = arith.constant 0 : index
    %c0_221 = arith.constant 0 : index
    %194 = vector.load %arg1[%c5_218, %c2_219, %c0_220, %c0_221] : memref<6x3x128x128xbf16, #tpu.memory_space<vmem>>, vector<1x1x128x128xbf16>
    %195 = vector.shape_cast %194 : vector<1x1x128x128xbf16> to vector<128x128xbf16>
    %cst_222 = arith.constant dense<0.000000e+00> : vector<2x1x128xf32>
    %196 = tpu.matmul %183, %191, %cst_222 {dimension_numbers = #tpu.dot_dimension_numbers<[2], [0], [0, 1], [1], [0, 0, 0, 1, 1, 1], [], []>} : vector<2x1x128xbf16>, vector<128x128xbf16>, vector<2x1x128xf32> -> vector<2x1x128xf32>
    %cst_223 = arith.constant dense<0.000000e+00> : vector<2x1x128xf32>
    %197 = tpu.matmul %185, %193, %cst_223 {dimension_numbers = #tpu.dot_dimension_numbers<[2], [0], [0, 1], [1], [0, 0, 0, 1, 1, 1], [], []>} : vector<2x1x128xbf16>, vector<128x128xbf16>, vector<2x1x128xf32> -> vector<2x1x128xf32>
    %198 = arith.addf %196, %197 : vector<2x1x128xf32>
    %cst_224 = arith.constant dense<0.000000e+00> : vector<2x1x128xf32>
    %199 = tpu.matmul %187, %195, %cst_224 {dimension_numbers = #tpu.dot_dimension_numbers<[2], [0], [0, 1], [1], [0, 0, 0, 1, 1, 1], [], []>} : vector<2x1x128xbf16>, vector<128x128xbf16>, vector<2x1x128xf32> -> vector<2x1x128xf32>
    %200 = arith.addf %198, %199 : vector<2x1x128xf32>
    %cst_225 = arith.constant dense<0.000000e+00> : vector<2x1x128xf32>
    %201 = tpu.matmul %185, %191, %cst_225 {dimension_numbers = #tpu.dot_dimension_numbers<[2], [0], [0, 1], [1], [0, 0, 0, 1, 1, 1], [], []>} : vector<2x1x128xbf16>, vector<128x128xbf16>, vector<2x1x128xf32> -> vector<2x1x128xf32>
    %cst_226 = arith.constant dense<0.000000e+00> : vector<2x1x128xf32>
    %202 = tpu.matmul %187, %193, %cst_226 {dimension_numbers = #tpu.dot_dimension_numbers<[2], [0], [0, 1], [1], [0, 0, 0, 1, 1, 1], [], []>} : vector<2x1x128xbf16>, vector<128x128xbf16>, vector<2x1x128xf32> -> vector<2x1x128xf32>
    %203 = arith.addf %201, %202 : vector<2x1x128xf32>
    %cst_227 = arith.constant dense<0.000000e+00> : vector<2x1x128xf32>
    %204 = tpu.matmul %189, %195, %cst_227 {dimension_numbers = #tpu.dot_dimension_numbers<[2], [0], [0, 1], [1], [0, 0, 0, 1, 1, 1], [], []>} : vector<2x1x128xbf16>, vector<128x128xbf16>, vector<2x1x128xf32> -> vector<2x1x128xf32>
    %205 = arith.addf %203, %204 : vector<2x1x128xf32>
    %206 = arith.maximumf %200, %205 : vector<2x1x128xf32>
    %c5_228 = arith.constant 5 : index
    %c0_229 = arith.constant 0 : index
    %c0_230 = arith.constant 0 : index
    %207 = vector.load %arg2[%c5_228, %c0_229, %c0_230] : memref<6x1x128xf32, #tpu.memory_space<vmem>>, vector<1x1x128xf32>
    %208 = vector.shape_cast %207 : vector<1x1x128xf32> to vector<1x128xf32>
    %209 = vector.shape_cast %208 : vector<1x128xf32> to vector<1x1x128xf32>
    %210 = vector.broadcast %209 : vector<1x1x128xf32> to vector<2x1x128xf32>
    %211 = arith.addf %206, %210 : vector<2x1x128xf32>
    %cst_231 = arith.constant 0.000000e+00 : f32
    %212 = vector.broadcast %cst_231 : f32 to vector<2x1x128xf32>
    %213 = arith.maximumf %211, %212 : vector<2x1x128xf32>
    %c0_i32_232 = arith.constant 0 : i32
    %214 = tpu.memref_slice %arg13[%c0_i32_232] : memref<2x!tpu.dma_semaphore, #tpu.memory_space<semaphore_mem>> -> memref<1x!tpu.dma_semaphore, #tpu.memory_space<semaphore_mem>>
    %215 = tpu.memref_squeeze %214 : memref<1x!tpu.dma_semaphore, #tpu.memory_space<semaphore_mem>> -> memref<!tpu.dma_semaphore, #tpu.memory_space<semaphore_mem>>
    tpu.wait_dma2 semaphore(%215 : memref<!tpu.dma_semaphore, #tpu.memory_space<semaphore_mem>>) src(%arg3 : memref<1x128x1024xbf16, #tpu.memory_space<any>>) dst(%arg11 : memref<1x128x1024xbf16, #tpu.memory_space<vmem>>)
    %216 = arith.truncf %213 : vector<2x1x128xf32> to vector<2x1x128xbf16>
    %c0_233 = arith.constant 0 : index
    %c0_234 = arith.constant 0 : index
    %c0_235 = arith.constant 0 : index
    %217 = vector.load %arg11[%c0_233, %c0_234, %c0_235] : memref<1x128x1024xbf16, #tpu.memory_space<vmem>>, vector<1x128x1024xbf16>
    %218 = vector.shape_cast %217 : vector<1x128x1024xbf16> to vector<128x1024xbf16>
    %cst_236 = arith.constant dense<0.000000e+00> : vector<2x1x1024xf32>
    %219 = tpu.matmul %216, %218, %cst_236 {dimension_numbers = #tpu.dot_dimension_numbers<[2], [0], [0, 1], [1], [0, 0, 0, 1, 1, 1], [], []>} : vector<2x1x128xbf16>, vector<128x1024xbf16>, vector<2x1x1024xf32> -> vector<2x1x1024xf32>
    %c0_237 = arith.constant 0 : index
    %c0_238 = arith.constant 0 : index
    %220 = vector.load %arg4[%c0_237, %c0_238] : memref<1x1024xf32, #tpu.memory_space<vmem>>, vector<1x1024xf32>
    %221 = vector.shape_cast %220 : vector<1x1024xf32> to vector<1x1x1024xf32>
    %222 = vector.broadcast %221 : vector<1x1x1024xf32> to vector<2x1x1024xf32>
    %223 = arith.addf %219, %222 : vector<2x1x1024xf32>
    %cst_239 = arith.constant 0.000000e+00 : f32
    %224 = vector.broadcast %cst_239 : f32 to vector<2x1x1024xf32>
    %225 = arith.maximumf %223, %224 : vector<2x1x1024xf32>
    %c1_i32_240 = arith.constant 1 : i32
    %226 = tpu.memref_slice %arg13[%c1_i32_240] : memref<2x!tpu.dma_semaphore, #tpu.memory_space<semaphore_mem>> -> memref<1x!tpu.dma_semaphore, #tpu.memory_space<semaphore_mem>>
    %227 = tpu.memref_squeeze %226 : memref<1x!tpu.dma_semaphore, #tpu.memory_space<semaphore_mem>> -> memref<!tpu.dma_semaphore, #tpu.memory_space<semaphore_mem>>
    tpu.wait_dma2 semaphore(%227 : memref<!tpu.dma_semaphore, #tpu.memory_space<semaphore_mem>>) src(%arg5 : memref<1024x512xbf16, #tpu.memory_space<any>>) dst(%arg12 : memref<1024x512xbf16, #tpu.memory_space<vmem>>)
    %228 = arith.truncf %225 : vector<2x1x1024xf32> to vector<2x1x1024xbf16>
    %c0_241 = arith.constant 0 : index
    %c0_242 = arith.constant 0 : index
    %229 = vector.load %arg12[%c0_241, %c0_242] : memref<1024x512xbf16, #tpu.memory_space<vmem>>, vector<1024x512xbf16>
    %cst_243 = arith.constant dense<0.000000e+00> : vector<2x1x512xf32>
    %230 = tpu.matmul %228, %229, %cst_243 {dimension_numbers = #tpu.dot_dimension_numbers<[2], [0], [0, 1], [1], [0, 0, 0, 1, 1, 1], [], []>} : vector<2x1x1024xbf16>, vector<1024x512xbf16>, vector<2x1x512xf32> -> vector<2x1x512xf32>
    %c0_244 = arith.constant 0 : index
    %c0_245 = arith.constant 0 : index
    %231 = vector.load %arg6[%c0_244, %c0_245] : memref<1x512xf32, #tpu.memory_space<vmem>>, vector<1x512xf32>
    %232 = vector.shape_cast %231 : vector<1x512xf32> to vector<1x1x512xf32>
    %233 = vector.broadcast %232 : vector<1x1x512xf32> to vector<2x1x512xf32>
    %234 = arith.addf %230, %233 : vector<2x1x512xf32>
    %cst_246 = arith.constant 0.000000e+00 : f32
    %235 = vector.broadcast %cst_246 : f32 to vector<2x1x512xf32>
    %236 = arith.maximumf %234, %235 : vector<2x1x512xf32>
    %237 = arith.truncf %236 : vector<2x1x512xf32> to vector<2x1x512xbf16>
    %c0_247 = arith.constant 0 : index
    %c0_248 = arith.constant 0 : index
    %238 = vector.load %arg7[%c0_247, %c0_248] : memref<512x128xbf16, #tpu.memory_space<vmem>>, vector<512x128xbf16>
    %cst_249 = arith.constant dense<0.000000e+00> : vector<2x1x128xf32>
    %239 = tpu.matmul %237, %238, %cst_249 {dimension_numbers = #tpu.dot_dimension_numbers<[2], [0], [0, 1], [1], [0, 0, 0, 1, 1, 1], [], []>} : vector<2x1x512xbf16>, vector<512x128xbf16>, vector<2x1x128xf32> -> vector<2x1x128xf32>
    %c0_250 = arith.constant 0 : index
    %c0_251 = arith.constant 0 : index
    %240 = vector.load %arg8[%c0_250, %c0_251] : memref<1x128xf32, #tpu.memory_space<vmem>>, vector<1x128xf32>
    %241 = vector.shape_cast %240 : vector<1x128xf32> to vector<1x1x128xf32>
    %242 = vector.broadcast %241 : vector<1x1x128xf32> to vector<2x1x128xf32>
    %243 = arith.addf %239, %242 : vector<2x1x128xf32>
    %c0_252 = arith.constant 0 : index
    %c0_253 = arith.constant 0 : index
    %c0_254 = arith.constant 0 : index
    %244 = vector.load %arg9[%c0_252, %c0_253, %c0_254] : memref<2x1x128xf32, #tpu.memory_space<vmem>>, vector<2x1x128xf32>
    tpu.vector_store %arg9[%c0_252, %c0_253, %c0_254], %243 {strides = array<i32>} : memref<2x1x128xf32, #tpu.memory_space<vmem>>, vector<2x1x128xf32>,
    return
  }
}

</mosaic_0001>

<llo_original>
// kernel: audionet_forward.1
$region0: #{audionet_forward.1}
  #allocation0 [shape = 'u32[]', space=smem, size = 0x4, offset = 0x4, fixed_abs, tag = 'smem constant byte address 0x4 - core index']
  #allocation1 [shape = 'u32[144,128]{1,0:T(1,128)}', space=vmem, size = 0x12000, scoped, tag = 'internal scratch']
  #allocation2 [shape = 'f32[2,80,128]{2,1,0:T(8,128)}', space=vmem, size = 0x14000, scoped, tag = 'scratch operand']
  #allocation3 [shape = 'bf16[1,128,1024]{2,1,0:T(16,128)(2,1)}', space=vmem, size = 0x40000, scoped, tag = 'scratch operand']
  #allocation4 [shape = 'bf16[1024,512]{1,0:T(16,128)(2,1)}', space=vmem, size = 0x100000, scoped, tag = 'scratch operand']
  #allocation5 [shape = 's32[2]{0}', space=sflag, size = 0x8, scoped, tag = 'scratch operand']
  #allocation12 [shape = 's32[]', space=sflag, size = 0x4, offset = 0, fixed_abs, tag = 'sflag constant byte address 0x0 - dummy sync flag']
  #allocation14 [shape = 's32[]', space=sflag, size = 0x4, offset = 0, fixed_abs, tag = 'sflag constant byte address 0x0 - dummy sync flag']
  %s0 = inlined_call_operand.vmem [shape: f32[2,64,1], index: 0, kind: input, shape index: {}]
  %s1 = inlined_call_operand.hbm [shape: bf16[6,3,128,128], index: 1, kind: input, shape index: {}]
  %s2 = inlined_call_operand.vmem [shape: f32[6,1,128], index: 2, kind: input, shape index: {}]
  %s3 = inlined_call_operand.hbm [shape: bf16[1,128,1024], index: 3, kind: input, shape index: {}]
  %s4 = inlined_call_operand.vmem [shape: f32[1,1024], index: 4, kind: input, shape index: {}]
  %s5 = inlined_call_operand.hbm [shape: bf16[1024,512], index: 5, kind: input, shape index: {}]
  %s6 = inlined_call_operand.vmem [shape: f32[1,512], index: 6, kind: input, shape index: {}]
  %s7 = inlined_call_operand.hbm [shape: bf16[512,128], index: 7, kind: input, shape index: {}]
  %s8 = inlined_call_operand.vmem [shape: f32[1,128], index: 8, kind: input, shape index: {}]
  %s9 = inlined_call_operand.hbm [shape: f32[2,1,128], index: 9, kind: output, shape index: {}]
  %s10 = sld [smem:[#allocation0]]
  $region46: #{audionet_forward.1} parent=0
    _
  %s12 = ssub.s32 1, %s10
  %s13 = scalar_select 0, %s12, %s10
  $region1: #{audionet_forward.1} parent=0
    #allocation6 [shape = 'u8[589824]{0}', space=vmem, size = 0x90000, scoped, tag = 'input window, operand 1, single buffered']
    #allocation7 [shape = 's32[1]{0}', space=sflag, size = 0x4, scoped, tag = 'scoped memory for audionet_forward.1']
    #allocation8 [shape = 's32[1]{0}', space=sflag, size = 0x4, scoped, tag = 'scoped memory for audionet_forward.1']
    #allocation9 [shape = 'u8[131072]{0}', space=vmem, size = 0x20000, scoped, tag = 'input window, operand 7, single buffered']
    #allocation10 [shape = 's32[1]{0}', space=sflag, size = 0x4, scoped, tag = 'scoped memory for audionet_forward.1']
    #allocation11 [shape = 'u8[1024]{0}', space=vmem, size = 0x400, scoped, tag = 'output window, operand 0, single buffered']
    #allocation13 [shape = 'u32[9]{0}', space=smem, size = 0x24, scoped, tag = 'DMA stride descriptor']
    #allocation15 [shape = 'u32[9]{0}', space=smem, size = 0x24, scoped, tag = 'DMA stride descriptor']
    %14 = vsyncpa [#allocation7], 0
    %15 = vsyncpa [#allocation10], 0
    %16 = vsyncpa [#allocation8], 0
    // Predicated region
    $region2: #{audionet_forward.1} parent=1 // pred_check
      _
    $region3: #{audionet_forward.1} parent=1 // pred_check_branch
      %18 = sbr.rel (0) target = $region5
    $region4: #{audionet_forward.1} parent=1 // pred_region
      _
    $region5: #{audionet_forward.1} parent=1 // pred_fallthru
      _
    // Predicated region
    $region6: #{audionet_forward.1} parent=1 // pred_check
      _
    $region7: #{audionet_forward.1} parent=1 // pred_check_branch
      %20 = sbr.rel (0) target = $region9
    $region8: #{audionet_forward.1} parent=1 // pred_region
      %s22 = ssub.s32 18432, 18432
      %23 = vsyncadd [#allocation7], %s22
      %s24 = sshll.u32 [#allocation6], 4
      %s25 = int_to_ptr.vmem [resolvable:$true] %s24
      %30 = dma.hbm_to_vmem [thread:$0]  %s1, 18432, %s25, [#allocation7], 64, 64, 4
    $region9: #{audionet_forward.1} parent=1 // pred_fallthru
      _
    // Predicated region
    $region10: #{audionet_forward.1} parent=1 // pred_check
      _
    $region11: #{audionet_forward.1} parent=1 // pred_check_branch
      %32 = sbr.rel (0) target = $region13
    $region12: #{audionet_forward.1} parent=1 // pred_region
      _
    $region13: #{audionet_forward.1} parent=1 // pred_fallthru
      _
    // Predicated region
    $region14: #{audionet_forward.1} parent=1 // pred_check
      _
    $region15: #{audionet_forward.1} parent=1 // pred_check_branch
      %34 = sbr.rel (0) target = $region17
    $region16: #{audionet_forward.1} parent=1 // pred_region
      _
    $region17: #{audionet_forward.1} parent=1 // pred_fallthru
      _
    // Predicated region
    $region18: #{audionet_forward.1} parent=1 // pred_check
      _
    $region19: #{audionet_forward.1} parent=1 // pred_check_branch
      %36 = sbr.rel (0) target = $region21
    $region20: #{audionet_forward.1} parent=1 // pred_region
      _
    $region21: #{audionet_forward.1} parent=1 // pred_fallthru
      _
    // Predicated region
    $region22: #{audionet_forward.1} parent=1 // pred_check
      _
    $region23: #{audionet_forward.1} parent=1 // pred_check_branch
      %38 = sbr.rel (0) target = $region25
    $region24: #{audionet_forward.1} parent=1 // pred_region
      %s40 = ssub.s32 4096, 4096
      %41 = vsyncadd [#allocation10], %s40
      %s42 = sshll.u32 [#allocation9], 4
      %s43 = int_to_ptr.vmem [resolvable:$true] %s42
      %48 = dma.hbm_to_vmem [thread:$0]  %s7, 4096, %s43, [#allocation10], 64, 64, 4
    $region25: #{audionet_forward.1} parent=1 // pred_fallthru
      _
    // Predicated region
    $region26: #{audionet_forward.1} parent=1 // pred_check
      _
    $region27: #{audionet_forward.1} parent=1 // pred_check_branch
      %50 = sbr.rel (0) target = $region29
    $region28: #{audionet_forward.1} parent=1 // pred_region
      _
    $region29: #{audionet_forward.1} parent=1 // pred_fallthru
      _
    // Predicated region
    $region30: #{audionet_forward.1} parent=1 // pred_check
      _
    $region31: #{audionet_forward.1} parent=1 // pred_check_branch
      %52 = sbr.rel (0) target = $region33
    $region32: #{audionet_forward.1} parent=1 // pred_region
      %53 = dma.done [#allocation7], 18432
    $region33: #{audionet_forward.1} parent=1 // pred_fallthru
      _
    // Predicated region
    $region34: #{audionet_forward.1} parent=1 // pred_check
      _
    $region35: #{audionet_forward.1} parent=1 // pred_check_branch
      %55 = sbr.rel (0) target = $region37
    $region36: #{audionet_forward.1} parent=1 // pred_region
      %56 = dma.done [#allocation10], 4096
    $region37: #{audionet_forward.1} parent=1 // pred_fallthru
      _
    %s59 = sshll.u32 1, 14
    %s60 = sxor.u32 4294967295, %s59
    %s62 = sld [smem:[#allocation0]]
    %s63 = sadd.s32 2, %s62
    %s65 = sshll.u32 7, 26
    %s66 = sxor.u32 4294967295, %s65
    %s67 = sand.u32 0, %s66
    %s68 = sshll.u32 %s63, 26
    %s69 = sor.u32 %s67, %s68
    %s70 = sshll.u32 [#allocation3], 4
    %s71 = int_to_ptr.vmem [resolvable:$true] %s70
    %74 = sst [smem:[#allocation13]] 1024
    %s75 = scalar_lea.smem [#allocation13], 1
    %76 = sst [smem:[%s75]] 1024
    %s77 = scalar_lea.smem [#allocation13], 2
    %78 = sst [smem:[%s77]] 8
    %s79 = scalar_lea.smem [#allocation13], 3
    %80 = sst [smem:[%s79]] 64
    %s81 = scalar_lea.smem [#allocation13], 4
    %82 = sst [smem:[%s81]] 128
    %s83 = scalar_lea.smem [#allocation13], 5
    %84 = sst [smem:[%s83]] 2
    %s85 = scalar_lea.smem [#allocation13], 6
    %86 = sst [smem:[%s85]] 512
    %s87 = scalar_lea.smem [#allocation13], 7
    %88 = sst [smem:[%s87]] 64
    %s89 = scalar_lea.smem [#allocation13], 8
    %90 = sst [smem:[%s89]] 4
    %92 = dma.general %s3, 8192, %s71, [#allocation5], [#allocation12], [#allocation13], %s69, 0
    %s93 = scalar_lea.sflag [#allocation5], 1
    %s95 = sshll.u32 1, 14
    %s96 = sxor.u32 4294967295, %s95
    %s98 = sadd.s32 2, %s62
    %s100 = sshll.u32 7, 26
    %s101 = sxor.u32 4294967295, %s100
    %s102 = sand.u32 0, %s101
    %s103 = sshll.u32 %s98, 26
    %s104 = sor.u32 %s102, %s103
    %s105 = sshll.u32 [#allocation4], 4
    %s106 = int_to_ptr.vmem [resolvable:$true] %s105
    %109 = sst [smem:[#allocation15]] 512
    %s110 = scalar_lea.smem [#allocation15], 1
    %111 = sst [smem:[%s110]] 512
    %s112 = scalar_lea.smem [#allocation15], 2
    %113 = sst [smem:[%s112]] 4
    %s114 = scalar_lea.smem [#allocation15], 3
    %115 = sst [smem:[%s114]] 64
    %s116 = scalar_lea.smem [#allocation15], 4
    %117 = sst [smem:[%s116]] 128
    %s118 = scalar_lea.smem [#allocation15], 5
    %119 = sst [smem:[%s118]] 2
    %s120 = scalar_lea.smem [#allocation15], 6
    %121 = sst [smem:[%s120]] 256
    %s122 = scalar_lea.smem [#allocation15], 7
    %123 = sst [smem:[%s122]] 64
    %s124 = scalar_lea.smem [#allocation15], 8
    %125 = sst [smem:[%s124]] 4
    %127 = dma.general %s5, 32768, %s106, %s93, [#allocation14], [#allocation15], %s104, 0
    %128 = vst [vmem:[#allocation2] sm:$0xff] 0.0
    %129 = vst [vmem:[#allocation2 + $0x50] sm:$0xff] 0.0
    %v130 = vld [vmem:[%s0] sm:$0xff]
    %v131 = vld [vmem:[%s0 + $0x8] sm:$0xff]
    %v132 = vld [vmem:[%s0 + $0x10] sm:$0xff]
    %v133 = vld [vmem:[%s0 + $0x18] sm:$0xff]
    %v134 = vld [vmem:[%s0 + $0x20] sm:$0xff]
    %v135 = vld [vmem:[%s0 + $0x28] sm:$0xff]
    %v136 = vld [vmem:[%s0 + $0x30] sm:$0xff]
    %v137 = vld [vmem:[%s0 + $0x38] sm:$0xff]
    %v138 = vld [vmem:[%s0 + $0x40] sm:$0xff]
    %v139 = vld [vmem:[%s0 + $0x48] sm:$0xff]
    %v140 = vld [vmem:[%s0 + $0x50] sm:$0xff]
    %v141 = vld [vmem:[%s0 + $0x58] sm:$0xff]
    %v142 = vld [vmem:[%s0 + $0x60] sm:$0xff]
    %v143 = vld [vmem:[%s0 + $0x68] sm:$0xff]
    %v144 = vld [vmem:[%s0 + $0x70] sm:$0xff]
    %v145 = vld [vmem:[%s0 + $0x78] sm:$0xff]
    %147 = vset.pattern.permute.xlu0 0
    %148 = vperm.xlu0 %147, %v130
    %v149 = vpop.permute.xlu0 %148
    %152 = vset.pattern.permute.xlu0 0
    %153 = vperm.xlu0 %152, %v131
    %v154 = vpop.permute.xlu0 %153
    %157 = vset.pattern.permute.xlu0 0
    %158 = vperm.xlu0 %157, %v132
    %v159 = vpop.permute.xlu0 %158
    %162 = vset.pattern.permute.xlu0 0
    %163 = vperm.xlu0 %162, %v133
    %v164 = vpop.permute.xlu0 %163
    %167 = vset.pattern.permute.xlu0 0
    %168 = vperm.xlu0 %167, %v134
    %v169 = vpop.permute.xlu0 %168
    %172 = vset.pattern.permute.xlu0 0
    %173 = vperm.xlu0 %172, %v135
    %v174 = vpop.permute.xlu0 %173
    %177 = vset.pattern.permute.xlu0 0
    %178 = vperm.xlu0 %177, %v136
    %v179 = vpop.permute.xlu0 %178
    %182 = vset.pattern.permute.xlu0 0
    %183 = vperm.xlu0 %182, %v137
    %v184 = vpop.permute.xlu0 %183
    %187 = vset.pattern.permute.xlu0 0
    %188 = vperm.xlu0 %187, %v138
    %v189 = vpop.permute.xlu0 %188
    %192 = vset.pattern.permute.xlu0 0
    %193 = vperm.xlu0 %192, %v139
    %v194 = vpop.permute.xlu0 %193
    %197 = vset.pattern.permute.xlu0 0
    %198 = vperm.xlu0 %197, %v140
    %v199 = vpop.permute.xlu0 %198
    %202 = vset.pattern.permute.xlu0 0
    %203 = vperm.xlu0 %202, %v141
    %v204 = vpop.permute.xlu0 %203
    %207 = vset.pattern.permute.xlu0 0
    %208 = vperm.xlu0 %207, %v142
    %v209 = vpop.permute.xlu0 %208
    %212 = vset.pattern.permute.xlu0 0
    %213 = vperm.xlu0 %212, %v143
    %v214 = vpop.permute.xlu0 %213
    %217 = vset.pattern.permute.xlu0 0
    %218 = vperm.xlu0 %217, %v144
    %v219 = vpop.permute.xlu0 %218
    %222 = vset.pattern.permute.xlu0 0
    %223 = vperm.xlu0 %222, %v145
    %v224 = vpop.permute.xlu0 %223
    %226 = vst [vmem:[#allocation2 + $0x8] sm:$0xff] %v149
    %227 = vst [vmem:[#allocation2 + $0x10] sm:$0xff] %v154
    %228 = vst [vmem:[#allocation2 + $0x18] sm:$0xff] %v159
    %229 = vst [vmem:[#allocation2 + $0x20] sm:$0xff] %v164
    %230 = vst [vmem:[#allocation2 + $0x28] sm:$0xff] %v169
    %231 = vst [vmem:[#allocation2 + $0x30] sm:$0xff] %v174
    %232 = vst [vmem:[#allocation2 + $0x38] sm:$0xff] %v179
    %233 = vst [vmem:[#allocation2 + $0x40] sm:$0xff] %v184
    %234 = vst [vmem:[#allocation2 + $0x58] sm:$0xff] %v189
    %235 = vst [vmem:[#allocation2 + $0x60] sm:$0xff] %v194
    %236 = vst [vmem:[#allocation2 + $0x68] sm:$0xff] %v199
    %237 = vst [vmem:[#allocation2 + $0x70] sm:$0xff] %v204
    %238 = vst [vmem:[#allocation2 + $0x78] sm:$0xff] %v209
    %239 = vst [vmem:[#allocation2 + $0x80] sm:$0xff] %v214
    %240 = vst [vmem:[#allocation2 + $0x88] sm:$0xff] %v219
    %241 = vst [vmem:[#allocation2 + $0x90] sm:$0xff] %v224
    %242 = vst [vmem:[#allocation2 + $0x48] sm:$0x1] 0.0
    %243 = vst [vmem:[#allocation2 + $0x98] sm:$0x1] 0.0
    %s244 = scalar_lea.vmem [#allocation2], 7
    %v245 = vld [vmem:[%s244] ss:$2 sm:$0xff]
    %s246 = scalar_lea.vmem [#allocation2], 23
    %v247 = vld [vmem:[%s246] ss:$2 sm:$0xff]
    %s248 = scalar_lea.vmem [#allocation2], 39
    %v249 = vld [vmem:[%s248] ss:$2 sm:$0xff]
    %s250 = scalar_lea.vmem [#allocation2], 55
    %v251 = vld [vmem:[%s250] ss:$2 sm:$0xff]
    %s252 = scalar_lea.vmem [#allocation2], 87
    %v253 = vld [vmem:[%s252] ss:$2 sm:$0xff]
    %s254 = scalar_lea.vmem [#allocation2], 103
    %v255 = vld [vmem:[%s254] ss:$2 sm:$0xff]
    %s256 = scalar_lea.vmem [#allocation2], 119
    %v257 = vld [vmem:[%s256] ss:$2 sm:$0xff]
    %s258 = scalar_lea.vmem [#allocation2], 135
    %v259 = vld [vmem:[%s258] ss:$2 sm:$0xff]
    %v260 = vpack.c.bf16 %v247, %v245
    %v261 = vpack.c.bf16 %v251, %v249
    %v262 = vpack.c.bf16 %v255, %v253
    %v263 = vpack.c.bf16 %v259, %v257
    %s264 = scalar_lea.vmem [#allocation2], 8
    %v265 = vld [vmem:[%s264] ss:$2 sm:$0xff]
    %s266 = scalar_lea.vmem [#allocation2], 24
    %v267 = vld [vmem:[%s266] ss:$2 sm:$0xff]
    %s268 = scalar_lea.vmem [#allocation2], 40
    %v269 = vld [vmem:[%s268] ss:$2 sm:$0xff]
    %s270 = scalar_lea.vmem [#allocation2], 56
    %v271 = vld [vmem:[%s270] ss:$2 sm:$0xff]
    %s272 = scalar_lea.vmem [#allocation2], 88
    %v273 = vld [vmem:[%s272] ss:$2 sm:$0xff]
    %s274 = scalar_lea.vmem [#allocation2], 104
    %v275 = vld [vmem:[%s274] ss:$2 sm:$0xff]
    %s276 = scalar_lea.vmem [#allocation2], 120
    %v277 = vld [vmem:[%s276] ss:$2 sm:$0xff]
    %s278 = scalar_lea.vmem [#allocation2], 136
    %v279 = vld [vmem:[%s278] ss:$2 sm:$0xff]
    %v280 = vpack.c.bf16 %v267, %v265
    %v281 = vpack.c.bf16 %v271, %v269
    %v282 = vpack.c.bf16 %v275, %v273
    %v283 = vpack.c.bf16 %v279, %v277
    %s284 = scalar_lea.vmem [#allocation2], 9
    %v285 = vld [vmem:[%s284] ss:$2 sm:$0xff]
    %s286 = scalar_lea.vmem [#allocation2], 25
    %v287 = vld [vmem:[%s286] ss:$2 sm:$0xff]
    %s288 = scalar_lea.vmem [#allocation2], 41
    %v289 = vld [vmem:[%s288] ss:$2 sm:$0xff]
    %s290 = scalar_lea.vmem [#allocation2], 57
    %v291 = vld [vmem:[%s290] ss:$2 sm:$0xff]
    %s292 = scalar_lea.vmem [#allocation2], 89
    %v293 = vld [vmem:[%s292] ss:$2 sm:$0xff]
    %s294 = scalar_lea.vmem [#allocation2], 105
    %v295 = vld [vmem:[%s294] ss:$2 sm:$0xff]
    %s296 = scalar_lea.vmem [#allocation2], 121
    %v297 = vld [vmem:[%s296] ss:$2 sm:$0xff]
    %s298 = scalar_lea.vmem [#allocation2], 137
    %v299 = vld [vmem:[%s298] ss:$2 sm:$0xff]
    %v300 = vpack.c.bf16 %v287, %v285
    %v301 = vpack.c.bf16 %v291, %v289
    %v302 = vpack.c.bf16 %v295, %v293
    %v303 = vpack.c.bf16 %v299, %v297
    %s304 = scalar_lea.vmem [#allocation2], 10
    %v305 = vld [vmem:[%s304] ss:$2 sm:$0xff]
    %s306 = scalar_lea.vmem [#allocation2], 26
    %v307 = vld [vmem:[%s306] ss:$2 sm:$0xff]
    %s308 = scalar_lea.vmem [#allocation2], 42
    %v309 = vld [vmem:[%s308] ss:$2 sm:$0xff]
    %s310 = scalar_lea.vmem [#allocation2], 58
    %v311 = vld [vmem:[%s310] ss:$2 sm:$0xff]
    %s312 = scalar_lea.vmem [#allocation2], 90
    %v313 = vld [vmem:[%s312] ss:$2 sm:$0xff]
    %s314 = scalar_lea.vmem [#allocation2], 106
    %v315 = vld [vmem:[%s314] ss:$2 sm:$0xff]
    %s316 = scalar_lea.vmem [#allocation2], 122
    %v317 = vld [vmem:[%s316] ss:$2 sm:$0xff]
    %s318 = scalar_lea.vmem [#allocation2], 138
    %v319 = vld [vmem:[%s318] ss:$2 sm:$0xff]
    %v320 = vpack.c.bf16 %v307, %v305
    %v321 = vpack.c.bf16 %v311, %v309
    %v322 = vpack.c.bf16 %v315, %v313
    %v323 = vpack.c.bf16 %v319, %v317
    %v324 = vld [vmem:[#allocation6] sm:$0xf]
    %v325 = vld [vmem:[#allocation6 + $0x4] sm:$0xf]
    %v326 = vld [vmem:[#allocation6 + $0x8] sm:$0xf]
    %v327 = vld [vmem:[#allocation6 + $0xc] sm:$0xf]
    %v328 = vld [vmem:[#allocation6 + $0x10] sm:$0xf]
    %v329 = vld [vmem:[#allocation6 + $0x14] sm:$0xf]
    %v330 = vld [vmem:[#allocation6 + $0x18] sm:$0xf]
    %v331 = vld [vmem:[#allocation6 + $0x1c] sm:$0xf]
    %v332 = vld [vmem:[#allocation6 + $0x20] sm:$0xf]
    %v333 = vld [vmem:[#allocation6 + $0x24] sm:$0xf]
    %v334 = vld [vmem:[#allocation6 + $0x28] sm:$0xf]
    %v335 = vld [vmem:[#allocation6 + $0x2c] sm:$0xf]
    %v336 = vld [vmem:[#allocation6 + $0x30] sm:$0xf]
    %v337 = vld [vmem:[#allocation6 + $0x34] sm:$0xf]
    %v338 = vld [vmem:[#allocation6 + $0x38] sm:$0xf]
    %v339 = vld [vmem:[#allocation6 + $0x3c] sm:$0xf]
    %s340 = scalar_lea.vmem [#allocation6], 64
    %v341 = vld [vmem:[%s340] sm:$0xf]
    %v342 = vld [vmem:[%s340 + $0x4] sm:$0xf]
    %v343 = vld [vmem:[%s340 + $0x8] sm:$0xf]
    %v344 = vld [vmem:[%s340 + $0xc] sm:$0xf]
    %v345 = vld [vmem:[%s340 + $0x10] sm:$0xf]
    %v346 = vld [vmem:[%s340 + $0x14] sm:$0xf]
    %v347 = vld [vmem:[%s340 + $0x18] sm:$0xf]
    %v348 = vld [vmem:[%s340 + $0x1c] sm:$0xf]
    %v349 = vld [vmem:[%s340 + $0x20] sm:$0xf]
    %v350 = vld [vmem:[%s340 + $0x24] sm:$0xf]
    %v351 = vld [vmem:[%s340 + $0x28] sm:$0xf]
    %v352 = vld [vmem:[%s340 + $0x2c] sm:$0xf]
    %v353 = vld [vmem:[%s340 + $0x30] sm:$0xf]
    %v354 = vld [vmem:[%s340 + $0x34] sm:$0xf]
    %v355 = vld [vmem:[%s340 + $0x38] sm:$0xf]
    %v356 = vld [vmem:[%s340 + $0x3c] sm:$0xf]
    %s357 = scalar_lea.vmem [#allocation6], 128
    %v358 = vld [vmem:[%s357] sm:$0xf]
    %v359 = vld [vmem:[%s357 + $0x4] sm:$0xf]
    %v360 = vld [vmem:[%s357 + $0x8] sm:$0xf]
    %v361 = vld [vmem:[%s357 + $0xc] sm:$0xf]
    %v362 = vld [vmem:[%s357 + $0x10] sm:$0xf]
    %v363 = vld [vmem:[%s357 + $0x14] sm:$0xf]
    %v364 = vld [vmem:[%s357 + $0x18] sm:$0xf]
    %v365 = vld [vmem:[%s357 + $0x1c] sm:$0xf]
    %v366 = vld [vmem:[%s357 + $0x20] sm:$0xf]
    %v367 = vld [vmem:[%s357 + $0x24] sm:$0xf]
    %v368 = vld [vmem:[%s357 + $0x28] sm:$0xf]
    %v369 = vld [vmem:[%s357 + $0x2c] sm:$0xf]
    %v370 = vld [vmem:[%s357 + $0x30] sm:$0xf]
    %v371 = vld [vmem:[%s357 + $0x34] sm:$0xf]
    %v372 = vld [vmem:[%s357 + $0x38] sm:$0xf]
    %v373 = vld [vmem:[%s357 + $0x3c] sm:$0xf]
    %v390 = vunpack.c.l.b16 %v341
    %v391 = vunpack.c.l.b16 %v342
    %v392 = vunpack.c.l.b16 %v343
    %v393 = vunpack.c.l.b16 %v344
    %v394 = vunpack.c.l.b16 %v345
    %v395 = vunpack.c.l.b16 %v346
    %v396 = vunpack.c.l.b16 %v347
    %v397 = vunpack.c.l.b16 %v348
    %v398 = vunpack.c.l.b16 %v349
    %v399 = vunpack.c.l.b16 %v350
    %v400 = vunpack.c.l.b16 %v351
    %v401 = vunpack.c.l.b16 %v352
    %v402 = vunpack.c.l.b16 %v353
    %v403 = vunpack.c.l.b16 %v354
    %v404 = vunpack.c.l.b16 %v355
    %v405 = vunpack.c.l.b16 %v356
    %v406 = vpack.c.b16 %v391, %v390
    %v407 = vpack.c.b16 %v393, %v392
    %v408 = vpack.c.b16 %v395, %v394
    %v409 = vpack.c.b16 %v397, %v396
    %v410 = vpack.c.b16 %v399, %v398
    %v411 = vpack.c.b16 %v401, %v400
    %v412 = vpack.c.b16 %v403, %v402
    %v413 = vpack.c.b16 %v405, %v404
    %422 = vmatprep.subr.bf16.mxu0 0
    %423 = vmatpush1.bf16.msra.mxu0 %v406
    %424 = vmatprep.subr.bf16.mxu0 0
    %425 = vmatpush1.bf16.msra.mxu0 %v407
    %426 = vmatprep.subr.bf16.mxu0 0
    %427 = vmatpush1.bf16.msra.mxu0 %v408
    %428 = vmatprep.subr.bf16.mxu0 0
    %429 = vmatpush1.bf16.msra.mxu0 %v409
    %430 = vmatprep.subr.bf16.mxu0 0
    %431 = vmatpush1.bf16.msra.mxu0 %v410
    %432 = vmatprep.subr.bf16.mxu0 0
    %433 = vmatpush1.bf16.msra.mxu0 %v411
    %434 = vmatprep.subr.bf16.mxu0 0
    %435 = vmatpush1.bf16.msra.mxu0 %v412
    %436 = vmatprep.subr.bf16.mxu0 0
    %437 = vmatpush1.bf16.msra.mxu0 %v413
    %438 = vmatprep.subr.bf16.mxu0 0
    %439 = vmatpush1.bf16.msra.mxu0 0
    %440 = vmatprep.subr.bf16.mxu0 0
    %441 = vmatpush1.bf16.msra.mxu0 0
    %442 = vmatprep.subr.bf16.mxu0 0
    %443 = vmatpush1.bf16.msra.mxu0 0
    %444 = vmatprep.subr.bf16.mxu0 0
    %445 = vmatpush1.bf16.msra.mxu0 0
    %446 = vmatprep.subr.bf16.mxu0 0
    %447 = vmatpush1.bf16.msra.mxu0 0
    %448 = vmatprep.subr.bf16.mxu0 0
    %449 = vmatpush1.bf16.msra.mxu0 0
    %450 = vmatprep.subr.bf16.mxu0 0
    %451 = vmatpush1.bf16.msra.mxu0 0
    %452 = vmatprep.subr.bf16.mxu0 0
    %453 = vmatpush1.bf16.msra.mxu0 0
    %454 = vmatprep.mubr.bf16.mxu0 0
    %455 = vmatmul.mubr.bf16.gmra.mrb[0].mxu0 %v280
    %v456 = vpop.f32.mrb[0].mxu0
    %v457 = vadd.f32 0.0, %v456
    %v458 = vpop.f32.mrb[0].mxu0
    %v459 = vpop.f32.mrb[0].mxu0
    %v460 = vadd.f32 0.0, %v459
    %v461 = vpop.f32.mrb[0].mxu0
    %462 = vmatprep.mubr.bf16.mxu0 0
    %463 = vmatmul.mubr.bf16.gmra.mrb[0].mxu0 %v281
    %v464 = vpop.f32.mrb[0].mxu0
    %v465 = vadd.f32 0.0, %v464
    %v466 = vpop.f32.mrb[0].mxu0
    %v467 = vpop.f32.mrb[0].mxu0
    %v468 = vadd.f32 0.0, %v467
    %v469 = vpop.f32.mrb[0].mxu0
    %470 = vmatprep.mubr.bf16.mxu0 0
    %471 = vmatmul.mubr.bf16.gmra.mrb[0].mxu0 %v282
    %v472 = vpop.f32.mrb[0].mxu0
    %v473 = vadd.f32 0.0, %v472
    %v474 = vpop.f32.mrb[0].mxu0
    %v475 = vpop.f32.mrb[0].mxu0
    %v476 = vadd.f32 0.0, %v475
    %v477 = vpop.f32.mrb[0].mxu0
    %478 = vmatprep.mubr.bf16.mxu0 0
    %479 = vmatmul.mubr.bf16.gmra.mrb[0].mxu0 %v283
    %v480 = vpop.f32.mrb[0].mxu0
    %v481 = vadd.f32 0.0, %v480
    %v482 = vpop.f32.mrb[0].mxu0
    %v483 = vpop.f32.mrb[0].mxu0
    %v484 = vadd.f32 0.0, %v483
    %v485 = vpop.f32.mrb[0].mxu0
    %486 = vdwg.mxu0
    %v503 = vunpack.c.l.b16 %v324
    %v504 = vunpack.c.l.b16 %v325
    %v505 = vunpack.c.l.b16 %v326
    %v506 = vunpack.c.l.b16 %v327
    %v507 = vunpack.c.l.b16 %v328
    %v508 = vunpack.c.l.b16 %v329
    %v509 = vunpack.c.l.b16 %v330
    %v510 = vunpack.c.l.b16 %v331
    %v511 = vunpack.c.l.b16 %v332
    %v512 = vunpack.c.l.b16 %v333
    %v513 = vunpack.c.l.b16 %v334
    %v514 = vunpack.c.l.b16 %v335
    %v515 = vunpack.c.l.b16 %v336
    %v516 = vunpack.c.l.b16 %v337
    %v517 = vunpack.c.l.b16 %v338
    %v518 = vunpack.c.l.b16 %v339
    %v519 = vpack.c.b16 %v504, %v503
    %v520 = vpack.c.b16 %v506, %v505
    %v521 = vpack.c.b16 %v508, %v507
    %v522 = vpack.c.b16 %v510, %v509
    %v523 = vpack.c.b16 %v512, %v511
    %v524 = vpack.c.b16 %v514, %v513
    %v525 = vpack.c.b16 %v516, %v515
    %v526 = vpack.c.b16 %v518, %v517
    %535 = vmatprep.subr.bf16.mxu0 0
    %536 = vmatpush1.bf16.msra.mxu0 %v519
    %537 = vmatprep.subr.bf16.mxu0 0
    %538 = vmatpush1.bf16.msra.mxu0 %v520
    %539 = vmatprep.subr.bf16.mxu0 0
    %540 = vmatpush1.bf16.msra.mxu0 %v521
    %541 = vmatprep.subr.bf16.mxu0 0
    %542 = vmatpush1.bf16.msra.mxu0 %v522
    %543 = vmatprep.subr.bf16.mxu0 0
    %544 = vmatpush1.bf16.msra.mxu0 %v523
    %545 = vmatprep.subr.bf16.mxu0 0
    %546 = vmatpush1.bf16.msra.mxu0 %v524
    %547 = vmatprep.subr.bf16.mxu0 0
    %548 = vmatpush1.bf16.msra.mxu0 %v525
    %549 = vmatprep.subr.bf16.mxu0 0
    %550 = vmatpush1.bf16.msra.mxu0 %v526
    %551 = vmatprep.subr.bf16.mxu0 0
    %552 = vmatpush1.bf16.msra.mxu0 0
    %553 = vmatprep.subr.bf16.mxu0 0
    %554 = vmatpush1.bf16.msra.mxu0 0
    %555 = vmatprep.subr.bf16.mxu0 0
    %556 = vmatpush1.bf16.msra.mxu0 0
    %557 = vmatprep.subr.bf16.mxu0 0
    %558 = vmatpush1.bf16.msra.mxu0 0
    %559 = vmatprep.subr.bf16.mxu0 0
    %560 = vmatpush1.bf16.msra.mxu0 0
    %561 = vmatprep.subr.bf16.mxu0 0
    %562 = vmatpush1.bf16.msra.mxu0 0
    %563 = vmatprep.subr.bf16.mxu0 0
    %564 = vmatpush1.bf16.msra.mxu0 0
    %565 = vmatprep.subr.bf16.mxu0 0
    %566 = vmatpush1.bf16.msra.mxu0 0
    %567 = vmatprep.mubr.bf16.mxu0 0
    %568 = vmatmul.mubr.bf16.gmra.mrb[0].mxu0 %v260
    %v569 = vpop.f32.mrb[0].mxu0
    %v570 = vadd.f32 %v457, %v569
    %v571 = vpop.f32.mrb[0].mxu0
    %v572 = vpop.f32.mrb[0].mxu0
    %v573 = vadd.f32 %v460, %v572
    %v574 = vpop.f32.mrb[0].mxu0
    %575 = vmatprep.mubr.bf16.mxu0 0
    %576 = vmatmul.mubr.bf16.gmra.mrb[0].mxu0 %v261
    %v577 = vpop.f32.mrb[0].mxu0
    %v578 = vadd.f32 %v465, %v577
    %v579 = vpop.f32.mrb[0].mxu0
    %v580 = vpop.f32.mrb[0].mxu0
    %v581 = vadd.f32 %v468, %v580
    %v582 = vpop.f32.mrb[0].mxu0
    %583 = vmatprep.mubr.bf16.mxu0 0
    %584 = vmatmul.mubr.bf16.gmra.mrb[0].mxu0 %v262
    %v585 = vpop.f32.mrb[0].mxu0
    %v586 = vadd.f32 %v473, %v585
    %v587 = vpop.f32.mrb[0].mxu0
    %v588 = vpop.f32.mrb[0].mxu0
    %v589 = vadd.f32 %v476, %v588
    %v590 = vpop.f32.mrb[0].mxu0
    %591 = vmatprep.mubr.bf16.mxu0 0
    %592 = vmatmul.mubr.bf16.gmra.mrb[0].mxu0 %v263
    %v593 = vpop.f32.mrb[0].mxu0
    %v594 = vadd.f32 %v481, %v593
    %v595 = vpop.f32.mrb[0].mxu0
    %v596 = vpop.f32.mrb[0].mxu0
    %v597 = vadd.f32 %v484, %v596
    %v598 = vpop.f32.mrb[0].mxu0
    %599 = vdwg.mxu0
    %v616 = vunpack.c.l.b16 %v358
    %v617 = vunpack.c.l.b16 %v359
    %v618 = vunpack.c.l.b16 %v360
    %v619 = vunpack.c.l.b16 %v361
    %v620 = vunpack.c.l.b16 %v362
    %v621 = vunpack.c.l.b16 %v363
    %v622 = vunpack.c.l.b16 %v364
    %v623 = vunpack.c.l.b16 %v365
    %v624 = vunpack.c.l.b16 %v366
    %v625 = vunpack.c.l.b16 %v367
    %v626 = vunpack.c.l.b16 %v368
    %v627 = vunpack.c.l.b16 %v369
    %v628 = vunpack.c.l.b16 %v370
    %v629 = vunpack.c.l.b16 %v371
    %v630 = vunpack.c.l.b16 %v372
    %v631 = vunpack.c.l.b16 %v373
    %v632 = vpack.c.b16 %v617, %v616
    %v633 = vpack.c.b16 %v619, %v618
    %v634 = vpack.c.b16 %v621, %v620
    %v635 = vpack.c.b16 %v623, %v622
    %v636 = vpack.c.b16 %v625, %v624
    %v637 = vpack.c.b16 %v627, %v626
    %v638 = vpack.c.b16 %v629, %v628
    %v639 = vpack.c.b16 %v631, %v630
    %648 = vmatprep.subr.bf16.mxu0 0
    %649 = vmatpush1.bf16.msra.mxu0 %v632
    %650 = vmatprep.subr.bf16.mxu0 0
    %651 = vmatpush1.bf16.msra.mxu0 %v633
    %652 = vmatprep.subr.bf16.mxu0 0
    %653 = vmatpush1.bf16.msra.mxu0 %v634
    %654 = vmatprep.subr.bf16.mxu0 0
    %655 = vmatpush1.bf16.msra.mxu0 %v635
    %656 = vmatprep.subr.bf16.mxu0 0
    %657 = vmatpush1.bf16.msra.mxu0 %v636
    %658 = vmatprep.subr.bf16.mxu0 0
    %659 = vmatpush1.bf16.msra.mxu0 %v637
    %660 = vmatprep.subr.bf16.mxu0 0
    %661 = vmatpush1.bf16.msra.mxu0 %v638
    %662 = vmatprep.subr.bf16.mxu0 0
    %663 = vmatpush1.bf16.msra.mxu0 %v639
    %664 = vmatprep.subr.bf16.mxu0 0
    %665 = vmatpush1.bf16.msra.mxu0 0
    %666 = vmatprep.subr.bf16.mxu0 0
    %667 = vmatpush1.bf16.msra.mxu0 0
    %668 = vmatprep.subr.bf16.mxu0 0
    %669 = vmatpush1.bf16.msra.mxu0 0
    %670 = vmatprep.subr.bf16.mxu0 0
    %671 = vmatpush1.bf16.msra.mxu0 0
    %672 = vmatprep.subr.bf16.mxu0 0
    %673 = vmatpush1.bf16.msra.mxu0 0
    %674 = vmatprep.subr.bf16.mxu0 0
    %675 = vmatpush1.bf16.msra.mxu0 0
    %676 = vmatprep.subr.bf16.mxu0 0
    %677 = vmatpush1.bf16.msra.mxu0 0
    %678 = vmatprep.subr.bf16.mxu0 0
    %679 = vmatpush1.bf16.msra.mxu0 0
    %680 = vmatprep.mubr.bf16.mxu0 0
    %681 = vmatmul.mubr.bf16.gmra.mrb[0].mxu0 %v300
    %v682 = vpop.f32.mrb[0].mxu0
    %v683 = vadd.f32 0.0, %v682
    %v684 = vpop.f32.mrb[0].mxu0
    %v685 = vpop.f32.mrb[0].mxu0
    %v686 = vadd.f32 0.0, %v685
    %v687 = vpop.f32.mrb[0].mxu0
    %688 = vmatprep.mubr.bf16.mxu0 0
    %689 = vmatmul.mubr.bf16.gmra.mrb[0].mxu0 %v301
    %v690 = vpop.f32.mrb[0].mxu0
    %v691 = vadd.f32 0.0, %v690
    %v692 = vpop.f32.mrb[0].mxu0
    %v693 = vpop.f32.mrb[0].mxu0
    %v694 = vadd.f32 0.0, %v693
    %v695 = vpop.f32.mrb[0].mxu0
    %696 = vmatprep.mubr.bf16.mxu0 0
    %697 = vmatmul.mubr.bf16.gmra.mrb[0].mxu0 %v302
    %v698 = vpop.f32.mrb[0].mxu0
    %v699 = vadd.f32 0.0, %v698
    %v700 = vpop.f32.mrb[0].mxu0
    %v701 = vpop.f32.mrb[0].mxu0
    %v702 = vadd.f32 0.0, %v701
    %v703 = vpop.f32.mrb[0].mxu0
    %704 = vmatprep.mubr.bf16.mxu0 0
    %705 = vmatmul.mubr.bf16.gmra.mrb[0].mxu0 %v303
    %v706 = vpop.f32.mrb[0].mxu0
    %v707 = vadd.f32 0.0, %v706
    %v708 = vpop.f32.mrb[0].mxu0
    %v709 = vpop.f32.mrb[0].mxu0
    %v710 = vadd.f32 0.0, %v709
    %v711 = vpop.f32.mrb[0].mxu0
    %712 = vdwg.mxu0
    %v713 = vadd.f32 %v570, %v683
    %v714 = vadd.f32 %v573, %v686
    %v715 = vadd.f32 %v578, %v691
    %v716 = vadd.f32 %v581, %v694
    %v717 = vadd.f32 %v586, %v699
    %v718 = vadd.f32 %v589, %v702
    %v719 = vadd.f32 %v594, %v707
    %v720 = vadd.f32 %v597, %v710
    %721 = vmatprep.subr.bf16.mxu0 0
    %722 = vmatpush1.bf16.msra.mxu0 %v406
    %723 = vmatprep.subr.bf16.mxu0 0
    %724 = vmatpush1.bf16.msra.mxu0 %v407
    %725 = vmatprep.subr.bf16.mxu0 0
    %726 = vmatpush1.bf16.msra.mxu0 %v408
    %727 = vmatprep.subr.bf16.mxu0 0
    %728 = vmatpush1.bf16.msra.mxu0 %v409
    %729 = vmatprep.subr.bf16.mxu0 0
    %730 = vmatpush1.bf16.msra.mxu0 %v410
    %731 = vmatprep.subr.bf16.mxu0 0
    %732 = vmatpush1.bf16.msra.mxu0 %v411
    %733 = vmatprep.subr.bf16.mxu0 0
    %734 = vmatpush1.bf16.msra.mxu0 %v412
    %735 = vmatprep.subr.bf16.mxu0 0
    %736 = vmatpush1.bf16.msra.mxu0 %v413
    %737 = vmatprep.subr.bf16.mxu0 0
    %738 = vmatpush1.bf16.msra.mxu0 0
    %739 = vmatprep.subr.bf16.mxu0 0
    %740 = vmatpush1.bf16.msra.mxu0 0
    %741 = vmatprep.subr.bf16.mxu0 0
    %742 = vmatpush1.bf16.msra.mxu0 0
    %743 = vmatprep.subr.bf16.mxu0 0
    %744 = vmatpush1.bf16.msra.mxu0 0
    %745 = vmatprep.subr.bf16.mxu0 0
    %746 = vmatpush1.bf16.msra.mxu0 0
    %747 = vmatprep.subr.bf16.mxu0 0
    %748 = vmatpush1.bf16.msra.mxu0 0
    %749 = vmatprep.subr.bf16.mxu0 0
    %750 = vmatpush1.bf16.msra.mxu0 0
    %751 = vmatprep.subr.bf16.mxu0 0
    %752 = vmatpush1.bf16.msra.mxu0 0
    %753 = vmatprep.mubr.bf16.mxu0 0
    %754 = vmatmul.mubr.bf16.gmra.mrb[0].mxu0 %v300
    %v755 = vpop.f32.mrb[0].mxu0
    %v756 = vadd.f32 0.0, %v755
    %v757 = vpop.f32.mrb[0].mxu0
    %v758 = vpop.f32.mrb[0].mxu0
    %v759 = vadd.f32 0.0, %v758
    %v760 = vpop.f32.mrb[0].mxu0
    %761 = vmatprep.mubr.bf16.mxu0 0
    %762 = vmatmul.mubr.bf16.gmra.mrb[0].mxu0 %v301
    %v763 = vpop.f32.mrb[0].mxu0
    %v764 = vadd.f32 0.0, %v763
    %v765 = vpop.f32.mrb[0].mxu0
    %v766 = vpop.f32.mrb[0].mxu0
    %v767 = vadd.f32 0.0, %v766
    %v768 = vpop.f32.mrb[0].mxu0
    %769 = vmatprep.mubr.bf16.mxu0 0
    %770 = vmatmul.mubr.bf16.gmra.mrb[0].mxu0 %v302
    %v771 = vpop.f32.mrb[0].mxu0
    %v772 = vadd.f32 0.0, %v771
    %v773 = vpop.f32.mrb[0].mxu0
    %v774 = vpop.f32.mrb[0].mxu0
    %v775 = vadd.f32 0.0, %v774
    %v776 = vpop.f32.mrb[0].mxu0
    %777 = vmatprep.mubr.bf16.mxu0 0
    %778 = vmatmul.mubr.bf16.gmra.mrb[0].mxu0 %v303
    %v779 = vpop.f32.mrb[0].mxu0
    %v780 = vadd.f32 0.0, %v779
    %v781 = vpop.f32.mrb[0].mxu0
    %v782 = vpop.f32.mrb[0].mxu0
    %v783 = vadd.f32 0.0, %v782
    %v784 = vpop.f32.mrb[0].mxu0
    %785 = vdwg.mxu0
    %786 = vmatprep.subr.bf16.mxu0 0
    %787 = vmatpush1.bf16.msra.mxu0 %v519
    %788 = vmatprep.subr.bf16.mxu0 0
    %789 = vmatpush1.bf16.msra.mxu0 %v520
    %790 = vmatprep.subr.bf16.mxu0 0
    %791 = vmatpush1.bf16.msra.mxu0 %v521
    %792 = vmatprep.subr.bf16.mxu0 0
    %793 = vmatpush1.bf16.msra.mxu0 %v522
    %794 = vmatprep.subr.bf16.mxu0 0
    %795 = vmatpush1.bf16.msra.mxu0 %v523
    %796 = vmatprep.subr.bf16.mxu0 0
    %797 = vmatpush1.bf16.msra.mxu0 %v524
    %798 = vmatprep.subr.bf16.mxu0 0
    %799 = vmatpush1.bf16.msra.mxu0 %v525
    %800 = vmatprep.subr.bf16.mxu0 0
    %801 = vmatpush1.bf16.msra.mxu0 %v526
    %802 = vmatprep.subr.bf16.mxu0 0
    %803 = vmatpush1.bf16.msra.mxu0 0
    %804 = vmatprep.subr.bf16.mxu0 0
    %805 = vmatpush1.bf16.msra.mxu0 0
    %806 = vmatprep.subr.bf16.mxu0 0
    %807 = vmatpush1.bf16.msra.mxu0 0
    %808 = vmatprep.subr.bf16.mxu0 0
    %809 = vmatpush1.bf16.msra.mxu0 0
    %810 = vmatprep.subr.bf16.mxu0 0
    %811 = vmatpush1.bf16.msra.mxu0 0
    %812 = vmatprep.subr.bf16.mxu0 0
    %813 = vmatpush1.bf16.msra.mxu0 0
    %814 = vmatprep.subr.bf16.mxu0 0
    %815 = vmatpush1.bf16.msra.mxu0 0
    %816 = vmatprep.subr.bf16.mxu0 0
    %817 = vmatpush1.bf16.msra.mxu0 0
    %818 = vmatprep.mubr.bf16.mxu0 0
    %819 = vmatmul.mubr.bf16.gmra.mrb[0].mxu0 %v280
    %v820 = vpop.f32.mrb[0].mxu0
    %v821 = vadd.f32 %v756, %v820
    %v822 = vpop.f32.mrb[0].mxu0
    %v823 = vpop.f32.mrb[0].mxu0
    %v824 = vadd.f32 %v759, %v823
    %v825 = vpop.f32.mrb[0].mxu0
    %826 = vmatprep.mubr.bf16.mxu0 0
    %827 = vmatmul.mubr.bf16.gmra.mrb[0].mxu0 %v281
    %v828 = vpop.f32.mrb[0].mxu0
    %v829 = vadd.f32 %v764, %v828
    %v830 = vpop.f32.mrb[0].mxu0
    %v831 = vpop.f32.mrb[0].mxu0
    %v832 = vadd.f32 %v767, %v831
    %v833 = vpop.f32.mrb[0].mxu0
    %834 = vmatprep.mubr.bf16.mxu0 0
    %835 = vmatmul.mubr.bf16.gmra.mrb[0].mxu0 %v282
    %v836 = vpop.f32.mrb[0].mxu0
    %v837 = vadd.f32 %v772, %v836
    %v838 = vpop.f32.mrb[0].mxu0
    %v839 = vpop.f32.mrb[0].mxu0
    %v840 = vadd.f32 %v775, %v839
    %v841 = vpop.f32.mrb[0].mxu0
    %842 = vmatprep.mubr.bf16.mxu0 0
    %843 = vmatmul.mubr.bf16.gmra.mrb[0].mxu0 %v283
    %v844 = vpop.f32.mrb[0].mxu0
    %v845 = vadd.f32 %v780, %v844
    %v846 = vpop.f32.mrb[0].mxu0
    %v847 = vpop.f32.mrb[0].mxu0
    %v848 = vadd.f32 %v783, %v847
    %v849 = vpop.f32.mrb[0].mxu0
    %850 = vdwg.mxu0
    %851 = vmatprep.subr.bf16.mxu0 0
    %852 = vmatpush1.bf16.msra.mxu0 %v632
    %853 = vmatprep.subr.bf16.mxu0 0
    %854 = vmatpush1.bf16.msra.mxu0 %v633
    %855 = vmatprep.subr.bf16.mxu0 0
    %856 = vmatpush1.bf16.msra.mxu0 %v634
    %857 = vmatprep.subr.bf16.mxu0 0
    %858 = vmatpush1.bf16.msra.mxu0 %v635
    %859 = vmatprep.subr.bf16.mxu0 0
    %860 = vmatpush1.bf16.msra.mxu0 %v636
    %861 = vmatprep.subr.bf16.mxu0 0
    %862 = vmatpush1.bf16.msra.mxu0 %v637
    %863 = vmatprep.subr.bf16.mxu0 0
    %864 = vmatpush1.bf16.msra.mxu0 %v638
    %865 = vmatprep.subr.bf16.mxu0 0
    %866 = vmatpush1.bf16.msra.mxu0 %v639
    %867 = vmatprep.subr.bf16.mxu0 0
    %868 = vmatpush1.bf16.msra.mxu0 0
    %869 = vmatprep.subr.bf16.mxu0 0
    %870 = vmatpush1.bf16.msra.mxu0 0
    %871 = vmatprep.subr.bf16.mxu0 0
    %872 = vmatpush1.bf16.msra.mxu0 0
    %873 = vmatprep.subr.bf16.mxu0 0
    %874 = vmatpush1.bf16.msra.mxu0 0
    %875 = vmatprep.subr.bf16.mxu0 0
    %876 = vmatpush1.bf16.msra.mxu0 0
    %877 = vmatprep.subr.bf16.mxu0 0
    %878 = vmatpush1.bf16.msra.mxu0 0
    %879 = vmatprep.subr.bf16.mxu0 0
    %880 = vmatpush1.bf16.msra.mxu0 0
    %881 = vmatprep.subr.bf16.mxu0 0
    %882 = vmatpush1.bf16.msra.mxu0 0
    %883 = vmatprep.mubr.bf16.mxu0 0
    %884 = vmatmul.mubr.bf16.gmra.mrb[0].mxu0 %v320
    %v885 = vpop.f32.mrb[0].mxu0
    %v886 = vadd.f32 0.0, %v885
    %v887 = vpop.f32.mrb[0].mxu0
    %v888 = vpop.f32.mrb[0].mxu0
    %v889 = vadd.f32 0.0, %v888
    %v890 = vpop.f32.mrb[0].mxu0
    %891 = vmatprep.mubr.bf16.mxu0 0
    %892 = vmatmul.mubr.bf16.gmra.mrb[0].mxu0 %v321
    %v893 = vpop.f32.mrb[0].mxu0
    %v894 = vadd.f32 0.0, %v893
    %v895 = vpop.f32.mrb[0].mxu0
    %v896 = vpop.f32.mrb[0].mxu0
    %v897 = vadd.f32 0.0, %v896
    %v898 = vpop.f32.mrb[0].mxu0
    %899 = vmatprep.mubr.bf16.mxu0 0
    %900 = vmatmul.mubr.bf16.gmra.mrb[0].mxu0 %v322
    %v901 = vpop.f32.mrb[0].mxu0
    %v902 = vadd.f32 0.0, %v901
    %v903 = vpop.f32.mrb[0].mxu0
    %v904 = vpop.f32.mrb[0].mxu0
    %v905 = vadd.f32 0.0, %v904
    %v906 = vpop.f32.mrb[0].mxu0
    %907 = vmatprep.mubr.bf16.mxu0 0
    %908 = vmatmul.mubr.bf16.gmra.mrb[0].mxu0 %v323
    %v909 = vpop.f32.mrb[0].mxu0
    %v910 = vadd.f32 0.0, %v909
    %v911 = vpop.f32.mrb[0].mxu0
    %v912 = vpop.f32.mrb[0].mxu0
    %v913 = vadd.f32 0.0, %v912
    %v914 = vpop.f32.mrb[0].mxu0
    %915 = vdwg.mxu0
    %v916 = vadd.f32 %v821, %v886
    %v917 = vadd.f32 %v824, %v889
    %v918 = vadd.f32 %v829, %v894
    %v919 = vadd.f32 %v832, %v897
    %v920 = vadd.f32 %v837, %v902
    %v921 = vadd.f32 %v840, %v905
    %v922 = vadd.f32 %v845, %v910
    %v923 = vadd.f32 %v848, %v913
    %v924 = vmax.f32 %v713, %v916
    %v925 = vmax.f32 %v714, %v917
    %v926 = vmax.f32 %v715, %v918
    %v927 = vmax.f32 %v716, %v919
    %v928 = vmax.f32 %v717, %v920
    %v929 = vmax.f32 %v718, %v921
    %v930 = vmax.f32 %v719, %v922
    %v931 = vmax.f32 %v720, %v923
    %v932 = vld [vmem:[%s2] sm:$0x1]
    %v934 = vlaneseq
    %v935 = vshrl.u32 %v934, 7
    %v936 = vsub.s32 0, %v935
    %v937 = vrot.slane %v932, %v936
    %v939 = vadd.f32 %v924, %v937
    %v940 = vadd.f32 %v925, %v937
    %v941 = vadd.f32 %v926, %v937
    %v942 = vadd.f32 %v927, %v937
    %v943 = vadd.f32 %v928, %v937
    %v944 = vadd.f32 %v929, %v937
    %v945 = vadd.f32 %v930, %v937
    %v946 = vadd.f32 %v931, %v937
    %v947 = vmax.f32 %v939, 0.0
    %v948 = vmax.f32 %v940, 0.0
    %v949 = vmax.f32 %v941, 0.0
    %v950 = vmax.f32 %v942, 0.0
    %v951 = vmax.f32 %v943, 0.0
    %v952 = vmax.f32 %v944, 0.0
    %v953 = vmax.f32 %v945, 0.0
    %v954 = vmax.f32 %v946, 0.0
    %955 = vst [vmem:[#allocation2 + $0x8] sm:$0xff] %v947
    %956 = vst [vmem:[#allocation2 + $0x10] sm:$0xff] %v948
    %957 = vst [vmem:[#allocation2 + $0x18] sm:$0xff] %v949
    %958 = vst [vmem:[#allocation2 + $0x20] sm:$0xff] %v950
    %959 = vst [vmem:[#allocation2 + $0x58] sm:$0xff] %v951
    %960 = vst [vmem:[#allocation2 + $0x60] sm:$0xff] %v952
    %961 = vst [vmem:[#allocation2 + $0x68] sm:$0xff] %v953
    %962 = vst [vmem:[#allocation2 + $0x70] sm:$0xff] %v954
    %963 = vst [vmem:[#allocation2 + $0x28] sm:$0x1] 0.0
    %964 = vst [vmem:[#allocation2 + $0x78] sm:$0x1] 0.0
    %v965 = vld [vmem:[%s244] ss:$2 sm:$0xff]
    %v966 = vld [vmem:[%s246] ss:$2 sm:$0xff]
    %v967 = vld [vmem:[%s252] ss:$2 sm:$0xff]
    %v968 = vld [vmem:[%s254] ss:$2 sm:$0xff]
    %v969 = vpack.c.bf16 %v966, %v965
    %v970 = vpack.c.bf16 %v968, %v967
    %v971 = vld [vmem:[%s264] ss:$2 sm:$0xff]
    %v972 = vld [vmem:[%s266] ss:$2 sm:$0xff]
    %v973 = vld [vmem:[%s272] ss:$2 sm:$0xff]
    %v974 = vld [vmem:[%s274] ss:$2 sm:$0xff]
    %v975 = vpack.c.bf16 %v972, %v971
    %v976 = vpack.c.bf16 %v974, %v973
    %v977 = vld [vmem:[%s284] ss:$2 sm:$0xff]
    %v978 = vld [vmem:[%s286] ss:$2 sm:$0xff]
    %v979 = vld [vmem:[%s292] ss:$2 sm:$0xff]
    %v980 = vld [vmem:[%s294] ss:$2 sm:$0xff]
    %v981 = vpack.c.bf16 %v978, %v977
    %v982 = vpack.c.bf16 %v980, %v979
    %v983 = vld [vmem:[%s304] ss:$2 sm:$0xff]
    %v984 = vld [vmem:[%s306] ss:$2 sm:$0xff]
    %v985 = vld [vmem:[%s312] ss:$2 sm:$0xff]
    %v986 = vld [vmem:[%s314] ss:$2 sm:$0xff]
    %v987 = vpack.c.bf16 %v984, %v983
    %v988 = vpack.c.bf16 %v986, %v985
    %s989 = scalar_lea.vmem [#allocation6], 192
    %v990 = vld [vmem:[%s989] sm:$0xf]
    %v991 = vld [vmem:[%s989 + $0x4] sm:$0xf]
    %v992 = vld [vmem:[%s989 + $0x8] sm:$0xf]
    %v993 = vld [vmem:[%s989 + $0xc] sm:$0xf]
    %v994 = vld [vmem:[%s989 + $0x10] sm:$0xf]
    %v995 = vld [vmem:[%s989 + $0x14] sm:$0xf]
    %v996 = vld [vmem:[%s989 + $0x18] sm:$0xf]
    %v997 = vld [vmem:[%s989 + $0x1c] sm:$0xf]
    %v998 = vld [vmem:[%s989 + $0x20] sm:$0xf]
    %v999 = vld [vmem:[%s989 + $0x24] sm:$0xf]
    %v1000 = vld [vmem:[%s989 + $0x28] sm:$0xf]
    %v1001 = vld [vmem:[%s989 + $0x2c] sm:$0xf]
    %v1002 = vld [vmem:[%s989 + $0x30] sm:$0xf]
    %v1003 = vld [vmem:[%s989 + $0x34] sm:$0xf]
    %v1004 = vld [vmem:[%s989 + $0x38] sm:$0xf]
    %v1005 = vld [vmem:[%s989 + $0x3c] sm:$0xf]
    %s1006 = scalar_lea.vmem [#allocation6], 256
    %v1007 = vld [vmem:[%s1006] sm:$0xf]
    %v1008 = vld [vmem:[%s1006 + $0x4] sm:$0xf]
    %v1009 = vld [vmem:[%s1006 + $0x8] sm:$0xf]
    %v1010 = vld [vmem:[%s1006 + $0xc] sm:$0xf]
    %v1011 = vld [vmem:[%s1006 + $0x10] sm:$0xf]
    %v1012 = vld [vmem:[%s1006 + $0x14] sm:$0xf]
    %v1013 = vld [vmem:[%s1006 + $0x18] sm:$0xf]
    %v1014 = vld [vmem:[%s1006 + $0x1c] sm:$0xf]
    %v1015 = vld [vmem:[%s1006 + $0x20] sm:$0xf]
    %v1016 = vld [vmem:[%s1006 + $0x24] sm:$0xf]
    %v1017 = vld [vmem:[%s1006 + $0x28] sm:$0xf]
    %v1018 = vld [vmem:[%s1006 + $0x2c] sm:$0xf]
    %v1019 = vld [vmem:[%s1006 + $0x30] sm:$0xf]
    %v1020 = vld [vmem:[%s1006 + $0x34] sm:$0xf]
    %v1021 = vld [vmem:[%s1006 + $0x38] sm:$0xf]
    %v1022 = vld [vmem:[%s1006 + $0x3c] sm:$0xf]
    %s1023 = scalar_lea.vmem [#allocation6], 320
    %v1024 = vld [vmem:[%s1023] sm:$0xf]
    %v1025 = vld [vmem:[%s1023 + $0x4] sm:$0xf]
    %v1026 = vld [vmem:[%s1023 + $0x8] sm:$0xf]
    %v1027 = vld [vmem:[%s1023 + $0xc] sm:$0xf]
    %v1028 = vld [vmem:[%s1023 + $0x10] sm:$0xf]
    %v1029 = vld [vmem:[%s1023 + $0x14] sm:$0xf]
    %v1030 = vld [vmem:[%s1023 + $0x18] sm:$0xf]
    %v1031 = vld [vmem:[%s1023 + $0x1c] sm:$0xf]
    %v1032 = vld [vmem:[%s1023 + $0x20] sm:$0xf]
    %v1033 = vld [vmem:[%s1023 + $0x24] sm:$0xf]
    %v1034 = vld [vmem:[%s1023 + $0x28] sm:$0xf]
    %v1035 = vld [vmem:[%s1023 + $0x2c] sm:$0xf]
    %v1036 = vld [vmem:[%s1023 + $0x30] sm:$0xf]
    %v1037 = vld [vmem:[%s1023 + $0x34] sm:$0xf]
    %v1038 = vld [vmem:[%s1023 + $0x38] sm:$0xf]
    %v1039 = vld [vmem:[%s1023 + $0x3c] sm:$0xf]
    %v1056 = vunpack.c.l.b16 %v1007
    %v1057 = vunpack.c.l.b16 %v1008
    %v1058 = vunpack.c.l.b16 %v1009
    %v1059 = vunpack.c.l.b16 %v1010
    %v1060 = vunpack.c.l.b16 %v1011
    %v1061 = vunpack.c.l.b16 %v1012
    %v1062 = vunpack.c.l.b16 %v1013
    %v1063 = vunpack.c.l.b16 %v1014
    %v1064 = vunpack.c.l.b16 %v1015
    %v1065 = vunpack.c.l.b16 %v1016
    %v1066 = vunpack.c.l.b16 %v1017
    %v1067 = vunpack.c.l.b16 %v1018
    %v1068 = vunpack.c.l.b16 %v1019
    %v1069 = vunpack.c.l.b16 %v1020
    %v1070 = vunpack.c.l.b16 %v1021
    %v1071 = vunpack.c.l.b16 %v1022
    %v1072 = vpack.c.b16 %v1057, %v1056
    %v1073 = vpack.c.b16 %v1059, %v1058
    %v1074 = vpack.c.b16 %v1061, %v1060
    %v1075 = vpack.c.b16 %v1063, %v1062
    %v1076 = vpack.c.b16 %v1065, %v1064
    %v1077 = vpack.c.b16 %v1067, %v1066
    %v1078 = vpack.c.b16 %v1069, %v1068
    %v1079 = vpack.c.b16 %v1071, %v1070
    %1088 = vmatprep.subr.bf16.mxu0 0
    %1089 = vmatpush1.bf16.msra.mxu0 %v1072
    %1090 = vmatprep.subr.bf16.mxu0 0
    %1091 = vmatpush1.bf16.msra.mxu0 %v1073
    %1092 = vmatprep.subr.bf16.mxu0 0
    %1093 = vmatpush1.bf16.msra.mxu0 %v1074
    %1094 = vmatprep.subr.bf16.mxu0 0
    %1095 = vmatpush1.bf16.msra.mxu0 %v1075
    %1096 = vmatprep.subr.bf16.mxu0 0
    %1097 = vmatpush1.bf16.msra.mxu0 %v1076
    %1098 = vmatprep.subr.bf16.mxu0 0
    %1099 = vmatpush1.bf16.msra.mxu0 %v1077
    %1100 = vmatprep.subr.bf16.mxu0 0
    %1101 = vmatpush1.bf16.msra.mxu0 %v1078
    %1102 = vmatprep.subr.bf16.mxu0 0
    %1103 = vmatpush1.bf16.msra.mxu0 %v1079
    %1104 = vmatprep.subr.bf16.mxu0 0
    %1105 = vmatpush1.bf16.msra.mxu0 0
    %1106 = vmatprep.subr.bf16.mxu0 0
    %1107 = vmatpush1.bf16.msra.mxu0 0
    %1108 = vmatprep.subr.bf16.mxu0 0
    %1109 = vmatpush1.bf16.msra.mxu0 0
    %1110 = vmatprep.subr.bf16.mxu0 0
    %1111 = vmatpush1.bf16.msra.mxu0 0
    %1112 = vmatprep.subr.bf16.mxu0 0
    %1113 = vmatpush1.bf16.msra.mxu0 0
    %1114 = vmatprep.subr.bf16.mxu0 0
    %1115 = vmatpush1.bf16.msra.mxu0 0
    %1116 = vmatprep.subr.bf16.mxu0 0
    %1117 = vmatpush1.bf16.msra.mxu0 0
    %1118 = vmatprep.subr.bf16.mxu0 0
    %1119 = vmatpush1.bf16.msra.mxu0 0
    %1120 = vmatprep.mubr.bf16.mxu0 0
    %1121 = vmatmul.mubr.bf16.gmra.mrb[0].mxu0 %v975
    %v1122 = vpop.f32.mrb[0].mxu0
    %v1123 = vadd.f32 0.0, %v1122
    %v1124 = vpop.f32.mrb[0].mxu0
    %v1125 = vpop.f32.mrb[0].mxu0
    %v1126 = vadd.f32 0.0, %v1125
    %v1127 = vpop.f32.mrb[0].mxu0
    %1128 = vmatprep.mubr.bf16.mxu0 0
    %1129 = vmatmul.mubr.bf16.gmra.mrb[0].mxu0 %v976
    %v1130 = vpop.f32.mrb[0].mxu0
    %v1131 = vadd.f32 0.0, %v1130
    %v1132 = vpop.f32.mrb[0].mxu0
    %v1133 = vpop.f32.mrb[0].mxu0
    %v1134 = vadd.f32 0.0, %v1133
    %v1135 = vpop.f32.mrb[0].mxu0
    %1136 = vdwg.mxu0
    %v1153 = vunpack.c.l.b16 %v990
    %v1154 = vunpack.c.l.b16 %v991
    %v1155 = vunpack.c.l.b16 %v992
    %v1156 = vunpack.c.l.b16 %v993
    %v1157 = vunpack.c.l.b16 %v994
    %v1158 = vunpack.c.l.b16 %v995
    %v1159 = vunpack.c.l.b16 %v996
    %v1160 = vunpack.c.l.b16 %v997
    %v1161 = vunpack.c.l.b16 %v998
    %v1162 = vunpack.c.l.b16 %v999
    %v1163 = vunpack.c.l.b16 %v1000
    %v1164 = vunpack.c.l.b16 %v1001
    %v1165 = vunpack.c.l.b16 %v1002
    %v1166 = vunpack.c.l.b16 %v1003
    %v1167 = vunpack.c.l.b16 %v1004
    %v1168 = vunpack.c.l.b16 %v1005
    %v1169 = vpack.c.b16 %v1154, %v1153
    %v1170 = vpack.c.b16 %v1156, %v1155
    %v1171 = vpack.c.b16 %v1158, %v1157
    %v1172 = vpack.c.b16 %v1160, %v1159
    %v1173 = vpack.c.b16 %v1162, %v1161
    %v1174 = vpack.c.b16 %v1164, %v1163
    %v1175 = vpack.c.b16 %v1166, %v1165
    %v1176 = vpack.c.b16 %v1168, %v1167
    %1185 = vmatprep.subr.bf16.mxu0 0
    %1186 = vmatpush1.bf16.msra.mxu0 %v1169
    %1187 = vmatprep.subr.bf16.mxu0 0
    %1188 = vmatpush1.bf16.msra.mxu0 %v1170
    %1189 = vmatprep.subr.bf16.mxu0 0
    %1190 = vmatpush1.bf16.msra.mxu0 %v1171
    %1191 = vmatprep.subr.bf16.mxu0 0
    %1192 = vmatpush1.bf16.msra.mxu0 %v1172
    %1193 = vmatprep.subr.bf16.mxu0 0
    %1194 = vmatpush1.bf16.msra.mxu0 %v1173
    %1195 = vmatprep.subr.bf16.mxu0 0
    %1196 = vmatpush1.bf16.msra.mxu0 %v1174
    %1197 = vmatprep.subr.bf16.mxu0 0
    %1198 = vmatpush1.bf16.msra.mxu0 %v1175
    %1199 = vmatprep.subr.bf16.mxu0 0
    %1200 = vmatpush1.bf16.msra.mxu0 %v1176
    %1201 = vmatprep.subr.bf16.mxu0 0
    %1202 = vmatpush1.bf16.msra.mxu0 0
    %1203 = vmatprep.subr.bf16.mxu0 0
    %1204 = vmatpush1.bf16.msra.mxu0 0
    %1205 = vmatprep.subr.bf16.mxu0 0
    %1206 = vmatpush1.bf16.msra.mxu0 0
    %1207 = vmatprep.subr.bf16.mxu0 0
    %1208 = vmatpush1.bf16.msra.mxu0 0
    %1209 = vmatprep.subr.bf16.mxu0 0
    %1210 = vmatpush1.bf16.msra.mxu0 0
    %1211 = vmatprep.subr.bf16.mxu0 0
    %1212 = vmatpush1.bf16.msra.mxu0 0
    %1213 = vmatprep.subr.bf16.mxu0 0
    %1214 = vmatpush1.bf16.msra.mxu0 0
    %1215 = vmatprep.subr.bf16.mxu0 0
    %1216 = vmatpush1.bf16.msra.mxu0 0
    %1217 = vmatprep.mubr.bf16.mxu0 0
    %1218 = vmatmul.mubr.bf16.gmra.mrb[0].mxu0 %v969
    %v1219 = vpop.f32.mrb[0].mxu0
    %v1220 = vadd.f32 %v1123, %v1219
    %v1221 = vpop.f32.mrb[0].mxu0
    %v1222 = vpop.f32.mrb[0].mxu0
    %v1223 = vadd.f32 %v1126, %v1222
    %v1224 = vpop.f32.mrb[0].mxu0
    %1225 = vmatprep.mubr.bf16.mxu0 0
    %1226 = vmatmul.mubr.bf16.gmra.mrb[0].mxu0 %v970
    %v1227 = vpop.f32.mrb[0].mxu0
    %v1228 = vadd.f32 %v1131, %v1227
    %v1229 = vpop.f32.mrb[0].mxu0
    %v1230 = vpop.f32.mrb[0].mxu0
    %v1231 = vadd.f32 %v1134, %v1230
    %v1232 = vpop.f32.mrb[0].mxu0
    %1233 = vdwg.mxu0
    %v1250 = vunpack.c.l.b16 %v1024
    %v1251 = vunpack.c.l.b16 %v1025
    %v1252 = vunpack.c.l.b16 %v1026
    %v1253 = vunpack.c.l.b16 %v1027
    %v1254 = vunpack.c.l.b16 %v1028
    %v1255 = vunpack.c.l.b16 %v1029
    %v1256 = vunpack.c.l.b16 %v1030
    %v1257 = vunpack.c.l.b16 %v1031
    %v1258 = vunpack.c.l.b16 %v1032
    %v1259 = vunpack.c.l.b16 %v1033
    %v1260 = vunpack.c.l.b16 %v1034
    %v1261 = vunpack.c.l.b16 %v1035
    %v1262 = vunpack.c.l.b16 %v1036
    %v1263 = vunpack.c.l.b16 %v1037
    %v1264 = vunpack.c.l.b16 %v1038
    %v1265 = vunpack.c.l.b16 %v1039
    %v1266 = vpack.c.b16 %v1251, %v1250
    %v1267 = vpack.c.b16 %v1253, %v1252
    %v1268 = vpack.c.b16 %v1255, %v1254
    %v1269 = vpack.c.b16 %v1257, %v1256
    %v1270 = vpack.c.b16 %v1259, %v1258
    %v1271 = vpack.c.b16 %v1261, %v1260
    %v1272 = vpack.c.b16 %v1263, %v1262
    %v1273 = vpack.c.b16 %v1265, %v1264
    %1282 = vmatprep.subr.bf16.mxu0 0
    %1283 = vmatpush1.bf16.msra.mxu0 %v1266
    %1284 = vmatprep.subr.bf16.mxu0 0
    %1285 = vmatpush1.bf16.msra.mxu0 %v1267
    %1286 = vmatprep.subr.bf16.mxu0 0
    %1287 = vmatpush1.bf16.msra.mxu0 %v1268
    %1288 = vmatprep.subr.bf16.mxu0 0
    %1289 = vmatpush1.bf16.msra.mxu0 %v1269
    %1290 = vmatprep.subr.bf16.mxu0 0
    %1291 = vmatpush1.bf16.msra.mxu0 %v1270
    %1292 = vmatprep.subr.bf16.mxu0 0
    %1293 = vmatpush1.bf16.msra.mxu0 %v1271
    %1294 = vmatprep.subr.bf16.mxu0 0
    %1295 = vmatpush1.bf16.msra.mxu0 %v1272
    %1296 = vmatprep.subr.bf16.mxu0 0
    %1297 = vmatpush1.bf16.msra.mxu0 %v1273
    %1298 = vmatprep.subr.bf16.mxu0 0
    %1299 = vmatpush1.bf16.msra.mxu0 0
    %1300 = vmatprep.subr.bf16.mxu0 0
    %1301 = vmatpush1.bf16.msra.mxu0 0
    %1302 = vmatprep.subr.bf16.mxu0 0
    %1303 = vmatpush1.bf16.msra.mxu0 0
    %1304 = vmatprep.subr.bf16.mxu0 0
    %1305 = vmatpush1.bf16.msra.mxu0 0
    %1306 = vmatprep.subr.bf16.mxu0 0
    %1307 = vmatpush1.bf16.msra.mxu0 0
    %1308 = vmatprep.subr.bf16.mxu0 0
    %1309 = vmatpush1.bf16.msra.mxu0 0
    %1310 = vmatprep.subr.bf16.mxu0 0
    %1311 = vmatpush1.bf16.msra.mxu0 0
    %1312 = vmatprep.subr.bf16.mxu0 0
    %1313 = vmatpush1.bf16.msra.mxu0 0
    %1314 = vmatprep.mubr.bf16.mxu0 0
    %1315 = vmatmul.mubr.bf16.gmra.mrb[0].mxu0 %v981
    %v1316 = vpop.f32.mrb[0].mxu0
    %v1317 = vadd.f32 0.0, %v1316
    %v1318 = vpop.f32.mrb[0].mxu0
    %v1319 = vpop.f32.mrb[0].mxu0
    %v1320 = vadd.f32 0.0, %v1319
    %v1321 = vpop.f32.mrb[0].mxu0
    %1322 = vmatprep.mubr.bf16.mxu0 0
    %1323 = vmatmul.mubr.bf16.gmra.mrb[0].mxu0 %v982
    %v1324 = vpop.f32.mrb[0].mxu0
    %v1325 = vadd.f32 0.0, %v1324
    %v1326 = vpop.f32.mrb[0].mxu0
    %v1327 = vpop.f32.mrb[0].mxu0
    %v1328 = vadd.f32 0.0, %v1327
    %v1329 = vpop.f32.mrb[0].mxu0
    %1330 = vdwg.mxu0
    %v1331 = vadd.f32 %v1220, %v1317
    %v1332 = vadd.f32 %v1223, %v1320
    %v1333 = vadd.f32 %v1228, %v1325
    %v1334 = vadd.f32 %v1231, %v1328
    %1335 = vmatprep.subr.bf16.mxu0 0
    %1336 = vmatpush1.bf16.msra.mxu0 %v1072
    %1337 = vmatprep.subr.bf16.mxu0 0
    %1338 = vmatpush1.bf16.msra.mxu0 %v1073
    %1339 = vmatprep.subr.bf16.mxu0 0
    %1340 = vmatpush1.bf16.msra.mxu0 %v1074
    %1341 = vmatprep.subr.bf16.mxu0 0
    %1342 = vmatpush1.bf16.msra.mxu0 %v1075
    %1343 = vmatprep.subr.bf16.mxu0 0
    %1344 = vmatpush1.bf16.msra.mxu0 %v1076
    %1345 = vmatprep.subr.bf16.mxu0 0
    %1346 = vmatpush1.bf16.msra.mxu0 %v1077
    %1347 = vmatprep.subr.bf16.mxu0 0
    %1348 = vmatpush1.bf16.msra.mxu0 %v1078
    %1349 = vmatprep.subr.bf16.mxu0 0
    %1350 = vmatpush1.bf16.msra.mxu0 %v1079
    %1351 = vmatprep.subr.bf16.mxu0 0
    %1352 = vmatpush1.bf16.msra.mxu0 0
    %1353 = vmatprep.subr.bf16.mxu0 0
    %1354 = vmatpush1.bf16.msra.mxu0 0
    %1355 = vmatprep.subr.bf16.mxu0 0
    %1356 = vmatpush1.bf16.msra.mxu0 0
    %1357 = vmatprep.subr.bf16.mxu0 0
    %1358 = vmatpush1.bf16.msra.mxu0 0
    %1359 = vmatprep.subr.bf16.mxu0 0
    %1360 = vmatpush1.bf16.msra.mxu0 0
    %1361 = vmatprep.subr.bf16.mxu0 0
    %1362 = vmatpush1.bf16.msra.mxu0 0
    %1363 = vmatprep.subr.bf16.mxu0 0
    %1364 = vmatpush1.bf16.msra.mxu0 0
    %1365 = vmatprep.subr.bf16.mxu0 0
    %1366 = vmatpush1.bf16.msra.mxu0 0
    %1367 = vmatprep.mubr.bf16.mxu0 0
    %1368 = vmatmul.mubr.bf16.gmra.mrb[0].mxu0 %v981
    %v1369 = vpop.f32.mrb[0].mxu0
    %v1370 = vadd.f32 0.0, %v1369
    %v1371 = vpop.f32.mrb[0].mxu0
    %v1372 = vpop.f32.mrb[0].mxu0
    %v1373 = vadd.f32 0.0, %v1372
    %v1374 = vpop.f32.mrb[0].mxu0
    %1375 = vmatprep.mubr.bf16.mxu0 0
    %1376 = vmatmul.mubr.bf16.gmra.mrb[0].mxu0 %v982
    %v1377 = vpop.f32.mrb[0].mxu0
    %v1378 = vadd.f32 0.0, %v1377
    %v1379 = vpop.f32.mrb[0].mxu0
    %v1380 = vpop.f32.mrb[0].mxu0
    %v1381 = vadd.f32 0.0, %v1380
    %v1382 = vpop.f32.mrb[0].mxu0
    %1383 = vdwg.mxu0
    %1384 = vmatprep.subr.bf16.mxu0 0
    %1385 = vmatpush1.bf16.msra.mxu0 %v1169
    %1386 = vmatprep.subr.bf16.mxu0 0
    %1387 = vmatpush1.bf16.msra.mxu0 %v1170
    %1388 = vmatprep.subr.bf16.mxu0 0
    %1389 = vmatpush1.bf16.msra.mxu0 %v1171
    %1390 = vmatprep.subr.bf16.mxu0 0
    %1391 = vmatpush1.bf16.msra.mxu0 %v1172
    %1392 = vmatprep.subr.bf16.mxu0 0
    %1393 = vmatpush1.bf16.msra.mxu0 %v1173
    %1394 = vmatprep.subr.bf16.mxu0 0
    %1395 = vmatpush1.bf16.msra.mxu0 %v1174
    %1396 = vmatprep.subr.bf16.mxu0 0
    %1397 = vmatpush1.bf16.msra.mxu0 %v1175
    %1398 = vmatprep.subr.bf16.mxu0 0
    %1399 = vmatpush1.bf16.msra.mxu0 %v1176
    %1400 = vmatprep.subr.bf16.mxu0 0
    %1401 = vmatpush1.bf16.msra.mxu0 0
    %1402 = vmatprep.subr.bf16.mxu0 0
    %1403 = vmatpush1.bf16.msra.mxu0 0
    %1404 = vmatprep.subr.bf16.mxu0 0
    %1405 = vmatpush1.bf16.msra.mxu0 0
    %1406 = vmatprep.subr.bf16.mxu0 0
    %1407 = vmatpush1.bf16.msra.mxu0 0
    %1408 = vmatprep.subr.bf16.mxu0 0
    %1409 = vmatpush1.bf16.msra.mxu0 0
    %1410 = vmatprep.subr.bf16.mxu0 0
    %1411 = vmatpush1.bf16.msra.mxu0 0
    %1412 = vmatprep.subr.bf16.mxu0 0
    %1413 = vmatpush1.bf16.msra.mxu0 0
    %1414 = vmatprep.subr.bf16.mxu0 0
    %1415 = vmatpush1.bf16.msra.mxu0 0
    %1416 = vmatprep.mubr.bf16.mxu0 0
    %1417 = vmatmul.mubr.bf16.gmra.mrb[0].mxu0 %v975
    %v1418 = vpop.f32.mrb[0].mxu0
    %v1419 = vadd.f32 %v1370, %v1418
    %v1420 = vpop.f32.mrb[0].mxu0
    %v1421 = vpop.f32.mrb[0].mxu0
    %v1422 = vadd.f32 %v1373, %v1421
    %v1423 = vpop.f32.mrb[0].mxu0
    %1424 = vmatprep.mubr.bf16.mxu0 0
    %1425 = vmatmul.mubr.bf16.gmra.mrb[0].mxu0 %v976
    %v1426 = vpop.f32.mrb[0].mxu0
    %v1427 = vadd.f32 %v1378, %v1426
    %v1428 = vpop.f32.mrb[0].mxu0
    %v1429 = vpop.f32.mrb[0].mxu0
    %v1430 = vadd.f32 %v1381, %v1429
    %v1431 = vpop.f32.mrb[0].mxu0
    %1432 = vdwg.mxu0
    %1433 = vmatprep.subr.bf16.mxu0 0
    %1434 = vmatpush1.bf16.msra.mxu0 %v1266
    %1435 = vmatprep.subr.bf16.mxu0 0
    %1436 = vmatpush1.bf16.msra.mxu0 %v1267
    %1437 = vmatprep.subr.bf16.mxu0 0
    %1438 = vmatpush1.bf16.msra.mxu0 %v1268
    %1439 = vmatprep.subr.bf16.mxu0 0
    %1440 = vmatpush1.bf16.msra.mxu0 %v1269
    %1441 = vmatprep.subr.bf16.mxu0 0
    %1442 = vmatpush1.bf16.msra.mxu0 %v1270
    %1443 = vmatprep.subr.bf16.mxu0 0
    %1444 = vmatpush1.bf16.msra.mxu0 %v1271
    %1445 = vmatprep.subr.bf16.mxu0 0
    %1446 = vmatpush1.bf16.msra.mxu0 %v1272
    %1447 = vmatprep.subr.bf16.mxu0 0
    %1448 = vmatpush1.bf16.msra.mxu0 %v1273
    %1449 = vmatprep.subr.bf16.mxu0 0
    %1450 = vmatpush1.bf16.msra.mxu0 0
    %1451 = vmatprep.subr.bf16.mxu0 0
    %1452 = vmatpush1.bf16.msra.mxu0 0
    %1453 = vmatprep.subr.bf16.mxu0 0
    %1454 = vmatpush1.bf16.msra.mxu0 0
    %1455 = vmatprep.subr.bf16.mxu0 0
    %1456 = vmatpush1.bf16.msra.mxu0 0
    %1457 = vmatprep.subr.bf16.mxu0 0
    %1458 = vmatpush1.bf16.msra.mxu0 0
    %1459 = vmatprep.subr.bf16.mxu0 0
    %1460 = vmatpush1.bf16.msra.mxu0 0
    %1461 = vmatprep.subr.bf16.mxu0 0
    %1462 = vmatpush1.bf16.msra.mxu0 0
    %1463 = vmatprep.subr.bf16.mxu0 0
    %1464 = vmatpush1.bf16.msra.mxu0 0
    %1465 = vmatprep.mubr.bf16.mxu0 0
    %1466 = vmatmul.mubr.bf16.gmra.mrb[0].mxu0 %v987
    %v1467 = vpop.f32.mrb[0].mxu0
    %v1468 = vadd.f32 0.0, %v1467
    %v1469 = vpop.f32.mrb[0].mxu0
    %v1470 = vpop.f32.mrb[0].mxu0
    %v1471 = vadd.f32 0.0, %v1470
    %v1472 = vpop.f32.mrb[0].mxu0
    %1473 = vmatprep.mubr.bf16.mxu0 0
    %1474 = vmatmul.mubr.bf16.gmra.mrb[0].mxu0 %v988
    %v1475 = vpop.f32.mrb[0].mxu0
    %v1476 = vadd.f32 0.0, %v1475
    %v1477 = vpop.f32.mrb[0].mxu0
    %v1478 = vpop.f32.mrb[0].mxu0
    %v1479 = vadd.f32 0.0, %v1478
    %v1480 = vpop.f32.mrb[0].mxu0
    %1481 = vdwg.mxu0
    %v1482 = vadd.f32 %v1419, %v1468
    %v1483 = vadd.f32 %v1422, %v1471
    %v1484 = vadd.f32 %v1427, %v1476
    %v1485 = vadd.f32 %v1430, %v1479
    %v1486 = vmax.f32 %v1331, %v1482
    %v1487 = vmax.f32 %v1332, %v1483
    %v1488 = vmax.f32 %v1333, %v1484
    %v1489 = vmax.f32 %v1334, %v1485
    %s1490 = scalar_lea.vmem %s2, 1
    %v1491 = vld [vmem:[%s1490] sm:$0x1]
    %v1493 = vlaneseq
    %v1494 = vshrl.u32 %v1493, 7
    %v1495 = vsub.s32 0, %v1494
    %v1496 = vrot.slane %v1491, %v1495
    %v1498 = vadd.f32 %v1486, %v1496
    %v1499 = vadd.f32 %v1487, %v1496
    %v1500 = vadd.f32 %v1488, %v1496
    %v1501 = vadd.f32 %v1489, %v1496
    %v1502 = vmax.f32 %v1498, 0.0
    %v1503 = vmax.f32 %v1499, 0.0
    %v1504 = vmax.f32 %v1500, 0.0
    %v1505 = vmax.f32 %v1501, 0.0
    %1506 = vst [vmem:[#allocation2 + $0x8] sm:$0xff] %v1502
    %1507 = vst [vmem:[#allocation2 + $0x10] sm:$0xff] %v1503
    %1508 = vst [vmem:[#allocation2 + $0x58] sm:$0xff] %v1504
    %1509 = vst [vmem:[#allocation2 + $0x60] sm:$0xff] %v1505
    %1510 = vst [vmem:[#allocation2 + $0x18] sm:$0x1] 0.0
    %1511 = vst [vmem:[#allocation2 + $0x68] sm:$0x1] 0.0
    %v1512 = vld [vmem:[%s244] ss:$2 sm:$0xff]
    %v1513 = vld [vmem:[%s252] ss:$2 sm:$0xff]
    %v1514 = vpack.c.bf16 %v1512, %v1512
    %v1515 = vpack.c.bf16 %v1513, %v1513
    %v1516 = vld [vmem:[%s264] ss:$2 sm:$0xff]
    %v1517 = vld [vmem:[%s272] ss:$2 sm:$0xff]
    %v1518 = vpack.c.bf16 %v1516, %v1516
    %v1519 = vpack.c.bf16 %v1517, %v1517
    %v1520 = vld [vmem:[%s284] ss:$2 sm:$0xff]
    %v1521 = vld [vmem:[%s292] ss:$2 sm:$0xff]
    %v1522 = vpack.c.bf16 %v1520, %v1520
    %v1523 = vpack.c.bf16 %v1521, %v1521
    %v1524 = vld [vmem:[%s304] ss:$2 sm:$0xff]
    %v1525 = vld [vmem:[%s312] ss:$2 sm:$0xff]
    %v1526 = vpack.c.bf16 %v1524, %v1524
    %v1527 = vpack.c.bf16 %v1525, %v1525
    %s1528 = scalar_lea.vmem [#allocation6], 384
    %v1529 = vld [vmem:[%s1528] sm:$0xf]
    %v1530 = vld [vmem:[%s1528 + $0x4] sm:$0xf]
    %v1531 = vld [vmem:[%s1528 + $0x8] sm:$0xf]
    %v1532 = vld [vmem:[%s1528 + $0xc] sm:$0xf]
    %v1533 = vld [vmem:[%s1528 + $0x10] sm:$0xf]
    %v1534 = vld [vmem:[%s1528 + $0x14] sm:$0xf]
    %v1535 = vld [vmem:[%s1528 + $0x18] sm:$0xf]
    %v1536 = vld [vmem:[%s1528 + $0x1c] sm:$0xf]
    %v1537 = vld [vmem:[%s1528 + $0x20] sm:$0xf]
    %v1538 = vld [vmem:[%s1528 + $0x24] sm:$0xf]
    %v1539 = vld [vmem:[%s1528 + $0x28] sm:$0xf]
    %v1540 = vld [vmem:[%s1528 + $0x2c] sm:$0xf]
    %v1541 = vld [vmem:[%s1528 + $0x30] sm:$0xf]
    %v1542 = vld [vmem:[%s1528 + $0x34] sm:$0xf]
    %v1543 = vld [vmem:[%s1528 + $0x38] sm:$0xf]
    %v1544 = vld [vmem:[%s1528 + $0x3c] sm:$0xf]
    %s1545 = scalar_lea.vmem [#allocation6], 448
    %v1546 = vld [vmem:[%s1545] sm:$0xf]
    %v1547 = vld [vmem:[%s1545 + $0x4] sm:$0xf]
    %v1548 = vld [vmem:[%s1545 + $0x8] sm:$0xf]
    %v1549 = vld [vmem:[%s1545 + $0xc] sm:$0xf]
    %v1550 = vld [vmem:[%s1545 + $0x10] sm:$0xf]
    %v1551 = vld [vmem:[%s1545 + $0x14] sm:$0xf]
    %v1552 = vld [vmem:[%s1545 + $0x18] sm:$0xf]
    %v1553 = vld [vmem:[%s1545 + $0x1c] sm:$0xf]
    %v1554 = vld [vmem:[%s1545 + $0x20] sm:$0xf]
    %v1555 = vld [vmem:[%s1545 + $0x24] sm:$0xf]
    %v1556 = vld [vmem:[%s1545 + $0x28] sm:$0xf]
    %v1557 = vld [vmem:[%s1545 + $0x2c] sm:$0xf]
    %v1558 = vld [vmem:[%s1545 + $0x30] sm:$0xf]
    %v1559 = vld [vmem:[%s1545 + $0x34] sm:$0xf]
    %v1560 = vld [vmem:[%s1545 + $0x38] sm:$0xf]
    %v1561 = vld [vmem:[%s1545 + $0x3c] sm:$0xf]
    %s1562 = scalar_lea.vmem [#allocation6], 512
    %v1563 = vld [vmem:[%s1562] sm:$0xf]
    %v1564 = vld [vmem:[%s1562 + $0x4] sm:$0xf]
    %v1565 = vld [vmem:[%s1562 + $0x8] sm:$0xf]
    %v1566 = vld [vmem:[%s1562 + $0xc] sm:$0xf]
    %v1567 = vld [vmem:[%s1562 + $0x10] sm:$0xf]
    %v1568 = vld [vmem:[%s1562 + $0x14] sm:$0xf]
    %v1569 = vld [vmem:[%s1562 + $0x18] sm:$0xf]
    %v1570 = vld [vmem:[%s1562 + $0x1c] sm:$0xf]
    %v1571 = vld [vmem:[%s1562 + $0x20] sm:$0xf]
    %v1572 = vld [vmem:[%s1562 + $0x24] sm:$0xf]
    %v1573 = vld [vmem:[%s1562 + $0x28] sm:$0xf]
    %v1574 = vld [vmem:[%s1562 + $0x2c] sm:$0xf]
    %v1575 = vld [vmem:[%s1562 + $0x30] sm:$0xf]
    %v1576 = vld [vmem:[%s1562 + $0x34] sm:$0xf]
    %v1577 = vld [vmem:[%s1562 + $0x38] sm:$0xf]
    %v1578 = vld [vmem:[%s1562 + $0x3c] sm:$0xf]
    %v1581 = vunpack.c.l.b16 %v1518
    %v1582 = vunpack.c.l.b16 %v1519
    %v1583 = vpack.c.b16 %v1582, %v1581
    %v1601 = vunpack.c.l.b16 %v1546
    %v1602 = vunpack.c.l.b16 %v1547
    %v1603 = vunpack.c.l.b16 %v1548
    %v1604 = vunpack.c.l.b16 %v1549
    %v1605 = vunpack.c.l.b16 %v1550
    %v1606 = vunpack.c.l.b16 %v1551
    %v1607 = vunpack.c.l.b16 %v1552
    %v1608 = vunpack.c.l.b16 %v1553
    %v1609 = vunpack.c.l.b16 %v1554
    %v1610 = vunpack.c.l.b16 %v1555
    %v1611 = vunpack.c.l.b16 %v1556
    %v1612 = vunpack.c.l.b16 %v1557
    %v1613 = vunpack.c.l.b16 %v1558
    %v1614 = vunpack.c.l.b16 %v1559
    %v1615 = vunpack.c.l.b16 %v1560
    %v1616 = vunpack.c.l.b16 %v1561
    %v1617 = vpack.c.b16 %v1602, %v1601
    %v1618 = vpack.c.b16 %v1604, %v1603
    %v1619 = vpack.c.b16 %v1606, %v1605
    %v1620 = vpack.c.b16 %v1608, %v1607
    %v1621 = vpack.c.b16 %v1610, %v1609
    %v1622 = vpack.c.b16 %v1612, %v1611
    %v1623 = vpack.c.b16 %v1614, %v1613
    %v1624 = vpack.c.b16 %v1616, %v1615
    %1633 = vmatprep.subr.bf16.mxu0 0
    %1634 = vmatpush1.bf16.msra.mxu0 %v1617
    %1635 = vmatprep.subr.bf16.mxu0 0
    %1636 = vmatpush1.bf16.msra.mxu0 %v1618
    %1637 = vmatprep.subr.bf16.mxu0 0
    %1638 = vmatpush1.bf16.msra.mxu0 %v1619
    %1639 = vmatprep.subr.bf16.mxu0 0
    %1640 = vmatpush1.bf16.msra.mxu0 %v1620
    %1641 = vmatprep.subr.bf16.mxu0 0
    %1642 = vmatpush1.bf16.msra.mxu0 %v1621
    %1643 = vmatprep.subr.bf16.mxu0 0
    %1644 = vmatpush1.bf16.msra.mxu0 %v1622
    %1645 = vmatprep.subr.bf16.mxu0 0
    %1646 = vmatpush1.bf16.msra.mxu0 %v1623
    %1647 = vmatprep.subr.bf16.mxu0 0
    %1648 = vmatpush1.bf16.msra.mxu0 %v1624
    %1649 = vmatprep.subr.bf16.mxu0 0
    %1650 = vmatpush1.bf16.msra.mxu0 0
    %1651 = vmatprep.subr.bf16.mxu0 0
    %1652 = vmatpush1.bf16.msra.mxu0 0
    %1653 = vmatprep.subr.bf16.mxu0 0
    %1654 = vmatpush1.bf16.msra.mxu0 0
    %1655 = vmatprep.subr.bf16.mxu0 0
    %1656 = vmatpush1.bf16.msra.mxu0 0
    %1657 = vmatprep.subr.bf16.mxu0 0
    %1658 = vmatpush1.bf16.msra.mxu0 0
    %1659 = vmatprep.subr.bf16.mxu0 0
    %1660 = vmatpush1.bf16.msra.mxu0 0
    %1661 = vmatprep.subr.bf16.mxu0 0
    %1662 = vmatpush1.bf16.msra.mxu0 0
    %1663 = vmatprep.subr.bf16.mxu0 0
    %1664 = vmatpush1.bf16.msra.mxu0 0
    %1665 = vmatprep.mubr.bf16.mxu0 0
    %1666 = vmatmul.mubr.bf16.gmra.mrb[0].mxu0 %v1583
    %v1667 = vpop.f32.mrb[0].mxu0
    %v1668 = vadd.f32 0.0, %v1667
    %v1669 = vpop.f32.mrb[0].mxu0
    %v1670 = vpop.f32.mrb[0].mxu0
    %v1671 = vadd.f32 0.0, %v1670
    %v1672 = vpop.f32.mrb[0].mxu0
    %1673 = vdwg.mxu0
    %v1676 = vunpack.c.l.b16 %v1514
    %v1677 = vunpack.c.l.b16 %v1515
    %v1678 = vpack.c.b16 %v1677, %v1676
    %v1696 = vunpack.c.l.b16 %v1529
    %v1697 = vunpack.c.l.b16 %v1530
    %v1698 = vunpack.c.l.b16 %v1531
    %v1699 = vunpack.c.l.b16 %v1532
    %v1700 = vunpack.c.l.b16 %v1533
    %v1701 = vunpack.c.l.b16 %v1534
    %v1702 = vunpack.c.l.b16 %v1535
    %v1703 = vunpack.c.l.b16 %v1536
    %v1704 = vunpack.c.l.b16 %v1537
    %v1705 = vunpack.c.l.b16 %v1538
    %v1706 = vunpack.c.l.b16 %v1539
    %v1707 = vunpack.c.l.b16 %v1540
    %v1708 = vunpack.c.l.b16 %v1541
    %v1709 = vunpack.c.l.b16 %v1542
    %v1710 = vunpack.c.l.b16 %v1543
    %v1711 = vunpack.c.l.b16 %v1544
    %v1712 = vpack.c.b16 %v1697, %v1696
    %v1713 = vpack.c.b16 %v1699, %v1698
    %v1714 = vpack.c.b16 %v1701, %v1700
    %v1715 = vpack.c.b16 %v1703, %v1702
    %v1716 = vpack.c.b16 %v1705, %v1704
    %v1717 = vpack.c.b16 %v1707, %v1706
    %v1718 = vpack.c.b16 %v1709, %v1708
    %v1719 = vpack.c.b16 %v1711, %v1710
    %1728 = vmatprep.subr.bf16.mxu0 0
    %1729 = vmatpush1.bf16.msra.mxu0 %v1712
    %1730 = vmatprep.subr.bf16.mxu0 0
    %1731 = vmatpush1.bf16.msra.mxu0 %v1713
    %1732 = vmatprep.subr.bf16.mxu0 0
    %1733 = vmatpush1.bf16.msra.mxu0 %v1714
    %1734 = vmatprep.subr.bf16.mxu0 0
    %1735 = vmatpush1.bf16.msra.mxu0 %v1715
    %1736 = vmatprep.subr.bf16.mxu0 0
    %1737 = vmatpush1.bf16.msra.mxu0 %v1716
    %1738 = vmatprep.subr.bf16.mxu0 0
    %1739 = vmatpush1.bf16.msra.mxu0 %v1717
    %1740 = vmatprep.subr.bf16.mxu0 0
    %1741 = vmatpush1.bf16.msra.mxu0 %v1718
    %1742 = vmatprep.subr.bf16.mxu0 0
    %1743 = vmatpush1.bf16.msra.mxu0 %v1719
    %1744 = vmatprep.subr.bf16.mxu0 0
    %1745 = vmatpush1.bf16.msra.mxu0 0
    %1746 = vmatprep.subr.bf16.mxu0 0
    %1747 = vmatpush1.bf16.msra.mxu0 0
    %1748 = vmatprep.subr.bf16.mxu0 0
    %1749 = vmatpush1.bf16.msra.mxu0 0
    %1750 = vmatprep.subr.bf16.mxu0 0
    %1751 = vmatpush1.bf16.msra.mxu0 0
    %1752 = vmatprep.subr.bf16.mxu0 0
    %1753 = vmatpush1.bf16.msra.mxu0 0
    %1754 = vmatprep.subr.bf16.mxu0 0
    %1755 = vmatpush1.bf16.msra.mxu0 0
    %1756 = vmatprep.subr.bf16.mxu0 0
    %1757 = vmatpush1.bf16.msra.mxu0 0
    %1758 = vmatprep.subr.bf16.mxu0 0
    %1759 = vmatpush1.bf16.msra.mxu0 0
    %1760 = vmatprep.mubr.bf16.mxu0 0
    %1761 = vmatmul.mubr.bf16.gmra.mrb[0].mxu0 %v1678
    %v1762 = vpop.f32.mrb[0].mxu0
    %v1763 = vadd.f32 %v1668, %v1762
    %v1764 = vpop.f32.mrb[0].mxu0
    %v1765 = vpop.f32.mrb[0].mxu0
    %v1766 = vadd.f32 %v1671, %v1765
    %v1767 = vpop.f32.mrb[0].mxu0
    %1768 = vdwg.mxu0
    %v1771 = vunpack.c.l.b16 %v1522
    %v1772 = vunpack.c.l.b16 %v1523
    %v1773 = vpack.c.b16 %v1772, %v1771
    %v1791 = vunpack.c.l.b16 %v1563
    %v1792 = vunpack.c.l.b16 %v1564
    %v1793 = vunpack.c.l.b16 %v1565
    %v1794 = vunpack.c.l.b16 %v1566
    %v1795 = vunpack.c.l.b16 %v1567
    %v1796 = vunpack.c.l.b16 %v1568
    %v1797 = vunpack.c.l.b16 %v1569
    %v1798 = vunpack.c.l.b16 %v1570
    %v1799 = vunpack.c.l.b16 %v1571
    %v1800 = vunpack.c.l.b16 %v1572
    %v1801 = vunpack.c.l.b16 %v1573
    %v1802 = vunpack.c.l.b16 %v1574
    %v1803 = vunpack.c.l.b16 %v1575
    %v1804 = vunpack.c.l.b16 %v1576
    %v1805 = vunpack.c.l.b16 %v1577
    %v1806 = vunpack.c.l.b16 %v1578
    %v1807 = vpack.c.b16 %v1792, %v1791
    %v1808 = vpack.c.b16 %v1794, %v1793
    %v1809 = vpack.c.b16 %v1796, %v1795
    %v1810 = vpack.c.b16 %v1798, %v1797
    %v1811 = vpack.c.b16 %v1800, %v1799
    %v1812 = vpack.c.b16 %v1802, %v1801
    %v1813 = vpack.c.b16 %v1804, %v1803
    %v1814 = vpack.c.b16 %v1806, %v1805
    %1823 = vmatprep.subr.bf16.mxu0 0
    %1824 = vmatpush1.bf16.msra.mxu0 %v1807
    %1825 = vmatprep.subr.bf16.mxu0 0
    %1826 = vmatpush1.bf16.msra.mxu0 %v1808
    %1827 = vmatprep.subr.bf16.mxu0 0
    %1828 = vmatpush1.bf16.msra.mxu0 %v1809
    %1829 = vmatprep.subr.bf16.mxu0 0
    %1830 = vmatpush1.bf16.msra.mxu0 %v1810
    %1831 = vmatprep.subr.bf16.mxu0 0
    %1832 = vmatpush1.bf16.msra.mxu0 %v1811
    %1833 = vmatprep.subr.bf16.mxu0 0
    %1834 = vmatpush1.bf16.msra.mxu0 %v1812
    %1835 = vmatprep.subr.bf16.mxu0 0
    %1836 = vmatpush1.bf16.msra.mxu0 %v1813
    %1837 = vmatprep.subr.bf16.mxu0 0
    %1838 = vmatpush1.bf16.msra.mxu0 %v1814
    %1839 = vmatprep.subr.bf16.mxu0 0
    %1840 = vmatpush1.bf16.msra.mxu0 0
    %1841 = vmatprep.subr.bf16.mxu0 0
    %1842 = vmatpush1.bf16.msra.mxu0 0
    %1843 = vmatprep.subr.bf16.mxu0 0
    %1844 = vmatpush1.bf16.msra.mxu0 0
    %1845 = vmatprep.subr.bf16.mxu0 0
    %1846 = vmatpush1.bf16.msra.mxu0 0
    %1847 = vmatprep.subr.bf16.mxu0 0
    %1848 = vmatpush1.bf16.msra.mxu0 0
    %1849 = vmatprep.subr.bf16.mxu0 0
    %1850 = vmatpush1.bf16.msra.mxu0 0
    %1851 = vmatprep.subr.bf16.mxu0 0
    %1852 = vmatpush1.bf16.msra.mxu0 0
    %1853 = vmatprep.subr.bf16.mxu0 0
    %1854 = vmatpush1.bf16.msra.mxu0 0
    %1855 = vmatprep.mubr.bf16.mxu0 0
    %1856 = vmatmul.mubr.bf16.gmra.mrb[0].mxu0 %v1773
    %v1857 = vpop.f32.mrb[0].mxu0
    %v1858 = vadd.f32 0.0, %v1857
    %v1859 = vpop.f32.mrb[0].mxu0
    %v1860 = vpop.f32.mrb[0].mxu0
    %v1861 = vadd.f32 0.0, %v1860
    %v1862 = vpop.f32.mrb[0].mxu0
    %1863 = vdwg.mxu0
    %v1864 = vadd.f32 %v1763, %v1858
    %v1865 = vadd.f32 %v1766, %v1861
    %1866 = vmatprep.subr.bf16.mxu0 0
    %1867 = vmatpush1.bf16.msra.mxu0 %v1617
    %1868 = vmatprep.subr.bf16.mxu0 0
    %1869 = vmatpush1.bf16.msra.mxu0 %v1618
    %1870 = vmatprep.subr.bf16.mxu0 0
    %1871 = vmatpush1.bf16.msra.mxu0 %v1619
    %1872 = vmatprep.subr.bf16.mxu0 0
    %1873 = vmatpush1.bf16.msra.mxu0 %v1620
    %1874 = vmatprep.subr.bf16.mxu0 0
    %1875 = vmatpush1.bf16.msra.mxu0 %v1621
    %1876 = vmatprep.subr.bf16.mxu0 0
    %1877 = vmatpush1.bf16.msra.mxu0 %v1622
    %1878 = vmatprep.subr.bf16.mxu0 0
    %1879 = vmatpush1.bf16.msra.mxu0 %v1623
    %1880 = vmatprep.subr.bf16.mxu0 0
    %1881 = vmatpush1.bf16.msra.mxu0 %v1624
    %1882 = vmatprep.subr.bf16.mxu0 0
    %1883 = vmatpush1.bf16.msra.mxu0 0
    %1884 = vmatprep.subr.bf16.mxu0 0
    %1885 = vmatpush1.bf16.msra.mxu0 0
    %1886 = vmatprep.subr.bf16.mxu0 0
    %1887 = vmatpush1.bf16.msra.mxu0 0
    %1888 = vmatprep.subr.bf16.mxu0 0
    %1889 = vmatpush1.bf16.msra.mxu0 0
    %1890 = vmatprep.subr.bf16.mxu0 0
    %1891 = vmatpush1.bf16.msra.mxu0 0
    %1892 = vmatprep.subr.bf16.mxu0 0
    %1893 = vmatpush1.bf16.msra.mxu0 0
    %1894 = vmatprep.subr.bf16.mxu0 0
    %1895 = vmatpush1.bf16.msra.mxu0 0
    %1896 = vmatprep.subr.bf16.mxu0 0
    %1897 = vmatpush1.bf16.msra.mxu0 0
    %1898 = vmatprep.mubr.bf16.mxu0 0
    %1899 = vmatmul.mubr.bf16.gmra.mrb[0].mxu0 %v1773
    %v1900 = vpop.f32.mrb[0].mxu0
    %v1901 = vadd.f32 0.0, %v1900
    %v1902 = vpop.f32.mrb[0].mxu0
    %v1903 = vpop.f32.mrb[0].mxu0
    %v1904 = vadd.f32 0.0, %v1903
    %v1905 = vpop.f32.mrb[0].mxu0
    %1906 = vdwg.mxu0
    %1907 = vmatprep.subr.bf16.mxu0 0
    %1908 = vmatpush1.bf16.msra.mxu0 %v1712
    %1909 = vmatprep.subr.bf16.mxu0 0
    %1910 = vmatpush1.bf16.msra.mxu0 %v1713
    %1911 = vmatprep.subr.bf16.mxu0 0
    %1912 = vmatpush1.bf16.msra.mxu0 %v1714
    %1913 = vmatprep.subr.bf16.mxu0 0
    %1914 = vmatpush1.bf16.msra.mxu0 %v1715
    %1915 = vmatprep.subr.bf16.mxu0 0
    %1916 = vmatpush1.bf16.msra.mxu0 %v1716
    %1917 = vmatprep.subr.bf16.mxu0 0
    %1918 = vmatpush1.bf16.msra.mxu0 %v1717
    %1919 = vmatprep.subr.bf16.mxu0 0
    %1920 = vmatpush1.bf16.msra.mxu0 %v1718
    %1921 = vmatprep.subr.bf16.mxu0 0
    %1922 = vmatpush1.bf16.msra.mxu0 %v1719
    %1923 = vmatprep.subr.bf16.mxu0 0
    %1924 = vmatpush1.bf16.msra.mxu0 0
    %1925 = vmatprep.subr.bf16.mxu0 0
    %1926 = vmatpush1.bf16.msra.mxu0 0
    %1927 = vmatprep.subr.bf16.mxu0 0
    %1928 = vmatpush1.bf16.msra.mxu0 0
    %1929 = vmatprep.subr.bf16.mxu0 0
    %1930 = vmatpush1.bf16.msra.mxu0 0
    %1931 = vmatprep.subr.bf16.mxu0 0
    %1932 = vmatpush1.bf16.msra.mxu0 0
    %1933 = vmatprep.subr.bf16.mxu0 0
    %1934 = vmatpush1.bf16.msra.mxu0 0
    %1935 = vmatprep.subr.bf16.mxu0 0
    %1936 = vmatpush1.bf16.msra.mxu0 0
    %1937 = vmatprep.subr.bf16.mxu0 0
    %1938 = vmatpush1.bf16.msra.mxu0 0
    %1939 = vmatprep.mubr.bf16.mxu0 0
    %1940 = vmatmul.mubr.bf16.gmra.mrb[0].mxu0 %v1583
    %v1941 = vpop.f32.mrb[0].mxu0
    %v1942 = vadd.f32 %v1901, %v1941
    %v1943 = vpop.f32.mrb[0].mxu0
    %v1944 = vpop.f32.mrb[0].mxu0
    %v1945 = vadd.f32 %v1904, %v1944
    %v1946 = vpop.f32.mrb[0].mxu0
    %1947 = vdwg.mxu0
    %v1950 = vunpack.c.l.b16 %v1526
    %v1951 = vunpack.c.l.b16 %v1527
    %v1952 = vpack.c.b16 %v1951, %v1950
    %1954 = vmatprep.subr.bf16.mxu0 0
    %1955 = vmatpush1.bf16.msra.mxu0 %v1807
    %1956 = vmatprep.subr.bf16.mxu0 0
    %1957 = vmatpush1.bf16.msra.mxu0 %v1808
    %1958 = vmatprep.subr.bf16.mxu0 0
    %1959 = vmatpush1.bf16.msra.mxu0 %v1809
    %1960 = vmatprep.subr.bf16.mxu0 0
    %1961 = vmatpush1.bf16.msra.mxu0 %v1810
    %1962 = vmatprep.subr.bf16.mxu0 0
    %1963 = vmatpush1.bf16.msra.mxu0 %v1811
    %1964 = vmatprep.subr.bf16.mxu0 0
    %1965 = vmatpush1.bf16.msra.mxu0 %v1812
    %1966 = vmatprep.subr.bf16.mxu0 0
    %1967 = vmatpush1.bf16.msra.mxu0 %v1813
    %1968 = vmatprep.subr.bf16.mxu0 0
    %1969 = vmatpush1.bf16.msra.mxu0 %v1814
    %1970 = vmatprep.subr.bf16.mxu0 0
    %1971 = vmatpush1.bf16.msra.mxu0 0
    %1972 = vmatprep.subr.bf16.mxu0 0
    %1973 = vmatpush1.bf16.msra.mxu0 0
    %1974 = vmatprep.subr.bf16.mxu0 0
    %1975 = vmatpush1.bf16.msra.mxu0 0
    %1976 = vmatprep.subr.bf16.mxu0 0
    %1977 = vmatpush1.bf16.msra.mxu0 0
    %1978 = vmatprep.subr.bf16.mxu0 0
    %1979 = vmatpush1.bf16.msra.mxu0 0
    %1980 = vmatprep.subr.bf16.mxu0 0
    %1981 = vmatpush1.bf16.msra.mxu0 0
    %1982 = vmatprep.subr.bf16.mxu0 0
    %1983 = vmatpush1.bf16.msra.mxu0 0
    %1984 = vmatprep.subr.bf16.mxu0 0
    %1985 = vmatpush1.bf16.msra.mxu0 0
    %1986 = vmatprep.mubr.bf16.mxu0 0
    %1987 = vmatmul.mubr.bf16.gmra.mrb[0].mxu0 %v1952
    %v1988 = vpop.f32.mrb[0].mxu0
    %v1989 = vadd.f32 0.0, %v1988
    %v1990 = vpop.f32.mrb[0].mxu0
    %v1991 = vpop.f32.mrb[0].mxu0
    %v1992 = vadd.f32 0.0, %v1991
    %v1993 = vpop.f32.mrb[0].mxu0
    %1994 = vdwg.mxu0
    %v1995 = vadd.f32 %v1942, %v1989
    %v1996 = vadd.f32 %v1945, %v1992
    %v1997 = vmax.f32 %v1864, %v1995
    %v1998 = vmax.f32 %v1865, %v1996
    %s1999 = scalar_lea.vmem %s2, 2
    %v2000 = vld [vmem:[%s1999] sm:$0x1]
    %v2002 = vlaneseq
    %v2003 = vshrl.u32 %v2002, 7
    %v2004 = vsub.s32 0, %v2003
    %v2005 = vrot.slane %v2000, %v2004
    %v2007 = vadd.f32 %v1997, %v2005
    %v2008 = vadd.f32 %v1998, %v2005
    %v2009 = vmax.f32 %v2007, 0.0
    %v2010 = vmax.f32 %v2008, 0.0
    %2011 = vst [vmem:[#allocation2 + $0x8] sm:$0xff] %v2009
    %2012 = vst [vmem:[#allocation2 + $0x58] sm:$0xff] %v2010
    %2013 = vst [vmem:[#allocation2 + $0x10] sm:$0x1] 0.0
    %2014 = vst [vmem:[#allocation2 + $0x60] sm:$0x1] 0.0
    %v2015 = vld [vmem:[%s244] ss:$2 sm:$0xf]
    %v2016 = vld [vmem:[%s252] ss:$2 sm:$0xf]
    %v2017 = vpack.c.bf16 %v2015, %v2015
    %v2018 = vpack.c.bf16 %v2016, %v2016
    %v2019 = vld [vmem:[%s264] ss:$2 sm:$0xf]
    %v2020 = vld [vmem:[%s272] ss:$2 sm:$0xf]
    %v2021 = vpack.c.bf16 %v2019, %v2019
    %v2022 = vpack.c.bf16 %v2020, %v2020
    %v2023 = vld [vmem:[%s284] ss:$2 sm:$0xf]
    %v2024 = vld [vmem:[%s292] ss:$2 sm:$0xf]
    %v2025 = vpack.c.bf16 %v2023, %v2023
    %v2026 = vpack.c.bf16 %v2024, %v2024
    %v2027 = vld [vmem:[%s304] ss:$2 sm:$0xf]
    %v2028 = vld [vmem:[%s312] ss:$2 sm:$0xf]
    %v2029 = vpack.c.bf16 %v2027, %v2027
    %v2030 = vpack.c.bf16 %v2028, %v2028
    %s2031 = scalar_lea.vmem [#allocation6], 576
    %v2032 = vld [vmem:[%s2031] sm:$0xf]
    %v2033 = vld [vmem:[%s2031 + $0x4] sm:$0xf]
    %v2034 = vld [vmem:[%s2031 + $0x8] sm:$0xf]
    %v2035 = vld [vmem:[%s2031 + $0xc] sm:$0xf]
    %v2036 = vld [vmem:[%s2031 + $0x10] sm:$0xf]
    %v2037 = vld [vmem:[%s2031 + $0x14] sm:$0xf]
    %v2038 = vld [vmem:[%s2031 + $0x18] sm:$0xf]
    %v2039 = vld [vmem:[%s2031 + $0x1c] sm:$0xf]
    %v2040 = vld [vmem:[%s2031 + $0x20] sm:$0xf]
    %v2041 = vld [vmem:[%s2031 + $0x24] sm:$0xf]
    %v2042 = vld [vmem:[%s2031 + $0x28] sm:$0xf]
    %v2043 = vld [vmem:[%s2031 + $0x2c] sm:$0xf]
    %v2044 = vld [vmem:[%s2031 + $0x30] sm:$0xf]
    %v2045 = vld [vmem:[%s2031 + $0x34] sm:$0xf]
    %v2046 = vld [vmem:[%s2031 + $0x38] sm:$0xf]
    %v2047 = vld [vmem:[%s2031 + $0x3c] sm:$0xf]
    %s2048 = scalar_lea.vmem [#allocation6], 640
    %v2049 = vld [vmem:[%s2048] sm:$0xf]
    %v2050 = vld [vmem:[%s2048 + $0x4] sm:$0xf]
    %v2051 = vld [vmem:[%s2048 + $0x8] sm:$0xf]
    %v2052 = vld [vmem:[%s2048 + $0xc] sm:$0xf]
    %v2053 = vld [vmem:[%s2048 + $0x10] sm:$0xf]
    %v2054 = vld [vmem:[%s2048 + $0x14] sm:$0xf]
    %v2055 = vld [vmem:[%s2048 + $0x18] sm:$0xf]
    %v2056 = vld [vmem:[%s2048 + $0x1c] sm:$0xf]
    %v2057 = vld [vmem:[%s2048 + $0x20] sm:$0xf]
    %v2058 = vld [vmem:[%s2048 + $0x24] sm:$0xf]
    %v2059 = vld [vmem:[%s2048 + $0x28] sm:$0xf]
    %v2060 = vld [vmem:[%s2048 + $0x2c] sm:$0xf]
    %v2061 = vld [vmem:[%s2048 + $0x30] sm:$0xf]
    %v2062 = vld [vmem:[%s2048 + $0x34] sm:$0xf]
    %v2063 = vld [vmem:[%s2048 + $0x38] sm:$0xf]
    %v2064 = vld [vmem:[%s2048 + $0x3c] sm:$0xf]
    %s2065 = scalar_lea.vmem [#allocation6], 704
    %v2066 = vld [vmem:[%s2065] sm:$0xf]
    %v2067 = vld [vmem:[%s2065 + $0x4] sm:$0xf]
    %v2068 = vld [vmem:[%s2065 + $0x8] sm:$0xf]
    %v2069 = vld [vmem:[%s2065 + $0xc] sm:$0xf]
    %v2070 = vld [vmem:[%s2065 + $0x10] sm:$0xf]
    %v2071 = vld [vmem:[%s2065 + $0x14] sm:$0xf]
    %v2072 = vld [vmem:[%s2065 + $0x18] sm:$0xf]
    %v2073 = vld [vmem:[%s2065 + $0x1c] sm:$0xf]
    %v2074 = vld [vmem:[%s2065 + $0x20] sm:$0xf]
    %v2075 = vld [vmem:[%s2065 + $0x24] sm:$0xf]
    %v2076 = vld [vmem:[%s2065 + $0x28] sm:$0xf]
    %v2077 = vld [vmem:[%s2065 + $0x2c] sm:$0xf]
    %v2078 = vld [vmem:[%s2065 + $0x30] sm:$0xf]
    %v2079 = vld [vmem:[%s2065 + $0x34] sm:$0xf]
    %v2080 = vld [vmem:[%s2065 + $0x38] sm:$0xf]
    %v2081 = vld [vmem:[%s2065 + $0x3c] sm:$0xf]
    %v2084 = vcombine.low %v2021, %v2022
    %v2086 = vunpack.c.l.s4 1983009808
    %v2087 = vunpack.c.0.s8 %v2086
    %v2088 = vlaneseq
    %v2089 = vshrl.u32 %v2088, 7
    %v2090 = vsub.s32 %v2087, %v2089
    %v2091 = vrot.slane %v2084, %v2090
    %v2109 = vunpack.c.l.b16 %v2049
    %v2110 = vunpack.c.l.b16 %v2050
    %v2111 = vunpack.c.l.b16 %v2051
    %v2112 = vunpack.c.l.b16 %v2052
    %v2113 = vunpack.c.l.b16 %v2053
    %v2114 = vunpack.c.l.b16 %v2054
    %v2115 = vunpack.c.l.b16 %v2055
    %v2116 = vunpack.c.l.b16 %v2056
    %v2117 = vunpack.c.l.b16 %v2057
    %v2118 = vunpack.c.l.b16 %v2058
    %v2119 = vunpack.c.l.b16 %v2059
    %v2120 = vunpack.c.l.b16 %v2060
    %v2121 = vunpack.c.l.b16 %v2061
    %v2122 = vunpack.c.l.b16 %v2062
    %v2123 = vunpack.c.l.b16 %v2063
    %v2124 = vunpack.c.l.b16 %v2064
    %v2125 = vpack.c.b16 %v2110, %v2109
    %v2126 = vpack.c.b16 %v2112, %v2111
    %v2127 = vpack.c.b16 %v2114, %v2113
    %v2128 = vpack.c.b16 %v2116, %v2115
    %v2129 = vpack.c.b16 %v2118, %v2117
    %v2130 = vpack.c.b16 %v2120, %v2119
    %v2131 = vpack.c.b16 %v2122, %v2121
    %v2132 = vpack.c.b16 %v2124, %v2123
    %2141 = vmatprep.subr.bf16.mxu0 0
    %2142 = vmatpush1.bf16.msra.mxu0 %v2125
    %2143 = vmatprep.subr.bf16.mxu0 0
    %2144 = vmatpush1.bf16.msra.mxu0 %v2126
    %2145 = vmatprep.subr.bf16.mxu0 0
    %2146 = vmatpush1.bf16.msra.mxu0 %v2127
    %2147 = vmatprep.subr.bf16.mxu0 0
    %2148 = vmatpush1.bf16.msra.mxu0 %v2128
    %2149 = vmatprep.subr.bf16.mxu0 0
    %2150 = vmatpush1.bf16.msra.mxu0 %v2129
    %2151 = vmatprep.subr.bf16.mxu0 0
    %2152 = vmatpush1.bf16.msra.mxu0 %v2130
    %2153 = vmatprep.subr.bf16.mxu0 0
    %2154 = vmatpush1.bf16.msra.mxu0 %v2131
    %2155 = vmatprep.subr.bf16.mxu0 0
    %2156 = vmatpush1.bf16.msra.mxu0 %v2132
    %2157 = vmatprep.subr.bf16.mxu0 0
    %2158 = vmatpush1.bf16.msra.mxu0 0
    %2159 = vmatprep.subr.bf16.mxu0 0
    %2160 = vmatpush1.bf16.msra.mxu0 0
    %2161 = vmatprep.subr.bf16.mxu0 0
    %2162 = vmatpush1.bf16.msra.mxu0 0
    %2163 = vmatprep.subr.bf16.mxu0 0
    %2164 = vmatpush1.bf16.msra.mxu0 0
    %2165 = vmatprep.subr.bf16.mxu0 0
    %2166 = vmatpush1.bf16.msra.mxu0 0
    %2167 = vmatprep.subr.bf16.mxu0 0
    %2168 = vmatpush1.bf16.msra.mxu0 0
    %2169 = vmatprep.subr.bf16.mxu0 0
    %2170 = vmatpush1.bf16.msra.mxu0 0
    %2171 = vmatprep.subr.bf16.mxu0 0
    %2172 = vmatpush1.bf16.msra.mxu0 0
    %2173 = vmatprep.mubr.bf16.mxu0 0
    %2174 = vmatmul.mubr.bf16.gmra.mrb[0].mxu0 %v2091
    %v2175 = vpop.f32.mrb[0].mxu0
    %v2176 = vadd.f32 0.0, %v2175
    %v2177 = vpop.f32.mrb[0].mxu0
    %v2178 = vpop.f32.mrb[0].mxu0
    %v2179 = vpop.f32.mrb[0].mxu0
    %2180 = vdwg.mxu0
    %v2183 = vcombine.low %v2017, %v2018
    %v2185 = vunpack.c.l.s4 1983009808
    %v2186 = vunpack.c.0.s8 %v2185
    %v2187 = vlaneseq
    %v2188 = vshrl.u32 %v2187, 7
    %v2189 = vsub.s32 %v2186, %v2188
    %v2190 = vrot.slane %v2183, %v2189
    %v2208 = vunpack.c.l.b16 %v2032
    %v2209 = vunpack.c.l.b16 %v2033
    %v2210 = vunpack.c.l.b16 %v2034
    %v2211 = vunpack.c.l.b16 %v2035
    %v2212 = vunpack.c.l.b16 %v2036
    %v2213 = vunpack.c.l.b16 %v2037
    %v2214 = vunpack.c.l.b16 %v2038
    %v2215 = vunpack.c.l.b16 %v2039
    %v2216 = vunpack.c.l.b16 %v2040
    %v2217 = vunpack.c.l.b16 %v2041
    %v2218 = vunpack.c.l.b16 %v2042
    %v2219 = vunpack.c.l.b16 %v2043
    %v2220 = vunpack.c.l.b16 %v2044
    %v2221 = vunpack.c.l.b16 %v2045
    %v2222 = vunpack.c.l.b16 %v2046
    %v2223 = vunpack.c.l.b16 %v2047
    %v2224 = vpack.c.b16 %v2209, %v2208
    %v2225 = vpack.c.b16 %v2211, %v2210
    %v2226 = vpack.c.b16 %v2213, %v2212
    %v2227 = vpack.c.b16 %v2215, %v2214
    %v2228 = vpack.c.b16 %v2217, %v2216
    %v2229 = vpack.c.b16 %v2219, %v2218
    %v2230 = vpack.c.b16 %v2221, %v2220
    %v2231 = vpack.c.b16 %v2223, %v2222
    %2240 = vmatprep.subr.bf16.mxu0 0
    %2241 = vmatpush1.bf16.msra.mxu0 %v2224
    %2242 = vmatprep.subr.bf16.mxu0 0
    %2243 = vmatpush1.bf16.msra.mxu0 %v2225
    %2244 = vmatprep.subr.bf16.mxu0 0
    %2245 = vmatpush1.bf16.msra.mxu0 %v2226
    %2246 = vmatprep.subr.bf16.mxu0 0
    %2247 = vmatpush1.bf16.msra.mxu0 %v2227
    %2248 = vmatprep.subr.bf16.mxu0 0
    %2249 = vmatpush1.bf16.msra.mxu0 %v2228
    %2250 = vmatprep.subr.bf16.mxu0 0
    %2251 = vmatpush1.bf16.msra.mxu0 %v2229
    %2252 = vmatprep.subr.bf16.mxu0 0
    %2253 = vmatpush1.bf16.msra.mxu0 %v2230
    %2254 = vmatprep.subr.bf16.mxu0 0
    %2255 = vmatpush1.bf16.msra.mxu0 %v2231
    %2256 = vmatprep.subr.bf16.mxu0 0
    %2257 = vmatpush1.bf16.msra.mxu0 0
    %2258 = vmatprep.subr.bf16.mxu0 0
    %2259 = vmatpush1.bf16.msra.mxu0 0
    %2260 = vmatprep.subr.bf16.mxu0 0
    %2261 = vmatpush1.bf16.msra.mxu0 0
    %2262 = vmatprep.subr.bf16.mxu0 0
    %2263 = vmatpush1.bf16.msra.mxu0 0
    %2264 = vmatprep.subr.bf16.mxu0 0
    %2265 = vmatpush1.bf16.msra.mxu0 0
    %2266 = vmatprep.subr.bf16.mxu0 0
    %2267 = vmatpush1.bf16.msra.mxu0 0
    %2268 = vmatprep.subr.bf16.mxu0 0
    %2269 = vmatpush1.bf16.msra.mxu0 0
    %2270 = vmatprep.subr.bf16.mxu0 0
    %2271 = vmatpush1.bf16.msra.mxu0 0
    %2272 = vmatprep.mubr.bf16.mxu0 0
    %2273 = vmatmul.mubr.bf16.gmra.mrb[0].mxu0 %v2190
    %v2274 = vpop.f32.mrb[0].mxu0
    %v2275 = vadd.f32 %v2176, %v2274
    %v2276 = vpop.f32.mrb[0].mxu0
    %v2277 = vpop.f32.mrb[0].mxu0
    %v2278 = vpop.f32.mrb[0].mxu0
    %2279 = vdwg.mxu0
    %v2281 = vcombine.high %v2275, %v2275
    %v2285 = vcombine.low %v2025, %v2026
    %v2287 = vunpack.c.l.s4 1983009808
    %v2288 = vunpack.c.0.s8 %v2287
    %v2289 = vlaneseq
    %v2290 = vshrl.u32 %v2289, 7
    %v2291 = vsub.s32 %v2288, %v2290
    %v2292 = vrot.slane %v2285, %v2291
    %v2310 = vunpack.c.l.b16 %v2066
    %v2311 = vunpack.c.l.b16 %v2067
    %v2312 = vunpack.c.l.b16 %v2068
    %v2313 = vunpack.c.l.b16 %v2069
    %v2314 = vunpack.c.l.b16 %v2070
    %v2315 = vunpack.c.l.b16 %v2071
    %v2316 = vunpack.c.l.b16 %v2072
    %v2317 = vunpack.c.l.b16 %v2073
    %v2318 = vunpack.c.l.b16 %v2074
    %v2319 = vunpack.c.l.b16 %v2075
    %v2320 = vunpack.c.l.b16 %v2076
    %v2321 = vunpack.c.l.b16 %v2077
    %v2322 = vunpack.c.l.b16 %v2078
    %v2323 = vunpack.c.l.b16 %v2079
    %v2324 = vunpack.c.l.b16 %v2080
    %v2325 = vunpack.c.l.b16 %v2081
    %v2326 = vpack.c.b16 %v2311, %v2310
    %v2327 = vpack.c.b16 %v2313, %v2312
    %v2328 = vpack.c.b16 %v2315, %v2314
    %v2329 = vpack.c.b16 %v2317, %v2316
    %v2330 = vpack.c.b16 %v2319, %v2318
    %v2331 = vpack.c.b16 %v2321, %v2320
    %v2332 = vpack.c.b16 %v2323, %v2322
    %v2333 = vpack.c.b16 %v2325, %v2324
    %2342 = vmatprep.subr.bf16.mxu0 0
    %2343 = vmatpush1.bf16.msra.mxu0 %v2326
    %2344 = vmatprep.subr.bf16.mxu0 0
    %2345 = vmatpush1.bf16.msra.mxu0 %v2327
    %2346 = vmatprep.subr.bf16.mxu0 0
    %2347 = vmatpush1.bf16.msra.mxu0 %v2328
    %2348 = vmatprep.subr.bf16.mxu0 0
    %2349 = vmatpush1.bf16.msra.mxu0 %v2329
    %2350 = vmatprep.subr.bf16.mxu0 0
    %2351 = vmatpush1.bf16.msra.mxu0 %v2330
    %2352 = vmatprep.subr.bf16.mxu0 0
    %2353 = vmatpush1.bf16.msra.mxu0 %v2331
    %2354 = vmatprep.subr.bf16.mxu0 0
    %2355 = vmatpush1.bf16.msra.mxu0 %v2332
    %2356 = vmatprep.subr.bf16.mxu0 0
    %2357 = vmatpush1.bf16.msra.mxu0 %v2333
    %2358 = vmatprep.subr.bf16.mxu0 0
    %2359 = vmatpush1.bf16.msra.mxu0 0
    %2360 = vmatprep.subr.bf16.mxu0 0
    %2361 = vmatpush1.bf16.msra.mxu0 0
    %2362 = vmatprep.subr.bf16.mxu0 0
    %2363 = vmatpush1.bf16.msra.mxu0 0
    %2364 = vmatprep.subr.bf16.mxu0 0
    %2365 = vmatpush1.bf16.msra.mxu0 0
    %2366 = vmatprep.subr.bf16.mxu0 0
    %2367 = vmatpush1.bf16.msra.mxu0 0
    %2368 = vmatprep.subr.bf16.mxu0 0
    %2369 = vmatpush1.bf16.msra.mxu0 0
    %2370 = vmatprep.subr.bf16.mxu0 0
    %2371 = vmatpush1.bf16.msra.mxu0 0
    %2372 = vmatprep.subr.bf16.mxu0 0
    %2373 = vmatpush1.bf16.msra.mxu0 0
    %2374 = vmatprep.mubr.bf16.mxu0 0
    %2375 = vmatmul.mubr.bf16.gmra.mrb[0].mxu0 %v2292
    %v2376 = vpop.f32.mrb[0].mxu0
    %v2377 = vadd.f32 0.0, %v2376
    %v2378 = vpop.f32.mrb[0].mxu0
    %v2379 = vpop.f32.mrb[0].mxu0
    %v2380 = vpop.f32.mrb[0].mxu0
    %2381 = vdwg.mxu0
    %v2383 = vcombine.high %v2377, %v2377
    %v2385 = vadd.f32 %v2275, %v2377
    %v2386 = vadd.f32 %v2281, %v2383
    %2387 = vmatprep.subr.bf16.mxu0 0
    %2388 = vmatpush1.bf16.msra.mxu0 %v2125
    %2389 = vmatprep.subr.bf16.mxu0 0
    %2390 = vmatpush1.bf16.msra.mxu0 %v2126
    %2391 = vmatprep.subr.bf16.mxu0 0
    %2392 = vmatpush1.bf16.msra.mxu0 %v2127
    %2393 = vmatprep.subr.bf16.mxu0 0
    %2394 = vmatpush1.bf16.msra.mxu0 %v2128
    %2395 = vmatprep.subr.bf16.mxu0 0
    %2396 = vmatpush1.bf16.msra.mxu0 %v2129
    %2397 = vmatprep.subr.bf16.mxu0 0
    %2398 = vmatpush1.bf16.msra.mxu0 %v2130
    %2399 = vmatprep.subr.bf16.mxu0 0
    %2400 = vmatpush1.bf16.msra.mxu0 %v2131
    %2401 = vmatprep.subr.bf16.mxu0 0
    %2402 = vmatpush1.bf16.msra.mxu0 %v2132
    %2403 = vmatprep.subr.bf16.mxu0 0
    %2404 = vmatpush1.bf16.msra.mxu0 0
    %2405 = vmatprep.subr.bf16.mxu0 0
    %2406 = vmatpush1.bf16.msra.mxu0 0
    %2407 = vmatprep.subr.bf16.mxu0 0
    %2408 = vmatpush1.bf16.msra.mxu0 0
    %2409 = vmatprep.subr.bf16.mxu0 0
    %2410 = vmatpush1.bf16.msra.mxu0 0
    %2411 = vmatprep.subr.bf16.mxu0 0
    %2412 = vmatpush1.bf16.msra.mxu0 0
    %2413 = vmatprep.subr.bf16.mxu0 0
    %2414 = vmatpush1.bf16.msra.mxu0 0
    %2415 = vmatprep.subr.bf16.mxu0 0
    %2416 = vmatpush1.bf16.msra.mxu0 0
    %2417 = vmatprep.subr.bf16.mxu0 0
    %2418 = vmatpush1.bf16.msra.mxu0 0
    %2419 = vmatprep.mubr.bf16.mxu0 0
    %2420 = vmatmul.mubr.bf16.gmra.mrb[0].mxu0 %v2292
    %v2421 = vpop.f32.mrb[0].mxu0
    %v2422 = vadd.f32 0.0, %v2421
    %v2423 = vpop.f32.mrb[0].mxu0
    %v2424 = vpop.f32.mrb[0].mxu0
    %v2425 = vpop.f32.mrb[0].mxu0
    %2426 = vdwg.mxu0
    %2427 = vmatprep.subr.bf16.mxu0 0
    %2428 = vmatpush1.bf16.msra.mxu0 %v2224
    %2429 = vmatprep.subr.bf16.mxu0 0
    %2430 = vmatpush1.bf16.msra.mxu0 %v2225
    %2431 = vmatprep.subr.bf16.mxu0 0
    %2432 = vmatpush1.bf16.msra.mxu0 %v2226
    %2433 = vmatprep.subr.bf16.mxu0 0
    %2434 = vmatpush1.bf16.msra.mxu0 %v2227
    %2435 = vmatprep.subr.bf16.mxu0 0
    %2436 = vmatpush1.bf16.msra.mxu0 %v2228
    %2437 = vmatprep.subr.bf16.mxu0 0
    %2438 = vmatpush1.bf16.msra.mxu0 %v2229
    %2439 = vmatprep.subr.bf16.mxu0 0
    %2440 = vmatpush1.bf16.msra.mxu0 %v2230
    %2441 = vmatprep.subr.bf16.mxu0 0
    %2442 = vmatpush1.bf16.msra.mxu0 %v2231
    %2443 = vmatprep.subr.bf16.mxu0 0
    %2444 = vmatpush1.bf16.msra.mxu0 0
    %2445 = vmatprep.subr.bf16.mxu0 0
    %2446 = vmatpush1.bf16.msra.mxu0 0
    %2447 = vmatprep.subr.bf16.mxu0 0
    %2448 = vmatpush1.bf16.msra.mxu0 0
    %2449 = vmatprep.subr.bf16.mxu0 0
    %2450 = vmatpush1.bf16.msra.mxu0 0
    %2451 = vmatprep.subr.bf16.mxu0 0
    %2452 = vmatpush1.bf16.msra.mxu0 0
    %2453 = vmatprep.subr.bf16.mxu0 0
    %2454 = vmatpush1.bf16.msra.mxu0 0
    %2455 = vmatprep.subr.bf16.mxu0 0
    %2456 = vmatpush1.bf16.msra.mxu0 0
    %2457 = vmatprep.subr.bf16.mxu0 0
    %2458 = vmatpush1.bf16.msra.mxu0 0
    %2459 = vmatprep.mubr.bf16.mxu0 0
    %2460 = vmatmul.mubr.bf16.gmra.mrb[0].mxu0 %v2091
    %v2461 = vpop.f32.mrb[0].mxu0
    %v2462 = vadd.f32 %v2422, %v2461
    %v2463 = vpop.f32.mrb[0].mxu0
    %v2464 = vpop.f32.mrb[0].mxu0
    %v2465 = vpop.f32.mrb[0].mxu0
    %2466 = vdwg.mxu0
    %v2468 = vcombine.high %v2462, %v2462
    %v2472 = vcombine.low %v2029, %v2030
    %v2474 = vunpack.c.l.s4 1983009808
    %v2475 = vunpack.c.0.s8 %v2474
    %v2476 = vlaneseq
    %v2477 = vshrl.u32 %v2476, 7
    %v2478 = vsub.s32 %v2475, %v2477
    %v2479 = vrot.slane %v2472, %v2478
    %2481 = vmatprep.subr.bf16.mxu0 0
    %2482 = vmatpush1.bf16.msra.mxu0 %v2326
    %2483 = vmatprep.subr.bf16.mxu0 0
    %2484 = vmatpush1.bf16.msra.mxu0 %v2327
    %2485 = vmatprep.subr.bf16.mxu0 0
    %2486 = vmatpush1.bf16.msra.mxu0 %v2328
    %2487 = vmatprep.subr.bf16.mxu0 0
    %2488 = vmatpush1.bf16.msra.mxu0 %v2329
    %2489 = vmatprep.subr.bf16.mxu0 0
    %2490 = vmatpush1.bf16.msra.mxu0 %v2330
    %2491 = vmatprep.subr.bf16.mxu0 0
    %2492 = vmatpush1.bf16.msra.mxu0 %v2331
    %2493 = vmatprep.subr.bf16.mxu0 0
    %2494 = vmatpush1.bf16.msra.mxu0 %v2332
    %2495 = vmatprep.subr.bf16.mxu0 0
    %2496 = vmatpush1.bf16.msra.mxu0 %v2333
    %2497 = vmatprep.subr.bf16.mxu0 0
    %2498 = vmatpush1.bf16.msra.mxu0 0
    %2499 = vmatprep.subr.bf16.mxu0 0
    %2500 = vmatpush1.bf16.msra.mxu0 0
    %2501 = vmatprep.subr.bf16.mxu0 0
    %2502 = vmatpush1.bf16.msra.mxu0 0
    %2503 = vmatprep.subr.bf16.mxu0 0
    %2504 = vmatpush1.bf16.msra.mxu0 0
    %2505 = vmatprep.subr.bf16.mxu0 0
    %2506 = vmatpush1.bf16.msra.mxu0 0
    %2507 = vmatprep.subr.bf16.mxu0 0
    %2508 = vmatpush1.bf16.msra.mxu0 0
    %2509 = vmatprep.subr.bf16.mxu0 0
    %2510 = vmatpush1.bf16.msra.mxu0 0
    %2511 = vmatprep.subr.bf16.mxu0 0
    %2512 = vmatpush1.bf16.msra.mxu0 0
    %2513 = vmatprep.mubr.bf16.mxu0 0
    %2514 = vmatmul.mubr.bf16.gmra.mrb[0].mxu0 %v2479
    %v2515 = vpop.f32.mrb[0].mxu0
    %v2516 = vadd.f32 0.0, %v2515
    %v2517 = vpop.f32.mrb[0].mxu0
    %v2518 = vpop.f32.mrb[0].mxu0
    %v2519 = vpop.f32.mrb[0].mxu0
    %2520 = vdwg.mxu0
    %v2522 = vcombine.high %v2516, %v2516
    %v2524 = vadd.f32 %v2462, %v2516
    %v2525 = vadd.f32 %v2468, %v2522
    %v2526 = vmax.f32 %v2385, %v2524
    %v2527 = vmax.f32 %v2386, %v2525
    %s2528 = scalar_lea.vmem %s2, 3
    %v2529 = vld [vmem:[%s2528] sm:$0x1]
    %v2531 = vlaneseq
    %v2532 = vshrl.u32 %v2531, 7
    %v2533 = vsub.s32 0, %v2532
    %v2534 = vrot.slane %v2529, %v2533
    %v2536 = vadd.f32 %v2526, %v2534
    %v2537 = vadd.f32 %v2527, %v2534
    %v2538 = vmax.f32 %v2536, 0.0
    %v2539 = vmax.f32 %v2537, 0.0
    %2540 = vst [vmem:[#allocation2 + $0x8] sm:$0xf] %v2538
    %2541 = vst [vmem:[#allocation2 + $0x58] sm:$0xf] %v2539
    %2542 = vst [vmem:[#allocation2 + $0xc] sm:$0x1] 0.0
    %2543 = vst [vmem:[#allocation2 + $0x5c] sm:$0x1] 0.0
    %v2544 = vld [vmem:[%s244] ss:$2 sm:$0x3]
    %v2545 = vld [vmem:[%s252] ss:$2 sm:$0x3]
    %v2546 = vpack.c.bf16 %v2544, %v2544
    %v2547 = vpack.c.bf16 %v2545, %v2545
    %v2548 = vld [vmem:[%s264] ss:$2 sm:$0x3]
    %v2549 = vld [vmem:[%s272] ss:$2 sm:$0x3]
    %v2550 = vpack.c.bf16 %v2548, %v2548
    %v2551 = vpack.c.bf16 %v2549, %v2549
    %v2552 = vld [vmem:[%s284] ss:$2 sm:$0x3]
    %v2553 = vld [vmem:[%s292] ss:$2 sm:$0x3]
    %v2554 = vpack.c.bf16 %v2552, %v2552
    %v2555 = vpack.c.bf16 %v2553, %v2553
    %v2556 = vld [vmem:[%s304] ss:$2 sm:$0x3]
    %v2557 = vld [vmem:[%s312] ss:$2 sm:$0x3]
    %v2558 = vpack.c.bf16 %v2556, %v2556
    %v2559 = vpack.c.bf16 %v2557, %v2557
    %s2560 = scalar_lea.vmem [#allocation6], 768
    %v2561 = vld [vmem:[%s2560] sm:$0xf]
    %v2562 = vld [vmem:[%s2560 + $0x4] sm:$0xf]
    %v2563 = vld [vmem:[%s2560 + $0x8] sm:$0xf]
    %v2564 = vld [vmem:[%s2560 + $0xc] sm:$0xf]
    %v2565 = vld [vmem:[%s2560 + $0x10] sm:$0xf]
    %v2566 = vld [vmem:[%s2560 + $0x14] sm:$0xf]
    %v2567 = vld [vmem:[%s2560 + $0x18] sm:$0xf]
    %v2568 = vld [vmem:[%s2560 + $0x1c] sm:$0xf]
    %v2569 = vld [vmem:[%s2560 + $0x20] sm:$0xf]
    %v2570 = vld [vmem:[%s2560 + $0x24] sm:$0xf]
    %v2571 = vld [vmem:[%s2560 + $0x28] sm:$0xf]
    %v2572 = vld [vmem:[%s2560 + $0x2c] sm:$0xf]
    %v2573 = vld [vmem:[%s2560 + $0x30] sm:$0xf]
    %v2574 = vld [vmem:[%s2560 + $0x34] sm:$0xf]
    %v2575 = vld [vmem:[%s2560 + $0x38] sm:$0xf]
    %v2576 = vld [vmem:[%s2560 + $0x3c] sm:$0xf]
    %s2577 = scalar_lea.vmem [#allocation6], 832
    %v2578 = vld [vmem:[%s2577] sm:$0xf]
    %v2579 = vld [vmem:[%s2577 + $0x4] sm:$0xf]
    %v2580 = vld [vmem:[%s2577 + $0x8] sm:$0xf]
    %v2581 = vld [vmem:[%s2577 + $0xc] sm:$0xf]
    %v2582 = vld [vmem:[%s2577 + $0x10] sm:$0xf]
    %v2583 = vld [vmem:[%s2577 + $0x14] sm:$0xf]
    %v2584 = vld [vmem:[%s2577 + $0x18] sm:$0xf]
    %v2585 = vld [vmem:[%s2577 + $0x1c] sm:$0xf]
    %v2586 = vld [vmem:[%s2577 + $0x20] sm:$0xf]
    %v2587 = vld [vmem:[%s2577 + $0x24] sm:$0xf]
    %v2588 = vld [vmem:[%s2577 + $0x28] sm:$0xf]
    %v2589 = vld [vmem:[%s2577 + $0x2c] sm:$0xf]
    %v2590 = vld [vmem:[%s2577 + $0x30] sm:$0xf]
    %v2591 = vld [vmem:[%s2577 + $0x34] sm:$0xf]
    %v2592 = vld [vmem:[%s2577 + $0x38] sm:$0xf]
    %v2593 = vld [vmem:[%s2577 + $0x3c] sm:$0xf]
    %s2594 = scalar_lea.vmem [#allocation6], 896
    %v2595 = vld [vmem:[%s2594] sm:$0xf]
    %v2596 = vld [vmem:[%s2594 + $0x4] sm:$0xf]
    %v2597 = vld [vmem:[%s2594 + $0x8] sm:$0xf]
    %v2598 = vld [vmem:[%s2594 + $0xc] sm:$0xf]
    %v2599 = vld [vmem:[%s2594 + $0x10] sm:$0xf]
    %v2600 = vld [vmem:[%s2594 + $0x14] sm:$0xf]
    %v2601 = vld [vmem:[%s2594 + $0x18] sm:$0xf]
    %v2602 = vld [vmem:[%s2594 + $0x1c] sm:$0xf]
    %v2603 = vld [vmem:[%s2594 + $0x20] sm:$0xf]
    %v2604 = vld [vmem:[%s2594 + $0x24] sm:$0xf]
    %v2605 = vld [vmem:[%s2594 + $0x28] sm:$0xf]
    %v2606 = vld [vmem:[%s2594 + $0x2c] sm:$0xf]
    %v2607 = vld [vmem:[%s2594 + $0x30] sm:$0xf]
    %v2608 = vld [vmem:[%s2594 + $0x34] sm:$0xf]
    %v2609 = vld [vmem:[%s2594 + $0x38] sm:$0xf]
    %v2610 = vld [vmem:[%s2594 + $0x3c] sm:$0xf]
    %v2613 = vcombine.low %v2550, %v2551
    %v2615 = vunpack.c.l.s4 1966171168
    %v2616 = vunpack.c.0.s8 %v2615
    %v2617 = vlaneseq
    %v2618 = vshrl.u32 %v2617, 7
    %v2619 = vsub.s32 %v2616, %v2618
    %v2620 = vrot.slane %v2613, %v2619
    %v2622 = vunpack.c.l.s4 1966171168
    %v2623 = vunpack.c.0.s8 %v2622
    %v2624 = vlaneseq
    %v2625 = vshrl.u32 %v2624, 7
    %v2626 = vsub.s32 %v2623, %v2625
    %v2627 = vrot.slane %v2620, %v2626
    %v2645 = vunpack.c.l.b16 %v2578
    %v2646 = vunpack.c.l.b16 %v2579
    %v2647 = vunpack.c.l.b16 %v2580
    %v2648 = vunpack.c.l.b16 %v2581
    %v2649 = vunpack.c.l.b16 %v2582
    %v2650 = vunpack.c.l.b16 %v2583
    %v2651 = vunpack.c.l.b16 %v2584
    %v2652 = vunpack.c.l.b16 %v2585
    %v2653 = vunpack.c.l.b16 %v2586
    %v2654 = vunpack.c.l.b16 %v2587
    %v2655 = vunpack.c.l.b16 %v2588
    %v2656 = vunpack.c.l.b16 %v2589
    %v2657 = vunpack.c.l.b16 %v2590
    %v2658 = vunpack.c.l.b16 %v2591
    %v2659 = vunpack.c.l.b16 %v2592
    %v2660 = vunpack.c.l.b16 %v2593
    %v2661 = vpack.c.b16 %v2646, %v2645
    %v2662 = vpack.c.b16 %v2648, %v2647
    %v2663 = vpack.c.b16 %v2650, %v2649
    %v2664 = vpack.c.b16 %v2652, %v2651
    %v2665 = vpack.c.b16 %v2654, %v2653
    %v2666 = vpack.c.b16 %v2656, %v2655
    %v2667 = vpack.c.b16 %v2658, %v2657
    %v2668 = vpack.c.b16 %v2660, %v2659
    %2677 = vmatprep.subr.bf16.mxu0 0
    %2678 = vmatpush1.bf16.msra.mxu0 %v2661
    %2679 = vmatprep.subr.bf16.mxu0 0
    %2680 = vmatpush1.bf16.msra.mxu0 %v2662
    %2681 = vmatprep.subr.bf16.mxu0 0
    %2682 = vmatpush1.bf16.msra.mxu0 %v2663
    %2683 = vmatprep.subr.bf16.mxu0 0
    %2684 = vmatpush1.bf16.msra.mxu0 %v2664
    %2685 = vmatprep.subr.bf16.mxu0 0
    %2686 = vmatpush1.bf16.msra.mxu0 %v2665
    %2687 = vmatprep.subr.bf16.mxu0 0
    %2688 = vmatpush1.bf16.msra.mxu0 %v2666
    %2689 = vmatprep.subr.bf16.mxu0 0
    %2690 = vmatpush1.bf16.msra.mxu0 %v2667
    %2691 = vmatprep.subr.bf16.mxu0 0
    %2692 = vmatpush1.bf16.msra.mxu0 %v2668
    %2693 = vmatprep.subr.bf16.mxu0 0
    %2694 = vmatpush1.bf16.msra.mxu0 0
    %2695 = vmatprep.subr.bf16.mxu0 0
    %2696 = vmatpush1.bf16.msra.mxu0 0
    %2697 = vmatprep.subr.bf16.mxu0 0
    %2698 = vmatpush1.bf16.msra.mxu0 0
    %2699 = vmatprep.subr.bf16.mxu0 0
    %2700 = vmatpush1.bf16.msra.mxu0 0
    %2701 = vmatprep.subr.bf16.mxu0 0
    %2702 = vmatpush1.bf16.msra.mxu0 0
    %2703 = vmatprep.subr.bf16.mxu0 0
    %2704 = vmatpush1.bf16.msra.mxu0 0
    %2705 = vmatprep.subr.bf16.mxu0 0
    %2706 = vmatpush1.bf16.msra.mxu0 0
    %2707 = vmatprep.subr.bf16.mxu0 0
    %2708 = vmatpush1.bf16.msra.mxu0 0
    %2709 = vmatprep.mubr.bf16.mxu0 0
    %2710 = vmatmul.mubr.bf16.gmra.mrb[0].mxu0 %v2627
    %v2711 = vpop.f32.mrb[0].mxu0
    %v2712 = vadd.f32 0.0, %v2711
    %v2713 = vpop.f32.mrb[0].mxu0
    %v2714 = vpop.f32.mrb[0].mxu0
    %v2715 = vpop.f32.mrb[0].mxu0
    %2716 = vdwg.mxu0
    %v2719 = vcombine.low %v2546, %v2547
    %v2721 = vunpack.c.l.s4 1966171168
    %v2722 = vunpack.c.0.s8 %v2721
    %v2723 = vlaneseq
    %v2724 = vshrl.u32 %v2723, 7
    %v2725 = vsub.s32 %v2722, %v2724
    %v2726 = vrot.slane %v2719, %v2725
    %v2728 = vunpack.c.l.s4 1966171168
    %v2729 = vunpack.c.0.s8 %v2728
    %v2730 = vlaneseq
    %v2731 = vshrl.u32 %v2730, 7
    %v2732 = vsub.s32 %v2729, %v2731
    %v2733 = vrot.slane %v2726, %v2732
    %v2751 = vunpack.c.l.b16 %v2561
    %v2752 = vunpack.c.l.b16 %v2562
    %v2753 = vunpack.c.l.b16 %v2563
    %v2754 = vunpack.c.l.b16 %v2564
    %v2755 = vunpack.c.l.b16 %v2565
    %v2756 = vunpack.c.l.b16 %v2566
    %v2757 = vunpack.c.l.b16 %v2567
    %v2758 = vunpack.c.l.b16 %v2568
    %v2759 = vunpack.c.l.b16 %v2569
    %v2760 = vunpack.c.l.b16 %v2570
    %v2761 = vunpack.c.l.b16 %v2571
    %v2762 = vunpack.c.l.b16 %v2572
    %v2763 = vunpack.c.l.b16 %v2573
    %v2764 = vunpack.c.l.b16 %v2574
    %v2765 = vunpack.c.l.b16 %v2575
    %v2766 = vunpack.c.l.b16 %v2576
    %v2767 = vpack.c.b16 %v2752, %v2751
    %v2768 = vpack.c.b16 %v2754, %v2753
    %v2769 = vpack.c.b16 %v2756, %v2755
    %v2770 = vpack.c.b16 %v2758, %v2757
    %v2771 = vpack.c.b16 %v2760, %v2759
    %v2772 = vpack.c.b16 %v2762, %v2761
    %v2773 = vpack.c.b16 %v2764, %v2763
    %v2774 = vpack.c.b16 %v2766, %v2765
    %2783 = vmatprep.subr.bf16.mxu0 0
    %2784 = vmatpush1.bf16.msra.mxu0 %v2767
    %2785 = vmatprep.subr.bf16.mxu0 0
    %2786 = vmatpush1.bf16.msra.mxu0 %v2768
    %2787 = vmatprep.subr.bf16.mxu0 0
    %2788 = vmatpush1.bf16.msra.mxu0 %v2769
    %2789 = vmatprep.subr.bf16.mxu0 0
    %2790 = vmatpush1.bf16.msra.mxu0 %v2770
    %2791 = vmatprep.subr.bf16.mxu0 0
    %2792 = vmatpush1.bf16.msra.mxu0 %v2771
    %2793 = vmatprep.subr.bf16.mxu0 0
    %2794 = vmatpush1.bf16.msra.mxu0 %v2772
    %2795 = vmatprep.subr.bf16.mxu0 0
    %2796 = vmatpush1.bf16.msra.mxu0 %v2773
    %2797 = vmatprep.subr.bf16.mxu0 0
    %2798 = vmatpush1.bf16.msra.mxu0 %v2774
    %2799 = vmatprep.subr.bf16.mxu0 0
    %2800 = vmatpush1.bf16.msra.mxu0 0
    %2801 = vmatprep.subr.bf16.mxu0 0
    %2802 = vmatpush1.bf16.msra.mxu0 0
    %2803 = vmatprep.subr.bf16.mxu0 0
    %2804 = vmatpush1.bf16.msra.mxu0 0
    %2805 = vmatprep.subr.bf16.mxu0 0
    %2806 = vmatpush1.bf16.msra.mxu0 0
    %2807 = vmatprep.subr.bf16.mxu0 0
    %2808 = vmatpush1.bf16.msra.mxu0 0
    %2809 = vmatprep.subr.bf16.mxu0 0
    %2810 = vmatpush1.bf16.msra.mxu0 0
    %2811 = vmatprep.subr.bf16.mxu0 0
    %2812 = vmatpush1.bf16.msra.mxu0 0
    %2813 = vmatprep.subr.bf16.mxu0 0
    %2814 = vmatpush1.bf16.msra.mxu0 0
    %2815 = vmatprep.mubr.bf16.mxu0 0
    %2816 = vmatmul.mubr.bf16.gmra.mrb[0].mxu0 %v2733
    %v2817 = vpop.f32.mrb[0].mxu0
    %v2818 = vadd.f32 %v2712, %v2817
    %v2819 = vpop.f32.mrb[0].mxu0
    %v2820 = vpop.f32.mrb[0].mxu0
    %v2821 = vpop.f32.mrb[0].mxu0
    %2822 = vdwg.mxu0
    %v2825 = vunpack.c.l.s4 1983009808
    %v2826 = vunpack.c.0.s8 %v2825
    %v2827 = vlaneseq
    %v2828 = vshrl.u32 %v2827, 7
    %v2829 = vsub.s32 %v2826, %v2828
    %v2830 = vrot.slane %v2818, %v2829
    %v2831 = vcombine.high %v2830, %v2830
    %v2836 = vcombine.low %v2554, %v2555
    %v2838 = vunpack.c.l.s4 1966171168
    %v2839 = vunpack.c.0.s8 %v2838
    %v2840 = vlaneseq
    %v2841 = vshrl.u32 %v2840, 7
    %v2842 = vsub.s32 %v2839, %v2841
    %v2843 = vrot.slane %v2836, %v2842
    %v2845 = vunpack.c.l.s4 1966171168
    %v2846 = vunpack.c.0.s8 %v2845
    %v2847 = vlaneseq
    %v2848 = vshrl.u32 %v2847, 7
    %v2849 = vsub.s32 %v2846, %v2848
    %v2850 = vrot.slane %v2843, %v2849
    %v2868 = vunpack.c.l.b16 %v2595
    %v2869 = vunpack.c.l.b16 %v2596
    %v2870 = vunpack.c.l.b16 %v2597
    %v2871 = vunpack.c.l.b16 %v2598
    %v2872 = vunpack.c.l.b16 %v2599
    %v2873 = vunpack.c.l.b16 %v2600
    %v2874 = vunpack.c.l.b16 %v2601
    %v2875 = vunpack.c.l.b16 %v2602
    %v2876 = vunpack.c.l.b16 %v2603
    %v2877 = vunpack.c.l.b16 %v2604
    %v2878 = vunpack.c.l.b16 %v2605
    %v2879 = vunpack.c.l.b16 %v2606
    %v2880 = vunpack.c.l.b16 %v2607
    %v2881 = vunpack.c.l.b16 %v2608
    %v2882 = vunpack.c.l.b16 %v2609
    %v2883 = vunpack.c.l.b16 %v2610
    %v2884 = vpack.c.b16 %v2869, %v2868
    %v2885 = vpack.c.b16 %v2871, %v2870
    %v2886 = vpack.c.b16 %v2873, %v2872
    %v2887 = vpack.c.b16 %v2875, %v2874
    %v2888 = vpack.c.b16 %v2877, %v2876
    %v2889 = vpack.c.b16 %v2879, %v2878
    %v2890 = vpack.c.b16 %v2881, %v2880
    %v2891 = vpack.c.b16 %v2883, %v2882
    %2900 = vmatprep.subr.bf16.mxu0 0
    %2901 = vmatpush1.bf16.msra.mxu0 %v2884
    %2902 = vmatprep.subr.bf16.mxu0 0
    %2903 = vmatpush1.bf16.msra.mxu0 %v2885
    %2904 = vmatprep.subr.bf16.mxu0 0
    %2905 = vmatpush1.bf16.msra.mxu0 %v2886
    %2906 = vmatprep.subr.bf16.mxu0 0
    %2907 = vmatpush1.bf16.msra.mxu0 %v2887
    %2908 = vmatprep.subr.bf16.mxu0 0
    %2909 = vmatpush1.bf16.msra.mxu0 %v2888
    %2910 = vmatprep.subr.bf16.mxu0 0
    %2911 = vmatpush1.bf16.msra.mxu0 %v2889
    %2912 = vmatprep.subr.bf16.mxu0 0
    %2913 = vmatpush1.bf16.msra.mxu0 %v2890
    %2914 = vmatprep.subr.bf16.mxu0 0
    %2915 = vmatpush1.bf16.msra.mxu0 %v2891
    %2916 = vmatprep.subr.bf16.mxu0 0
    %2917 = vmatpush1.bf16.msra.mxu0 0
    %2918 = vmatprep.subr.bf16.mxu0 0
    %2919 = vmatpush1.bf16.msra.mxu0 0
    %2920 = vmatprep.subr.bf16.mxu0 0
    %2921 = vmatpush1.bf16.msra.mxu0 0
    %2922 = vmatprep.subr.bf16.mxu0 0
    %2923 = vmatpush1.bf16.msra.mxu0 0
    %2924 = vmatprep.subr.bf16.mxu0 0
    %2925 = vmatpush1.bf16.msra.mxu0 0
    %2926 = vmatprep.subr.bf16.mxu0 0
    %2927 = vmatpush1.bf16.msra.mxu0 0
    %2928 = vmatprep.subr.bf16.mxu0 0
    %2929 = vmatpush1.bf16.msra.mxu0 0
    %2930 = vmatprep.subr.bf16.mxu0 0
    %2931 = vmatpush1.bf16.msra.mxu0 0
    %2932 = vmatprep.mubr.bf16.mxu0 0
    %2933 = vmatmul.mubr.bf16.gmra.mrb[0].mxu0 %v2850
    %v2934 = vpop.f32.mrb[0].mxu0
    %v2935 = vadd.f32 0.0, %v2934
    %v2936 = vpop.f32.mrb[0].mxu0
    %v2937 = vpop.f32.mrb[0].mxu0
    %v2938 = vpop.f32.mrb[0].mxu0
    %2939 = vdwg.mxu0
    %v2942 = vunpack.c.l.s4 1983009808
    %v2943 = vunpack.c.0.s8 %v2942
    %v2944 = vlaneseq
    %v2945 = vshrl.u32 %v2944, 7
    %v2946 = vsub.s32 %v2943, %v2945
    %v2947 = vrot.slane %v2935, %v2946
    %v2948 = vcombine.high %v2947, %v2947
    %v2951 = vadd.f32 %v2830, %v2947
    %v2952 = vadd.f32 %v2831, %v2948
    %2953 = vmatprep.subr.bf16.mxu0 0
    %2954 = vmatpush1.bf16.msra.mxu0 %v2661
    %2955 = vmatprep.subr.bf16.mxu0 0
    %2956 = vmatpush1.bf16.msra.mxu0 %v2662
    %2957 = vmatprep.subr.bf16.mxu0 0
    %2958 = vmatpush1.bf16.msra.mxu0 %v2663
    %2959 = vmatprep.subr.bf16.mxu0 0
    %2960 = vmatpush1.bf16.msra.mxu0 %v2664
    %2961 = vmatprep.subr.bf16.mxu0 0
    %2962 = vmatpush1.bf16.msra.mxu0 %v2665
    %2963 = vmatprep.subr.bf16.mxu0 0
    %2964 = vmatpush1.bf16.msra.mxu0 %v2666
    %2965 = vmatprep.subr.bf16.mxu0 0
    %2966 = vmatpush1.bf16.msra.mxu0 %v2667
    %2967 = vmatprep.subr.bf16.mxu0 0
    %2968 = vmatpush1.bf16.msra.mxu0 %v2668
    %2969 = vmatprep.subr.bf16.mxu0 0
    %2970 = vmatpush1.bf16.msra.mxu0 0
    %2971 = vmatprep.subr.bf16.mxu0 0
    %2972 = vmatpush1.bf16.msra.mxu0 0
    %2973 = vmatprep.subr.bf16.mxu0 0
    %2974 = vmatpush1.bf16.msra.mxu0 0
    %2975 = vmatprep.subr.bf16.mxu0 0
    %2976 = vmatpush1.bf16.msra.mxu0 0
    %2977 = vmatprep.subr.bf16.mxu0 0
    %2978 = vmatpush1.bf16.msra.mxu0 0
    %2979 = vmatprep.subr.bf16.mxu0 0
    %2980 = vmatpush1.bf16.msra.mxu0 0
    %2981 = vmatprep.subr.bf16.mxu0 0
    %2982 = vmatpush1.bf16.msra.mxu0 0
    %2983 = vmatprep.subr.bf16.mxu0 0
    %2984 = vmatpush1.bf16.msra.mxu0 0
    %2985 = vmatprep.mubr.bf16.mxu0 0
    %2986 = vmatmul.mubr.bf16.gmra.mrb[0].mxu0 %v2850
    %v2987 = vpop.f32.mrb[0].mxu0
    %v2988 = vadd.f32 0.0, %v2987
    %v2989 = vpop.f32.mrb[0].mxu0
    %v2990 = vpop.f32.mrb[0].mxu0
    %v2991 = vpop.f32.mrb[0].mxu0
    %2992 = vdwg.mxu0
    %2993 = vmatprep.subr.bf16.mxu0 0
    %2994 = vmatpush1.bf16.msra.mxu0 %v2767
    %2995 = vmatprep.subr.bf16.mxu0 0
    %2996 = vmatpush1.bf16.msra.mxu0 %v2768
    %2997 = vmatprep.subr.bf16.mxu0 0
    %2998 = vmatpush1.bf16.msra.mxu0 %v2769
    %2999 = vmatprep.subr.bf16.mxu0 0
    %3000 = vmatpush1.bf16.msra.mxu0 %v2770
    %3001 = vmatprep.subr.bf16.mxu0 0
    %3002 = vmatpush1.bf16.msra.mxu0 %v2771
    %3003 = vmatprep.subr.bf16.mxu0 0
    %3004 = vmatpush1.bf16.msra.mxu0 %v2772
    %3005 = vmatprep.subr.bf16.mxu0 0
    %3006 = vmatpush1.bf16.msra.mxu0 %v2773
    %3007 = vmatprep.subr.bf16.mxu0 0
    %3008 = vmatpush1.bf16.msra.mxu0 %v2774
    %3009 = vmatprep.subr.bf16.mxu0 0
    %3010 = vmatpush1.bf16.msra.mxu0 0
    %3011 = vmatprep.subr.bf16.mxu0 0
    %3012 = vmatpush1.bf16.msra.mxu0 0
    %3013 = vmatprep.subr.bf16.mxu0 0
    %3014 = vmatpush1.bf16.msra.mxu0 0
    %3015 = vmatprep.subr.bf16.mxu0 0
    %3016 = vmatpush1.bf16.msra.mxu0 0
    %3017 = vmatprep.subr.bf16.mxu0 0
    %3018 = vmatpush1.bf16.msra.mxu0 0
    %3019 = vmatprep.subr.bf16.mxu0 0
    %3020 = vmatpush1.bf16.msra.mxu0 0
    %3021 = vmatprep.subr.bf16.mxu0 0
    %3022 = vmatpush1.bf16.msra.mxu0 0
    %3023 = vmatprep.subr.bf16.mxu0 0
    %3024 = vmatpush1.bf16.msra.mxu0 0
    %3025 = vmatprep.mubr.bf16.mxu0 0
    %3026 = vmatmul.mubr.bf16.gmra.mrb[0].mxu0 %v2627
    %v3027 = vpop.f32.mrb[0].mxu0
    %v3028 = vadd.f32 %v2988, %v3027
    %v3029 = vpop.f32.mrb[0].mxu0
    %v3030 = vpop.f32.mrb[0].mxu0
    %v3031 = vpop.f32.mrb[0].mxu0
    %3032 = vdwg.mxu0
    %v3035 = vunpack.c.l.s4 1983009808
    %v3036 = vunpack.c.0.s8 %v3035
    %v3037 = vlaneseq
    %v3038 = vshrl.u32 %v3037, 7
    %v3039 = vsub.s32 %v3036, %v3038
    %v3040 = vrot.slane %v3028, %v3039
    %v3041 = vcombine.high %v3040, %v3040
    %v3046 = vcombine.low %v2558, %v2559
    %v3048 = vunpack.c.l.s4 1966171168
    %v3049 = vunpack.c.0.s8 %v3048
    %v3050 = vlaneseq
    %v3051 = vshrl.u32 %v3050, 7
    %v3052 = vsub.s32 %v3049, %v3051
    %v3053 = vrot.slane %v3046, %v3052
    %v3055 = vunpack.c.l.s4 1966171168
    %v3056 = vunpack.c.0.s8 %v3055
    %v3057 = vlaneseq
    %v3058 = vshrl.u32 %v3057, 7
    %v3059 = vsub.s32 %v3056, %v3058
    %v3060 = vrot.slane %v3053, %v3059
    %3062 = vmatprep.subr.bf16.mxu0 0
    %3063 = vmatpush1.bf16.msra.mxu0 %v2884
    %3064 = vmatprep.subr.bf16.mxu0 0
    %3065 = vmatpush1.bf16.msra.mxu0 %v2885
    %3066 = vmatprep.subr.bf16.mxu0 0
    %3067 = vmatpush1.bf16.msra.mxu0 %v2886
    %3068 = vmatprep.subr.bf16.mxu0 0
    %3069 = vmatpush1.bf16.msra.mxu0 %v2887
    %3070 = vmatprep.subr.bf16.mxu0 0
    %3071 = vmatpush1.bf16.msra.mxu0 %v2888
    %3072 = vmatprep.subr.bf16.mxu0 0
    %3073 = vmatpush1.bf16.msra.mxu0 %v2889
    %3074 = vmatprep.subr.bf16.mxu0 0
    %3075 = vmatpush1.bf16.msra.mxu0 %v2890
    %3076 = vmatprep.subr.bf16.mxu0 0
    %3077 = vmatpush1.bf16.msra.mxu0 %v2891
    %3078 = vmatprep.subr.bf16.mxu0 0
    %3079 = vmatpush1.bf16.msra.mxu0 0
    %3080 = vmatprep.subr.bf16.mxu0 0
    %3081 = vmatpush1.bf16.msra.mxu0 0
    %3082 = vmatprep.subr.bf16.mxu0 0
    %3083 = vmatpush1.bf16.msra.mxu0 0
    %3084 = vmatprep.subr.bf16.mxu0 0
    %3085 = vmatpush1.bf16.msra.mxu0 0
    %3086 = vmatprep.subr.bf16.mxu0 0
    %3087 = vmatpush1.bf16.msra.mxu0 0
    %3088 = vmatprep.subr.bf16.mxu0 0
    %3089 = vmatpush1.bf16.msra.mxu0 0
    %3090 = vmatprep.subr.bf16.mxu0 0
    %3091 = vmatpush1.bf16.msra.mxu0 0
    %3092 = vmatprep.subr.bf16.mxu0 0
    %3093 = vmatpush1.bf16.msra.mxu0 0
    %3094 = vmatprep.mubr.bf16.mxu0 0
    %3095 = vmatmul.mubr.bf16.gmra.mrb[0].mxu0 %v3060
    %v3096 = vpop.f32.mrb[0].mxu0
    %v3097 = vadd.f32 0.0, %v3096
    %v3098 = vpop.f32.mrb[0].mxu0
    %v3099 = vpop.f32.mrb[0].mxu0
    %v3100 = vpop.f32.mrb[0].mxu0
    %3101 = vdwg.mxu0
    %v3104 = vunpack.c.l.s4 1983009808
    %v3105 = vunpack.c.0.s8 %v3104
    %v3106 = vlaneseq
    %v3107 = vshrl.u32 %v3106, 7
    %v3108 = vsub.s32 %v3105, %v3107
    %v3109 = vrot.slane %v3097, %v3108
    %v3110 = vcombine.high %v3109, %v3109
    %v3113 = vadd.f32 %v3040, %v3109
    %v3114 = vadd.f32 %v3041, %v3110
    %v3115 = vmax.f32 %v2951, %v3113
    %v3116 = vmax.f32 %v2952, %v3114
    %s3117 = scalar_lea.vmem %s2, 4
    %v3118 = vld [vmem:[%s3117] sm:$0x1]
    %v3120 = vlaneseq
    %v3121 = vshrl.u32 %v3120, 7
    %v3122 = vsub.s32 0, %v3121
    %v3123 = vrot.slane %v3118, %v3122
    %v3125 = vadd.f32 %v3115, %v3123
    %v3126 = vadd.f32 %v3116, %v3123
    %v3127 = vmax.f32 %v3125, 0.0
    %v3128 = vmax.f32 %v3126, 0.0
    %3129 = vst [vmem:[#allocation2 + $0x8] sm:$0x3] %v3127
    %3130 = vst [vmem:[#allocation2 + $0x58] sm:$0x3] %v3128
    %3131 = vst [vmem:[#allocation2 + $0xa] sm:$0x1] 0.0
    %3132 = vst [vmem:[#allocation2 + $0x5a] sm:$0x1] 0.0
    %v3133 = vld [vmem:[%s244] ss:$2 sm:$0x1]
    %v3134 = vld [vmem:[%s252] ss:$2 sm:$0x1]
    %v3135 = vpack.c.bf16 %v3133, %v3133
    %v3136 = vpack.c.bf16 %v3134, %v3134
    %v3137 = vld [vmem:[%s264] ss:$2 sm:$0x1]
    %v3138 = vld [vmem:[%s272] ss:$2 sm:$0x1]
    %v3139 = vpack.c.bf16 %v3137, %v3137
    %v3140 = vpack.c.bf16 %v3138, %v3138
    %v3141 = vld [vmem:[%s284] ss:$2 sm:$0x1]
    %v3142 = vld [vmem:[%s292] ss:$2 sm:$0x1]
    %v3143 = vpack.c.bf16 %v3141, %v3141
    %v3144 = vpack.c.bf16 %v3142, %v3142
    %v3145 = vld [vmem:[%s304] ss:$2 sm:$0x1]
    %v3146 = vld [vmem:[%s312] ss:$2 sm:$0x1]
    %v3147 = vpack.c.bf16 %v3145, %v3145
    %v3148 = vpack.c.bf16 %v3146, %v3146
    %s3149 = scalar_lea.vmem [#allocation6], 960
    %v3150 = vld [vmem:[%s3149] sm:$0xf]
    %v3151 = vld [vmem:[%s3149 + $0x4] sm:$0xf]
    %v3152 = vld [vmem:[%s3149 + $0x8] sm:$0xf]
    %v3153 = vld [vmem:[%s3149 + $0xc] sm:$0xf]
    %v3154 = vld [vmem:[%s3149 + $0x10] sm:$0xf]
    %v3155 = vld [vmem:[%s3149 + $0x14] sm:$0xf]
    %v3156 = vld [vmem:[%s3149 + $0x18] sm:$0xf]
    %v3157 = vld [vmem:[%s3149 + $0x1c] sm:$0xf]
    %v3158 = vld [vmem:[%s3149 + $0x20] sm:$0xf]
    %v3159 = vld [vmem:[%s3149 + $0x24] sm:$0xf]
    %v3160 = vld [vmem:[%s3149 + $0x28] sm:$0xf]
    %v3161 = vld [vmem:[%s3149 + $0x2c] sm:$0xf]
    %v3162 = vld [vmem:[%s3149 + $0x30] sm:$0xf]
    %v3163 = vld [vmem:[%s3149 + $0x34] sm:$0xf]
    %v3164 = vld [vmem:[%s3149 + $0x38] sm:$0xf]
    %v3165 = vld [vmem:[%s3149 + $0x3c] sm:$0xf]
    %s3166 = scalar_lea.vmem [#allocation6], 1024
    %v3167 = vld [vmem:[%s3166] sm:$0xf]
    %v3168 = vld [vmem:[%s3166 + $0x4] sm:$0xf]
    %v3169 = vld [vmem:[%s3166 + $0x8] sm:$0xf]
    %v3170 = vld [vmem:[%s3166 + $0xc] sm:$0xf]
    %v3171 = vld [vmem:[%s3166 + $0x10] sm:$0xf]
    %v3172 = vld [vmem:[%s3166 + $0x14] sm:$0xf]
    %v3173 = vld [vmem:[%s3166 + $0x18] sm:$0xf]
    %v3174 = vld [vmem:[%s3166 + $0x1c] sm:$0xf]
    %v3175 = vld [vmem:[%s3166 + $0x20] sm:$0xf]
    %v3176 = vld [vmem:[%s3166 + $0x24] sm:$0xf]
    %v3177 = vld [vmem:[%s3166 + $0x28] sm:$0xf]
    %v3178 = vld [vmem:[%s3166 + $0x2c] sm:$0xf]
    %v3179 = vld [vmem:[%s3166 + $0x30] sm:$0xf]
    %v3180 = vld [vmem:[%s3166 + $0x34] sm:$0xf]
    %v3181 = vld [vmem:[%s3166 + $0x38] sm:$0xf]
    %v3182 = vld [vmem:[%s3166 + $0x3c] sm:$0xf]
    %s3183 = scalar_lea.vmem [#allocation6], 1088
    %v3184 = vld [vmem:[%s3183] sm:$0xf]
    %v3185 = vld [vmem:[%s3183 + $0x4] sm:$0xf]
    %v3186 = vld [vmem:[%s3183 + $0x8] sm:$0xf]
    %v3187 = vld [vmem:[%s3183 + $0xc] sm:$0xf]
    %v3188 = vld [vmem:[%s3183 + $0x10] sm:$0xf]
    %v3189 = vld [vmem:[%s3183 + $0x14] sm:$0xf]
    %v3190 = vld [vmem:[%s3183 + $0x18] sm:$0xf]
    %v3191 = vld [vmem:[%s3183 + $0x1c] sm:$0xf]
    %v3192 = vld [vmem:[%s3183 + $0x20] sm:$0xf]
    %v3193 = vld [vmem:[%s3183 + $0x24] sm:$0xf]
    %v3194 = vld [vmem:[%s3183 + $0x28] sm:$0xf]
    %v3195 = vld [vmem:[%s3183 + $0x2c] sm:$0xf]
    %v3196 = vld [vmem:[%s3183 + $0x30] sm:$0xf]
    %v3197 = vld [vmem:[%s3183 + $0x34] sm:$0xf]
    %v3198 = vld [vmem:[%s3183 + $0x38] sm:$0xf]
    %v3199 = vld [vmem:[%s3183 + $0x3c] sm:$0xf]
    %v3202 = vunpack.c.l.b16 %v3139
    %v3203 = vunpack.c.l.b16 %v3140
    %v3204 = vrot.slane %v3203, 7
    %vm3205 = vcmask 1041409
    %v3206 = vsel %vm3205, %v3204, %v3202
    %v3207 = vpack.c.b16 %v3206, %v3206
    %v3225 = vunpack.c.l.b16 %v3167
    %v3226 = vunpack.c.l.b16 %v3168
    %v3227 = vunpack.c.l.b16 %v3169
    %v3228 = vunpack.c.l.b16 %v3170
    %v3229 = vunpack.c.l.b16 %v3171
    %v3230 = vunpack.c.l.b16 %v3172
    %v3231 = vunpack.c.l.b16 %v3173
    %v3232 = vunpack.c.l.b16 %v3174
    %v3233 = vunpack.c.l.b16 %v3175
    %v3234 = vunpack.c.l.b16 %v3176
    %v3235 = vunpack.c.l.b16 %v3177
    %v3236 = vunpack.c.l.b16 %v3178
    %v3237 = vunpack.c.l.b16 %v3179
    %v3238 = vunpack.c.l.b16 %v3180
    %v3239 = vunpack.c.l.b16 %v3181
    %v3240 = vunpack.c.l.b16 %v3182
    %v3241 = vpack.c.b16 %v3226, %v3225
    %v3242 = vpack.c.b16 %v3228, %v3227
    %v3243 = vpack.c.b16 %v3230, %v3229
    %v3244 = vpack.c.b16 %v3232, %v3231
    %v3245 = vpack.c.b16 %v3234, %v3233
    %v3246 = vpack.c.b16 %v3236, %v3235
    %v3247 = vpack.c.b16 %v3238, %v3237
    %v3248 = vpack.c.b16 %v3240, %v3239
    %3257 = vmatprep.subr.bf16.mxu0 0
    %3258 = vmatpush1.bf16.msra.mxu0 %v3241
    %3259 = vmatprep.subr.bf16.mxu0 0
    %3260 = vmatpush1.bf16.msra.mxu0 %v3242
    %3261 = vmatprep.subr.bf16.mxu0 0
    %3262 = vmatpush1.bf16.msra.mxu0 %v3243
    %3263 = vmatprep.subr.bf16.mxu0 0
    %3264 = vmatpush1.bf16.msra.mxu0 %v3244
    %3265 = vmatprep.subr.bf16.mxu0 0
    %3266 = vmatpush1.bf16.msra.mxu0 %v3245
    %3267 = vmatprep.subr.bf16.mxu0 0
    %3268 = vmatpush1.bf16.msra.mxu0 %v3246
    %3269 = vmatprep.subr.bf16.mxu0 0
    %3270 = vmatpush1.bf16.msra.mxu0 %v3247
    %3271 = vmatprep.subr.bf16.mxu0 0
    %3272 = vmatpush1.bf16.msra.mxu0 %v3248
    %3273 = vmatprep.subr.bf16.mxu0 0
    %3274 = vmatpush1.bf16.msra.mxu0 0
    %3275 = vmatprep.subr.bf16.mxu0 0
    %3276 = vmatpush1.bf16.msra.mxu0 0
    %3277 = vmatprep.subr.bf16.mxu0 0
    %3278 = vmatpush1.bf16.msra.mxu0 0
    %3279 = vmatprep.subr.bf16.mxu0 0
    %3280 = vmatpush1.bf16.msra.mxu0 0
    %3281 = vmatprep.subr.bf16.mxu0 0
    %3282 = vmatpush1.bf16.msra.mxu0 0
    %3283 = vmatprep.subr.bf16.mxu0 0
    %3284 = vmatpush1.bf16.msra.mxu0 0
    %3285 = vmatprep.subr.bf16.mxu0 0
    %3286 = vmatpush1.bf16.msra.mxu0 0
    %3287 = vmatprep.subr.bf16.mxu0 0
    %3288 = vmatpush1.bf16.msra.mxu0 0
    %3289 = vmatprep.mubr.bf16.mxu0 0
    %3290 = vmatmul.mubr.bf16.gmra.mrb[0].mxu0 %v3207
    %v3291 = vpop.f32.mrb[0].mxu0
    %v3292 = vadd.f32 0.0, %v3291
    %v3293 = vpop.f32.mrb[0].mxu0
    %v3294 = vpop.f32.mrb[0].mxu0
    %v3295 = vpop.f32.mrb[0].mxu0
    %3296 = vdwg.mxu0
    %v3299 = vunpack.c.l.b16 %v3135
    %v3300 = vunpack.c.l.b16 %v3136
    %v3301 = vrot.slane %v3300, 7
    %v3302 = vsel %vm3205, %v3301, %v3299
    %v3303 = vpack.c.b16 %v3302, %v3302
    %v3321 = vunpack.c.l.b16 %v3150
    %v3322 = vunpack.c.l.b16 %v3151
    %v3323 = vunpack.c.l.b16 %v3152
    %v3324 = vunpack.c.l.b16 %v3153
    %v3325 = vunpack.c.l.b16 %v3154
    %v3326 = vunpack.c.l.b16 %v3155
    %v3327 = vunpack.c.l.b16 %v3156
    %v3328 = vunpack.c.l.b16 %v3157
    %v3329 = vunpack.c.l.b16 %v3158
    %v3330 = vunpack.c.l.b16 %v3159
    %v3331 = vunpack.c.l.b16 %v3160
    %v3332 = vunpack.c.l.b16 %v3161
    %v3333 = vunpack.c.l.b16 %v3162
    %v3334 = vunpack.c.l.b16 %v3163
    %v3335 = vunpack.c.l.b16 %v3164
    %v3336 = vunpack.c.l.b16 %v3165
    %v3337 = vpack.c.b16 %v3322, %v3321
    %v3338 = vpack.c.b16 %v3324, %v3323
    %v3339 = vpack.c.b16 %v3326, %v3325
    %v3340 = vpack.c.b16 %v3328, %v3327
    %v3341 = vpack.c.b16 %v3330, %v3329
    %v3342 = vpack.c.b16 %v3332, %v3331
    %v3343 = vpack.c.b16 %v3334, %v3333
    %v3344 = vpack.c.b16 %v3336, %v3335
    %3353 = vmatprep.subr.bf16.mxu0 0
    %3354 = vmatpush1.bf16.msra.mxu0 %v3337
    %3355 = vmatprep.subr.bf16.mxu0 0
    %3356 = vmatpush1.bf16.msra.mxu0 %v3338
    %3357 = vmatprep.subr.bf16.mxu0 0
    %3358 = vmatpush1.bf16.msra.mxu0 %v3339
    %3359 = vmatprep.subr.bf16.mxu0 0
    %3360 = vmatpush1.bf16.msra.mxu0 %v3340
    %3361 = vmatprep.subr.bf16.mxu0 0
    %3362 = vmatpush1.bf16.msra.mxu0 %v3341
    %3363 = vmatprep.subr.bf16.mxu0 0
    %3364 = vmatpush1.bf16.msra.mxu0 %v3342
    %3365 = vmatprep.subr.bf16.mxu0 0
    %3366 = vmatpush1.bf16.msra.mxu0 %v3343
    %3367 = vmatprep.subr.bf16.mxu0 0
    %3368 = vmatpush1.bf16.msra.mxu0 %v3344
    %3369 = vmatprep.subr.bf16.mxu0 0
    %3370 = vmatpush1.bf16.msra.mxu0 0
    %3371 = vmatprep.subr.bf16.mxu0 0
    %3372 = vmatpush1.bf16.msra.mxu0 0
    %3373 = vmatprep.subr.bf16.mxu0 0
    %3374 = vmatpush1.bf16.msra.mxu0 0
    %3375 = vmatprep.subr.bf16.mxu0 0
    %3376 = vmatpush1.bf16.msra.mxu0 0
    %3377 = vmatprep.subr.bf16.mxu0 0
    %3378 = vmatpush1.bf16.msra.mxu0 0
    %3379 = vmatprep.subr.bf16.mxu0 0
    %3380 = vmatpush1.bf16.msra.mxu0 0
    %3381 = vmatprep.subr.bf16.mxu0 0
    %3382 = vmatpush1.bf16.msra.mxu0 0
    %3383 = vmatprep.subr.bf16.mxu0 0
    %3384 = vmatpush1.bf16.msra.mxu0 0
    %3385 = vmatprep.mubr.bf16.mxu0 0
    %3386 = vmatmul.mubr.bf16.gmra.mrb[0].mxu0 %v3303
    %v3387 = vpop.f32.mrb[0].mxu0
    %v3388 = vadd.f32 %v3292, %v3387
    %v3389 = vpop.f32.mrb[0].mxu0
    %v3390 = vpop.f32.mrb[0].mxu0
    %v3391 = vpop.f32.mrb[0].mxu0
    %3392 = vdwg.mxu0
    %v3395 = vunpack.c.l.s4 1966171168
    %v3396 = vunpack.c.0.s8 %v3395
    %v3397 = vlaneseq
    %v3398 = vshrl.u32 %v3397, 7
    %v3399 = vsub.s32 %v3396, %v3398
    %v3400 = vrot.slane %v3388, %v3399
    %v3401 = vcombine.high %v3400, %v3400
    %v3403 = vunpack.c.l.s4 1966171168
    %v3404 = vunpack.c.0.s8 %v3403
    %v3405 = vlaneseq
    %v3406 = vshrl.u32 %v3405, 7
    %v3407 = vsub.s32 %v3404, %v3406
    %v3408 = vrot.slane %v3400, %v3407
    %v3410 = vunpack.c.l.s4 1966171168
    %v3411 = vunpack.c.0.s8 %v3410
    %v3412 = vlaneseq
    %v3413 = vshrl.u32 %v3412, 7
    %v3414 = vsub.s32 %v3411, %v3413
    %v3415 = vrot.slane %v3401, %v3414
    %v3420 = vunpack.c.l.b16 %v3143
    %v3421 = vunpack.c.l.b16 %v3144
    %v3422 = vrot.slane %v3421, 7
    %v3423 = vsel %vm3205, %v3422, %v3420
    %v3424 = vpack.c.b16 %v3423, %v3423
    %v3442 = vunpack.c.l.b16 %v3184
    %v3443 = vunpack.c.l.b16 %v3185
    %v3444 = vunpack.c.l.b16 %v3186
    %v3445 = vunpack.c.l.b16 %v3187
    %v3446 = vunpack.c.l.b16 %v3188
    %v3447 = vunpack.c.l.b16 %v3189
    %v3448 = vunpack.c.l.b16 %v3190
    %v3449 = vunpack.c.l.b16 %v3191
    %v3450 = vunpack.c.l.b16 %v3192
    %v3451 = vunpack.c.l.b16 %v3193
    %v3452 = vunpack.c.l.b16 %v3194
    %v3453 = vunpack.c.l.b16 %v3195
    %v3454 = vunpack.c.l.b16 %v3196
    %v3455 = vunpack.c.l.b16 %v3197
    %v3456 = vunpack.c.l.b16 %v3198
    %v3457 = vunpack.c.l.b16 %v3199
    %v3458 = vpack.c.b16 %v3443, %v3442
    %v3459 = vpack.c.b16 %v3445, %v3444
    %v3460 = vpack.c.b16 %v3447, %v3446
    %v3461 = vpack.c.b16 %v3449, %v3448
    %v3462 = vpack.c.b16 %v3451, %v3450
    %v3463 = vpack.c.b16 %v3453, %v3452
    %v3464 = vpack.c.b16 %v3455, %v3454
    %v3465 = vpack.c.b16 %v3457, %v3456
    %3474 = vmatprep.subr.bf16.mxu0 0
    %3475 = vmatpush1.bf16.msra.mxu0 %v3458
    %3476 = vmatprep.subr.bf16.mxu0 0
    %3477 = vmatpush1.bf16.msra.mxu0 %v3459
    %3478 = vmatprep.subr.bf16.mxu0 0
    %3479 = vmatpush1.bf16.msra.mxu0 %v3460
    %3480 = vmatprep.subr.bf16.mxu0 0
    %3481 = vmatpush1.bf16.msra.mxu0 %v3461
    %3482 = vmatprep.subr.bf16.mxu0 0
    %3483 = vmatpush1.bf16.msra.mxu0 %v3462
    %3484 = vmatprep.subr.bf16.mxu0 0
    %3485 = vmatpush1.bf16.msra.mxu0 %v3463
    %3486 = vmatprep.subr.bf16.mxu0 0
    %3487 = vmatpush1.bf16.msra.mxu0 %v3464
    %3488 = vmatprep.subr.bf16.mxu0 0
    %3489 = vmatpush1.bf16.msra.mxu0 %v3465
    %3490 = vmatprep.subr.bf16.mxu0 0
    %3491 = vmatpush1.bf16.msra.mxu0 0
    %3492 = vmatprep.subr.bf16.mxu0 0
    %3493 = vmatpush1.bf16.msra.mxu0 0
    %3494 = vmatprep.subr.bf16.mxu0 0
    %3495 = vmatpush1.bf16.msra.mxu0 0
    %3496 = vmatprep.subr.bf16.mxu0 0
    %3497 = vmatpush1.bf16.msra.mxu0 0
    %3498 = vmatprep.subr.bf16.mxu0 0
    %3499 = vmatpush1.bf16.msra.mxu0 0
    %3500 = vmatprep.subr.bf16.mxu0 0
    %3501 = vmatpush1.bf16.msra.mxu0 0
    %3502 = vmatprep.subr.bf16.mxu0 0
    %3503 = vmatpush1.bf16.msra.mxu0 0
    %3504 = vmatprep.subr.bf16.mxu0 0
    %3505 = vmatpush1.bf16.msra.mxu0 0
    %3506 = vmatprep.mubr.bf16.mxu0 0
    %3507 = vmatmul.mubr.bf16.gmra.mrb[0].mxu0 %v3424
    %v3508 = vpop.f32.mrb[0].mxu0
    %v3509 = vadd.f32 0.0, %v3508
    %v3510 = vpop.f32.mrb[0].mxu0
    %v3511 = vpop.f32.mrb[0].mxu0
    %v3512 = vpop.f32.mrb[0].mxu0
    %3513 = vdwg.mxu0
    %v3516 = vunpack.c.l.s4 1966171168
    %v3517 = vunpack.c.0.s8 %v3516
    %v3518 = vlaneseq
    %v3519 = vshrl.u32 %v3518, 7
    %v3520 = vsub.s32 %v3517, %v3519
    %v3521 = vrot.slane %v3509, %v3520
    %v3522 = vcombine.high %v3521, %v3521
    %v3524 = vunpack.c.l.s4 1966171168
    %v3525 = vunpack.c.0.s8 %v3524
    %v3526 = vlaneseq
    %v3527 = vshrl.u32 %v3526, 7
    %v3528 = vsub.s32 %v3525, %v3527
    %v3529 = vrot.slane %v3521, %v3528
    %v3531 = vunpack.c.l.s4 1966171168
    %v3532 = vunpack.c.0.s8 %v3531
    %v3533 = vlaneseq
    %v3534 = vshrl.u32 %v3533, 7
    %v3535 = vsub.s32 %v3532, %v3534
    %v3536 = vrot.slane %v3522, %v3535
    %v3539 = vadd.f32 %v3408, %v3529
    %v3540 = vadd.f32 %v3415, %v3536
    %3541 = vmatprep.subr.bf16.mxu0 0
    %3542 = vmatpush1.bf16.msra.mxu0 %v3241
    %3543 = vmatprep.subr.bf16.mxu0 0
    %3544 = vmatpush1.bf16.msra.mxu0 %v3242
    %3545 = vmatprep.subr.bf16.mxu0 0
    %3546 = vmatpush1.bf16.msra.mxu0 %v3243
    %3547 = vmatprep.subr.bf16.mxu0 0
    %3548 = vmatpush1.bf16.msra.mxu0 %v3244
    %3549 = vmatprep.subr.bf16.mxu0 0
    %3550 = vmatpush1.bf16.msra.mxu0 %v3245
    %3551 = vmatprep.subr.bf16.mxu0 0
    %3552 = vmatpush1.bf16.msra.mxu0 %v3246
    %3553 = vmatprep.subr.bf16.mxu0 0
    %3554 = vmatpush1.bf16.msra.mxu0 %v3247
    %3555 = vmatprep.subr.bf16.mxu0 0
    %3556 = vmatpush1.bf16.msra.mxu0 %v3248
    %3557 = vmatprep.subr.bf16.mxu0 0
    %3558 = vmatpush1.bf16.msra.mxu0 0
    %3559 = vmatprep.subr.bf16.mxu0 0
    %3560 = vmatpush1.bf16.msra.mxu0 0
    %3561 = vmatprep.subr.bf16.mxu0 0
    %3562 = vmatpush1.bf16.msra.mxu0 0
    %3563 = vmatprep.subr.bf16.mxu0 0
    %3564 = vmatpush1.bf16.msra.mxu0 0
    %3565 = vmatprep.subr.bf16.mxu0 0
    %3566 = vmatpush1.bf16.msra.mxu0 0
    %3567 = vmatprep.subr.bf16.mxu0 0
    %3568 = vmatpush1.bf16.msra.mxu0 0
    %3569 = vmatprep.subr.bf16.mxu0 0
    %3570 = vmatpush1.bf16.msra.mxu0 0
    %3571 = vmatprep.subr.bf16.mxu0 0
    %3572 = vmatpush1.bf16.msra.mxu0 0
    %3573 = vmatprep.mubr.bf16.mxu0 0
    %3574 = vmatmul.mubr.bf16.gmra.mrb[0].mxu0 %v3424
    %v3575 = vpop.f32.mrb[0].mxu0
    %v3576 = vadd.f32 0.0, %v3575
    %v3577 = vpop.f32.mrb[0].mxu0
    %v3578 = vpop.f32.mrb[0].mxu0
    %v3579 = vpop.f32.mrb[0].mxu0
    %3580 = vdwg.mxu0
    %3581 = vmatprep.subr.bf16.mxu0 0
    %3582 = vmatpush1.bf16.msra.mxu0 %v3337
    %3583 = vmatprep.subr.bf16.mxu0 0
    %3584 = vmatpush1.bf16.msra.mxu0 %v3338
    %3585 = vmatprep.subr.bf16.mxu0 0
    %3586 = vmatpush1.bf16.msra.mxu0 %v3339
    %3587 = vmatprep.subr.bf16.mxu0 0
    %3588 = vmatpush1.bf16.msra.mxu0 %v3340
    %3589 = vmatprep.subr.bf16.mxu0 0
    %3590 = vmatpush1.bf16.msra.mxu0 %v3341
    %3591 = vmatprep.subr.bf16.mxu0 0
    %3592 = vmatpush1.bf16.msra.mxu0 %v3342
    %3593 = vmatprep.subr.bf16.mxu0 0
    %3594 = vmatpush1.bf16.msra.mxu0 %v3343
    %3595 = vmatprep.subr.bf16.mxu0 0
    %3596 = vmatpush1.bf16.msra.mxu0 %v3344
    %3597 = vmatprep.subr.bf16.mxu0 0
    %3598 = vmatpush1.bf16.msra.mxu0 0
    %3599 = vmatprep.subr.bf16.mxu0 0
    %3600 = vmatpush1.bf16.msra.mxu0 0
    %3601 = vmatprep.subr.bf16.mxu0 0
    %3602 = vmatpush1.bf16.msra.mxu0 0
    %3603 = vmatprep.subr.bf16.mxu0 0
    %3604 = vmatpush1.bf16.msra.mxu0 0
    %3605 = vmatprep.subr.bf16.mxu0 0
    %3606 = vmatpush1.bf16.msra.mxu0 0
    %3607 = vmatprep.subr.bf16.mxu0 0
    %3608 = vmatpush1.bf16.msra.mxu0 0
    %3609 = vmatprep.subr.bf16.mxu0 0
    %3610 = vmatpush1.bf16.msra.mxu0 0
    %3611 = vmatprep.subr.bf16.mxu0 0
    %3612 = vmatpush1.bf16.msra.mxu0 0
    %3613 = vmatprep.mubr.bf16.mxu0 0
    %3614 = vmatmul.mubr.bf16.gmra.mrb[0].mxu0 %v3207
    %v3615 = vpop.f32.mrb[0].mxu0
    %v3616 = vadd.f32 %v3576, %v3615
    %v3617 = vpop.f32.mrb[0].mxu0
    %v3618 = vpop.f32.mrb[0].mxu0
    %v3619 = vpop.f32.mrb[0].mxu0
    %3620 = vdwg.mxu0
    %v3623 = vunpack.c.l.s4 1966171168
    %v3624 = vunpack.c.0.s8 %v3623
    %v3625 = vlaneseq
    %v3626 = vshrl.u32 %v3625, 7
    %v3627 = vsub.s32 %v3624, %v3626
    %v3628 = vrot.slane %v3616, %v3627
    %v3629 = vcombine.high %v3628, %v3628
    %v3631 = vunpack.c.l.s4 1966171168
    %v3632 = vunpack.c.0.s8 %v3631
    %v3633 = vlaneseq
    %v3634 = vshrl.u32 %v3633, 7
    %v3635 = vsub.s32 %v3632, %v3634
    %v3636 = vrot.slane %v3628, %v3635
    %v3638 = vunpack.c.l.s4 1966171168
    %v3639 = vunpack.c.0.s8 %v3638
    %v3640 = vlaneseq
    %v3641 = vshrl.u32 %v3640, 7
    %v3642 = vsub.s32 %v3639, %v3641
    %v3643 = vrot.slane %v3629, %v3642
    %v3648 = vunpack.c.l.b16 %v3147
    %v3649 = vunpack.c.l.b16 %v3148
    %v3650 = vrot.slane %v3649, 7
    %v3651 = vsel %vm3205, %v3650, %v3648
    %v3652 = vpack.c.b16 %v3651, %v3651
    %3654 = vmatprep.subr.bf16.mxu0 0
    %3655 = vmatpush1.bf16.msra.mxu0 %v3458
    %3656 = vmatprep.subr.bf16.mxu0 0
    %3657 = vmatpush1.bf16.msra.mxu0 %v3459
    %3658 = vmatprep.subr.bf16.mxu0 0
    %3659 = vmatpush1.bf16.msra.mxu0 %v3460
    %3660 = vmatprep.subr.bf16.mxu0 0
    %3661 = vmatpush1.bf16.msra.mxu0 %v3461
    %3662 = vmatprep.subr.bf16.mxu0 0
    %3663 = vmatpush1.bf16.msra.mxu0 %v3462
    %3664 = vmatprep.subr.bf16.mxu0 0
    %3665 = vmatpush1.bf16.msra.mxu0 %v3463
    %3666 = vmatprep.subr.bf16.mxu0 0
    %3667 = vmatpush1.bf16.msra.mxu0 %v3464
    %3668 = vmatprep.subr.bf16.mxu0 0
    %3669 = vmatpush1.bf16.msra.mxu0 %v3465
    %3670 = vmatprep.subr.bf16.mxu0 0
    %3671 = vmatpush1.bf16.msra.mxu0 0
    %3672 = vmatprep.subr.bf16.mxu0 0
    %3673 = vmatpush1.bf16.msra.mxu0 0
    %3674 = vmatprep.subr.bf16.mxu0 0
    %3675 = vmatpush1.bf16.msra.mxu0 0
    %3676 = vmatprep.subr.bf16.mxu0 0
    %3677 = vmatpush1.bf16.msra.mxu0 0
    %3678 = vmatprep.subr.bf16.mxu0 0
    %3679 = vmatpush1.bf16.msra.mxu0 0
    %3680 = vmatprep.subr.bf16.mxu0 0
    %3681 = vmatpush1.bf16.msra.mxu0 0
    %3682 = vmatprep.subr.bf16.mxu0 0
    %3683 = vmatpush1.bf16.msra.mxu0 0
    %3684 = vmatprep.subr.bf16.mxu0 0
    %3685 = vmatpush1.bf16.msra.mxu0 0
    %3686 = vmatprep.mubr.bf16.mxu0 0
    %3687 = vmatmul.mubr.bf16.gmra.mrb[0].mxu0 %v3652
    %v3688 = vpop.f32.mrb[0].mxu0
    %v3689 = vadd.f32 0.0, %v3688
    %v3690 = vpop.f32.mrb[0].mxu0
    %v3691 = vpop.f32.mrb[0].mxu0
    %v3692 = vpop.f32.mrb[0].mxu0
    %3693 = vdwg.mxu0
    %v3696 = vunpack.c.l.s4 1966171168
    %v3697 = vunpack.c.0.s8 %v3696
    %v3698 = vlaneseq
    %v3699 = vshrl.u32 %v3698, 7
    %v3700 = vsub.s32 %v3697, %v3699
    %v3701 = vrot.slane %v3689, %v3700
    %v3702 = vcombine.high %v3701, %v3701
    %v3704 = vunpack.c.l.s4 1966171168
    %v3705 = vunpack.c.0.s8 %v3704
    %v3706 = vlaneseq
    %v3707 = vshrl.u32 %v3706, 7
    %v3708 = vsub.s32 %v3705, %v3707
    %v3709 = vrot.slane %v3701, %v3708
    %v3711 = vunpack.c.l.s4 1966171168
    %v3712 = vunpack.c.0.s8 %v3711
    %v3713 = vlaneseq
    %v3714 = vshrl.u32 %v3713, 7
    %v3715 = vsub.s32 %v3712, %v3714
    %v3716 = vrot.slane %v3702, %v3715
    %v3719 = vadd.f32 %v3636, %v3709
    %v3720 = vadd.f32 %v3643, %v3716
    %v3721 = vmax.f32 %v3539, %v3719
    %v3722 = vmax.f32 %v3540, %v3720
    %s3723 = scalar_lea.vmem %s2, 5
    %v3724 = vld [vmem:[%s3723] sm:$0x1]
    %v3725 = vadd.f32 %v3721, %v3724
    %v3726 = vadd.f32 %v3722, %v3724
    %v3727 = vmax.f32 %v3725, 0.0
    %v3728 = vmax.f32 %v3726, 0.0
    %s3729 = smul.u32 4, 1
    %s3730 = smul.u32 %s3729, 16
    %s3731 = smul.u32 %s3730, 8
    %s3732 = sshll.u32 %s3731, 4
    %3733 = dma.done [#allocation5], %s3732
    %v3734 = vpack.c.bf16 %v3727, %v3727
    %v3735 = vpack.c.bf16 %v3728, %v3728
    %v3736 = vld [vmem:[#allocation3] sm:$0xff]
    %v3737 = vld [vmem:[#allocation3 + $0x8] sm:$0xff]
    %v3738 = vld [vmem:[#allocation3 + $0x10] sm:$0xff]
    %v3739 = vld [vmem:[#allocation3 + $0x18] sm:$0xff]
    %v3740 = vld [vmem:[#allocation3 + $0x20] sm:$0xff]
    %v3741 = vld [vmem:[#allocation3 + $0x28] sm:$0xff]
    %v3742 = vld [vmem:[#allocation3 + $0x30] sm:$0xff]
    %v3743 = vld [vmem:[#allocation3 + $0x38] sm:$0xff]
    %v3744 = vld [vmem:[#allocation3 + $0x40] sm:$0xff]
    %v3745 = vld [vmem:[#allocation3 + $0x48] sm:$0xff]
    %v3746 = vld [vmem:[#allocation3 + $0x50] sm:$0xff]
    %v3747 = vld [vmem:[#allocation3 + $0x58] sm:$0xff]
    %v3748 = vld [vmem:[#allocation3 + $0x60] sm:$0xff]
    %v3749 = vld [vmem:[#allocation3 + $0x68] sm:$0xff]
    %v3750 = vld [vmem:[#allocation3 + $0x70] sm:$0xff]
    %v3751 = vld [vmem:[#allocation3 + $0x78] sm:$0xff]
    %v3752 = vld [vmem:[#allocation3 + $0x80] sm:$0xff]
    %v3753 = vld [vmem:[#allocation3 + $0x88] sm:$0xff]
    %v3754 = vld [vmem:[#allocation3 + $0x90] sm:$0xff]
    %v3755 = vld [vmem:[#allocation3 + $0x98] sm:$0xff]
    %v3756 = vld [vmem:[#allocation3 + $0xa0] sm:$0xff]
    %v3757 = vld [vmem:[#allocation3 + $0xa8] sm:$0xff]
    %v3758 = vld [vmem:[#allocation3 + $0xb0] sm:$0xff]
    %v3759 = vld [vmem:[#allocation3 + $0xb8] sm:$0xff]
    %v3760 = vld [vmem:[#allocation3 + $0xc0] sm:$0xff]
    %v3761 = vld [vmem:[#allocation3 + $0xc8] sm:$0xff]
    %v3762 = vld [vmem:[#allocation3 + $0xd0] sm:$0xff]
    %v3763 = vld [vmem:[#allocation3 + $0xd8] sm:$0xff]
    %v3764 = vld [vmem:[#allocation3 + $0xe0] sm:$0xff]
    %v3765 = vld [vmem:[#allocation3 + $0xe8] sm:$0xff]
    %v3766 = vld [vmem:[#allocation3 + $0xf0] sm:$0xff]
    %v3767 = vld [vmem:[#allocation3 + $0xf8] sm:$0xff]
    %v3768 = vld [vmem:[#allocation3 + $0x100] sm:$0xff]
    %v3769 = vld [vmem:[#allocation3 + $0x108] sm:$0xff]
    %v3770 = vld [vmem:[#allocation3 + $0x110] sm:$0xff]
    %v3771 = vld [vmem:[#allocation3 + $0x118] sm:$0xff]
    %v3772 = vld [vmem:[#allocation3 + $0x120] sm:$0xff]
    %v3773 = vld [vmem:[#allocation3 + $0x128] sm:$0xff]
    %v3774 = vld [vmem:[#allocation3 + $0x130] sm:$0xff]
    %v3775 = vld [vmem:[#allocation3 + $0x138] sm:$0xff]
    %v3776 = vld [vmem:[#allocation3 + $0x140] sm:$0xff]
    %v3777 = vld [vmem:[#allocation3 + $0x148] sm:$0xff]
    %v3778 = vld [vmem:[#allocation3 + $0x150] sm:$0xff]
    %v3779 = vld [vmem:[#allocation3 + $0x158] sm:$0xff]
    %v3780 = vld [vmem:[#allocation3 + $0x160] sm:$0xff]
    %v3781 = vld [vmem:[#allocation3 + $0x168] sm:$0xff]
    %v3782 = vld [vmem:[#allocation3 + $0x170] sm:$0xff]
    %v3783 = vld [vmem:[#allocation3 + $0x178] sm:$0xff]
    %v3784 = vld [vmem:[#allocation3 + $0x180] sm:$0xff]
    %v3785 = vld [vmem:[#allocation3 + $0x188] sm:$0xff]
    %v3786 = vld [vmem:[#allocation3 + $0x190] sm:$0xff]
    %v3787 = vld [vmem:[#allocation3 + $0x198] sm:$0xff]
    %v3788 = vld [vmem:[#allocation3 + $0x1a0] sm:$0xff]
    %v3789 = vld [vmem:[#allocation3 + $0x1a8] sm:$0xff]
    %v3790 = vld [vmem:[#allocation3 + $0x1b0] sm:$0xff]
    %v3791 = vld [vmem:[#allocation3 + $0x1b8] sm:$0xff]
    %v3792 = vld [vmem:[#allocation3 + $0x1c0] sm:$0xff]
    %v3793 = vld [vmem:[#allocation3 + $0x1c8] sm:$0xff]
    %v3794 = vld [vmem:[#allocation3 + $0x1d0] sm:$0xff]
    %v3795 = vld [vmem:[#allocation3 + $0x1d8] sm:$0xff]
    %v3796 = vld [vmem:[#allocation3 + $0x1e0] sm:$0xff]
    %v3797 = vld [vmem:[#allocation3 + $0x1e8] sm:$0xff]
    %v3798 = vld [vmem:[#allocation3 + $0x1f0] sm:$0xff]
    %v3799 = vld [vmem:[#allocation3 + $0x1f8] sm:$0xff]
    %v3800 = vld [vmem:[%s4] sm:$0xff]
    %v3803 = vunpack.c.l.b16 %v3734
    %v3804 = vunpack.c.l.b16 %v3735
    %v3805 = vrot.slane %v3804, 7
    %v3806 = vsel %vm3205, %v3805, %v3803
    %v3807 = vpack.c.b16 %v3806, %v3806
    %v3810 = vcombine.low %v3800, %v3800
    %v3811 = vcombine.high %v3800, %v3800
    %v3813 = vunpack.c.l.s4 1966171168
    %v3814 = vunpack.c.0.s8 %v3813
    %v3815 = vlaneseq
    %v3816 = vshrl.u32 %v3815, 7
    %v3817 = vsub.s32 %v3814, %v3816
    %v3818 = vrot.slane %v3810, %v3817
    %v3820 = vunpack.c.l.s4 1966171168
    %v3821 = vunpack.c.0.s8 %v3820
    %v3822 = vlaneseq
    %v3823 = vshrl.u32 %v3822, 7
    %v3824 = vsub.s32 %v3821, %v3823
    %v3825 = vrot.slane %v3811, %v3824
    %v3826 = vcombine.high %v3818, %v3818
    %v3827 = vcombine.high %v3825, %v3825
    %v3829 = vunpack.c.l.s4 1966171168
    %v3830 = vunpack.c.0.s8 %v3829
    %v3831 = vlaneseq
    %v3832 = vshrl.u32 %v3831, 7
    %v3833 = vsub.s32 %v3830, %v3832
    %v3834 = vrot.slane %v3818, %v3833
    %v3836 = vunpack.c.l.s4 1966171168
    %v3837 = vunpack.c.0.s8 %v3836
    %v3838 = vlaneseq
    %v3839 = vshrl.u32 %v3838, 7
    %v3840 = vsub.s32 %v3837, %v3839
    %v3841 = vrot.slane %v3825, %v3840
    %v3843 = vunpack.c.l.s4 1966171168
    %v3844 = vunpack.c.0.s8 %v3843
    %v3845 = vlaneseq
    %v3846 = vshrl.u32 %v3845, 7
    %v3847 = vsub.s32 %v3844, %v3846
    %v3848 = vrot.slane %v3826, %v3847
    %v3850 = vunpack.c.l.s4 1966171168
    %v3851 = vunpack.c.0.s8 %v3850
    %v3852 = vlaneseq
    %v3853 = vshrl.u32 %v3852, 7
    %v3854 = vsub.s32 %v3851, %v3853
    %v3855 = vrot.slane %v3827, %v3854
    %v3856 = vcombine.high %v3834, %v3834
    %v3857 = vcombine.high %v3841, %v3841
    %v3858 = vcombine.high %v3848, %v3848
    %v3859 = vcombine.high %v3855, %v3855
    %3868 = vmatprep.subr.bf16.mxu0 %v3737
    %3869 = vmatpush1.bf16.msra.mxu0 %v3736
    %3870 = vmatprep.subr.bf16.mxu0 %v3745
    %3871 = vmatpush1.bf16.msra.mxu0 %v3744
    %3872 = vmatprep.subr.bf16.mxu0 %v3753
    %3873 = vmatpush1.bf16.msra.mxu0 %v3752
    %3874 = vmatprep.subr.bf16.mxu0 %v3761
    %3875 = vmatpush1.bf16.msra.mxu0 %v3760
    %3876 = vmatprep.subr.bf16.mxu0 %v3769
    %3877 = vmatpush1.bf16.msra.mxu0 %v3768
    %3878 = vmatprep.subr.bf16.mxu0 %v3777
    %3879 = vmatpush1.bf16.msra.mxu0 %v3776
    %3880 = vmatprep.subr.bf16.mxu0 %v3785
    %3881 = vmatpush1.bf16.msra.mxu0 %v3784
    %3882 = vmatprep.subr.bf16.mxu0 %v3793
    %3883 = vmatpush1.bf16.msra.mxu0 %v3792
    %3884 = vmatprep.subr.bf16.mxu0 0
    %3885 = vmatpush1.bf16.msra.mxu0 0
    %3886 = vmatprep.subr.bf16.mxu0 0
    %3887 = vmatpush1.bf16.msra.mxu0 0
    %3888 = vmatprep.subr.bf16.mxu0 0
    %3889 = vmatpush1.bf16.msra.mxu0 0
    %3890 = vmatprep.subr.bf16.mxu0 0
    %3891 = vmatpush1.bf16.msra.mxu0 0
    %3892 = vmatprep.subr.bf16.mxu0 0
    %3893 = vmatpush1.bf16.msra.mxu0 0
    %3894 = vmatprep.subr.bf16.mxu0 0
    %3895 = vmatpush1.bf16.msra.mxu0 0
    %3896 = vmatprep.subr.bf16.mxu0 0
    %3897 = vmatpush1.bf16.msra.mxu0 0
    %3898 = vmatprep.subr.bf16.mxu0 0
    %3899 = vmatpush1.bf16.msra.mxu0 0
    %3900 = vmatprep.mubr.bf16.mxu0 0
    %3901 = vmatmul.mubr.bf16.gmra.mrb[0].mxu0 %v3807
    %v3902 = vpop.f32.mrb[0].mxu0
    %v3903 = vadd.f32 %v3834, %v3902
    %v3904 = vpop.f32.mrb[0].mxu0
    %v3905 = vadd.f32 %v3848, %v3904
    %v3906 = vpop.f32.mrb[0].mxu0
    %v3907 = vpop.f32.mrb[0].mxu0
    %3908 = vdwg.mxu0
    %3909 = vmatprep.subr.bf16.mxu0 %v3739
    %3910 = vmatpush1.bf16.msra.mxu0 %v3738
    %3911 = vmatprep.subr.bf16.mxu0 %v3747
    %3912 = vmatpush1.bf16.msra.mxu0 %v3746
    %3913 = vmatprep.subr.bf16.mxu0 %v3755
    %3914 = vmatpush1.bf16.msra.mxu0 %v3754
    %3915 = vmatprep.subr.bf16.mxu0 %v3763
    %3916 = vmatpush1.bf16.msra.mxu0 %v3762
    %3917 = vmatprep.subr.bf16.mxu0 %v3771
    %3918 = vmatpush1.bf16.msra.mxu0 %v3770
    %3919 = vmatprep.subr.bf16.mxu0 %v3779
    %3920 = vmatpush1.bf16.msra.mxu0 %v3778
    %3921 = vmatprep.subr.bf16.mxu0 %v3787
    %3922 = vmatpush1.bf16.msra.mxu0 %v3786
    %3923 = vmatprep.subr.bf16.mxu0 %v3795
    %3924 = vmatpush1.bf16.msra.mxu0 %v3794
    %3925 = vmatprep.subr.bf16.mxu0 0
    %3926 = vmatpush1.bf16.msra.mxu0 0
    %3927 = vmatprep.subr.bf16.mxu0 0
    %3928 = vmatpush1.bf16.msra.mxu0 0
    %3929 = vmatprep.subr.bf16.mxu0 0
    %3930 = vmatpush1.bf16.msra.mxu0 0
    %3931 = vmatprep.subr.bf16.mxu0 0
    %3932 = vmatpush1.bf16.msra.mxu0 0
    %3933 = vmatprep.subr.bf16.mxu0 0
    %3934 = vmatpush1.bf16.msra.mxu0 0
    %3935 = vmatprep.subr.bf16.mxu0 0
    %3936 = vmatpush1.bf16.msra.mxu0 0
    %3937 = vmatprep.subr.bf16.mxu0 0
    %3938 = vmatpush1.bf16.msra.mxu0 0
    %3939 = vmatprep.subr.bf16.mxu0 0
    %3940 = vmatpush1.bf16.msra.mxu0 0
    %3941 = vmatprep.mubr.bf16.mxu0 0
    %3942 = vmatmul.mubr.bf16.gmra.mrb[0].mxu0 %v3807
    %v3943 = vpop.f32.mrb[0].mxu0
    %v3944 = vadd.f32 %v3856, %v3943
    %v3945 = vpop.f32.mrb[0].mxu0
    %v3946 = vadd.f32 %v3858, %v3945
    %v3947 = vpop.f32.mrb[0].mxu0
    %v3948 = vpop.f32.mrb[0].mxu0
    %3949 = vdwg.mxu0
    %3950 = vmatprep.subr.bf16.mxu0 %v3741
    %3951 = vmatpush1.bf16.msra.mxu0 %v3740
    %3952 = vmatprep.subr.bf16.mxu0 %v3749
    %3953 = vmatpush1.bf16.msra.mxu0 %v3748
    %3954 = vmatprep.subr.bf16.mxu0 %v3757
    %3955 = vmatpush1.bf16.msra.mxu0 %v3756
    %3956 = vmatprep.subr.bf16.mxu0 %v3765
    %3957 = vmatpush1.bf16.msra.mxu0 %v3764
    %3958 = vmatprep.subr.bf16.mxu0 %v3773
    %3959 = vmatpush1.bf16.msra.mxu0 %v3772
    %3960 = vmatprep.subr.bf16.mxu0 %v3781
    %3961 = vmatpush1.bf16.msra.mxu0 %v3780
    %3962 = vmatprep.subr.bf16.mxu0 %v3789
    %3963 = vmatpush1.bf16.msra.mxu0 %v3788
    %3964 = vmatprep.subr.bf16.mxu0 %v3797
    %3965 = vmatpush1.bf16.msra.mxu0 %v3796
    %3966 = vmatprep.subr.bf16.mxu0 0
    %3967 = vmatpush1.bf16.msra.mxu0 0
    %3968 = vmatprep.subr.bf16.mxu0 0
    %3969 = vmatpush1.bf16.msra.mxu0 0
    %3970 = vmatprep.subr.bf16.mxu0 0
    %3971 = vmatpush1.bf16.msra.mxu0 0
    %3972 = vmatprep.subr.bf16.mxu0 0
    %3973 = vmatpush1.bf16.msra.mxu0 0
    %3974 = vmatprep.subr.bf16.mxu0 0
    %3975 = vmatpush1.bf16.msra.mxu0 0
    %3976 = vmatprep.subr.bf16.mxu0 0
    %3977 = vmatpush1.bf16.msra.mxu0 0
    %3978 = vmatprep.subr.bf16.mxu0 0
    %3979 = vmatpush1.bf16.msra.mxu0 0
    %3980 = vmatprep.subr.bf16.mxu0 0
    %3981 = vmatpush1.bf16.msra.mxu0 0
    %3982 = vmatprep.mubr.bf16.mxu0 0
    %3983 = vmatmul.mubr.bf16.gmra.mrb[0].mxu0 %v3807
    %v3984 = vpop.f32.mrb[0].mxu0
    %v3985 = vadd.f32 %v3841, %v3984
    %v3986 = vpop.f32.mrb[0].mxu0
    %v3987 = vadd.f32 %v3855, %v3986
    %v3988 = vpop.f32.mrb[0].mxu0
    %v3989 = vpop.f32.mrb[0].mxu0
    %3990 = vdwg.mxu0
    %3991 = vmatprep.subr.bf16.mxu0 %v3743
    %3992 = vmatpush1.bf16.msra.mxu0 %v3742
    %3993 = vmatprep.subr.bf16.mxu0 %v3751
    %3994 = vmatpush1.bf16.msra.mxu0 %v3750
    %3995 = vmatprep.subr.bf16.mxu0 %v3759
    %3996 = vmatpush1.bf16.msra.mxu0 %v3758
    %3997 = vmatprep.subr.bf16.mxu0 %v3767
    %3998 = vmatpush1.bf16.msra.mxu0 %v3766
    %3999 = vmatprep.subr.bf16.mxu0 %v3775
    %4000 = vmatpush1.bf16.msra.mxu0 %v3774
    %4001 = vmatprep.subr.bf16.mxu0 %v3783
    %4002 = vmatpush1.bf16.msra.mxu0 %v3782
    %4003 = vmatprep.subr.bf16.mxu0 %v3791
    %4004 = vmatpush1.bf16.msra.mxu0 %v3790
    %4005 = vmatprep.subr.bf16.mxu0 %v3799
    %4006 = vmatpush1.bf16.msra.mxu0 %v3798
    %4007 = vmatprep.subr.bf16.mxu0 0
    %4008 = vmatpush1.bf16.msra.mxu0 0
    %4009 = vmatprep.subr.bf16.mxu0 0
    %4010 = vmatpush1.bf16.msra.mxu0 0
    %4011 = vmatprep.subr.bf16.mxu0 0
    %4012 = vmatpush1.bf16.msra.mxu0 0
    %4013 = vmatprep.subr.bf16.mxu0 0
    %4014 = vmatpush1.bf16.msra.mxu0 0
    %4015 = vmatprep.subr.bf16.mxu0 0
    %4016 = vmatpush1.bf16.msra.mxu0 0
    %4017 = vmatprep.subr.bf16.mxu0 0
    %4018 = vmatpush1.bf16.msra.mxu0 0
    %4019 = vmatprep.subr.bf16.mxu0 0
    %4020 = vmatpush1.bf16.msra.mxu0 0
    %4021 = vmatprep.subr.bf16.mxu0 0
    %4022 = vmatpush1.bf16.msra.mxu0 0
    %4023 = vmatprep.mubr.bf16.mxu0 0
    %4024 = vmatmul.mubr.bf16.gmra.mrb[0].mxu0 %v3807
    %v4025 = vpop.f32.mrb[0].mxu0
    %v4026 = vadd.f32 %v3857, %v4025
    %v4027 = vpop.f32.mrb[0].mxu0
    %v4028 = vadd.f32 %v3859, %v4027
    %v4029 = vpop.f32.mrb[0].mxu0
    %v4030 = vpop.f32.mrb[0].mxu0
    %4031 = vdwg.mxu0
    %v4040 = vcombine.low %v3903, %v3905
    %v4041 = vcombine.low %v3944, %v3946
    %v4042 = vcombine.low %v3985, %v3987
    %v4043 = vcombine.low %v4026, %v4028
    %v4045 = vunpack.c.l.s4 1966171168
    %v4046 = vunpack.c.0.s8 %v4045
    %v4047 = vlaneseq
    %v4048 = vshrl.u32 %v4047, 7
    %v4049 = vsub.s32 %v4046, %v4048
    %v4050 = vrot.slane %v4040, %v4049
    %v4052 = vunpack.c.l.s4 1966171168
    %v4053 = vunpack.c.0.s8 %v4052
    %v4054 = vlaneseq
    %v4055 = vshrl.u32 %v4054, 7
    %v4056 = vsub.s32 %v4053, %v4055
    %v4057 = vrot.slane %v4041, %v4056
    %v4059 = vunpack.c.l.s4 1966171168
    %v4060 = vunpack.c.0.s8 %v4059
    %v4061 = vlaneseq
    %v4062 = vshrl.u32 %v4061, 7
    %v4063 = vsub.s32 %v4060, %v4062
    %v4064 = vrot.slane %v4042, %v4063
    %v4066 = vunpack.c.l.s4 1966171168
    %v4067 = vunpack.c.0.s8 %v4066
    %v4068 = vlaneseq
    %v4069 = vshrl.u32 %v4068, 7
    %v4070 = vsub.s32 %v4067, %v4069
    %v4071 = vrot.slane %v4043, %v4070
    %v4072 = vcombine.low %v4050, %v4057
    %v4073 = vcombine.high %v4050, %v4057
    %v4074 = vcombine.low %v4064, %v4071
    %v4075 = vcombine.high %v4064, %v4071
    %v4077 = vunpack.c.l.s4 1966171168
    %v4078 = vunpack.c.0.s8 %v4077
    %v4079 = vlaneseq
    %v4080 = vshrl.u32 %v4079, 7
    %v4081 = vsub.s32 %v4078, %v4080
    %v4082 = vrot.slane %v4072, %v4081
    %v4084 = vunpack.c.l.s4 1966171168
    %v4085 = vunpack.c.0.s8 %v4084
    %v4086 = vlaneseq
    %v4087 = vshrl.u32 %v4086, 7
    %v4088 = vsub.s32 %v4085, %v4087
    %v4089 = vrot.slane %v4073, %v4088
    %v4091 = vunpack.c.l.s4 1966171168
    %v4092 = vunpack.c.0.s8 %v4091
    %v4093 = vlaneseq
    %v4094 = vshrl.u32 %v4093, 7
    %v4095 = vsub.s32 %v4092, %v4094
    %v4096 = vrot.slane %v4074, %v4095
    %v4098 = vunpack.c.l.s4 1966171168
    %v4099 = vunpack.c.0.s8 %v4098
    %v4100 = vlaneseq
    %v4101 = vshrl.u32 %v4100, 7
    %v4102 = vsub.s32 %v4099, %v4101
    %v4103 = vrot.slane %v4075, %v4102
    %v4104 = vcombine.low %v4082, %v4096
    %v4105 = vcombine.low %v4089, %v4103
    %v4108 = vmax.f32 %v4104, 0.0
    %v4109 = vmax.f32 %v4105, 0.0
    %s4110 = smul.u32 4, 128
    %s4111 = smul.u32 %s4110, 4
    %s4112 = sshll.u32 %s4111, 4
    %4113 = dma.done %s93, %s4112
    %v4116 = vlaneseq
    %v4117 = vshrl.u32 %v4116, 7
    %v4118 = vsub.s32 0, %v4117
    %v4119 = vrot.slane %v4108, %v4118
    %v4120 = vlaneseq
    %v4121 = vshrl.u32 %v4120, 7
    %v4122 = vsub.s32 1, %v4121
    %v4123 = vrot.slane %v4108, %v4122
    %v4124 = vlaneseq
    %v4125 = vshrl.u32 %v4124, 7
    %v4126 = vsub.s32 2, %v4125
    %v4127 = vrot.slane %v4108, %v4126
    %v4128 = vlaneseq
    %v4129 = vshrl.u32 %v4128, 7
    %v4130 = vsub.s32 3, %v4129
    %v4131 = vrot.slane %v4108, %v4130
    %v4132 = vlaneseq
    %v4133 = vshrl.u32 %v4132, 7
    %v4134 = vsub.s32 4, %v4133
    %v4135 = vrot.slane %v4108, %v4134
    %v4136 = vlaneseq
    %v4137 = vshrl.u32 %v4136, 7
    %v4138 = vsub.s32 5, %v4137
    %v4139 = vrot.slane %v4108, %v4138
    %v4140 = vlaneseq
    %v4141 = vshrl.u32 %v4140, 7
    %v4142 = vsub.s32 6, %v4141
    %v4143 = vrot.slane %v4108, %v4142
    %v4144 = vlaneseq
    %v4145 = vshrl.u32 %v4144, 7
    %v4146 = vsub.s32 7, %v4145
    %v4147 = vrot.slane %v4108, %v4146
    %v4148 = vlaneseq
    %v4149 = vshrl.u32 %v4148, 7
    %v4150 = vsub.s32 0, %v4149
    %v4151 = vrot.slane %v4109, %v4150
    %v4152 = vlaneseq
    %v4153 = vshrl.u32 %v4152, 7
    %v4154 = vsub.s32 1, %v4153
    %v4155 = vrot.slane %v4109, %v4154
    %v4156 = vlaneseq
    %v4157 = vshrl.u32 %v4156, 7
    %v4158 = vsub.s32 2, %v4157
    %v4159 = vrot.slane %v4109, %v4158
    %v4160 = vlaneseq
    %v4161 = vshrl.u32 %v4160, 7
    %v4162 = vsub.s32 3, %v4161
    %v4163 = vrot.slane %v4109, %v4162
    %v4164 = vlaneseq
    %v4165 = vshrl.u32 %v4164, 7
    %v4166 = vsub.s32 4, %v4165
    %v4167 = vrot.slane %v4109, %v4166
    %v4168 = vlaneseq
    %v4169 = vshrl.u32 %v4168, 7
    %v4170 = vsub.s32 5, %v4169
    %v4171 = vrot.slane %v4109, %v4170
    %v4172 = vlaneseq
    %v4173 = vshrl.u32 %v4172, 7
    %v4174 = vsub.s32 6, %v4173
    %v4175 = vrot.slane %v4109, %v4174
    %v4176 = vlaneseq
    %v4177 = vshrl.u32 %v4176, 7
    %v4178 = vsub.s32 7, %v4177
    %v4179 = vrot.slane %v4109, %v4178
    %v4196 = vpack.c.bf16 %v4119, %v4119
    %v4197 = vpack.c.bf16 %v4123, %v4123
    %v4198 = vpack.c.bf16 %v4127, %v4127
    %v4199 = vpack.c.bf16 %v4131, %v4131
    %v4200 = vpack.c.bf16 %v4135, %v4135
    %v4201 = vpack.c.bf16 %v4139, %v4139
    %v4202 = vpack.c.bf16 %v4143, %v4143
    %v4203 = vpack.c.bf16 %v4147, %v4147
    %v4204 = vpack.c.bf16 %v4151, %v4151
    %v4205 = vpack.c.bf16 %v4155, %v4155
    %v4206 = vpack.c.bf16 %v4159, %v4159
    %v4207 = vpack.c.bf16 %v4163, %v4163
    %v4208 = vpack.c.bf16 %v4167, %v4167
    %v4209 = vpack.c.bf16 %v4171, %v4171
    %v4210 = vpack.c.bf16 %v4175, %v4175
    %v4211 = vpack.c.bf16 %v4179, %v4179
    %v4212 = vld [vmem:[#allocation4] sm:$0xff]
    %v4213 = vld [vmem:[#allocation4 + $0x8] sm:$0xff]
    %v4214 = vld [vmem:[#allocation4 + $0x10] sm:$0xff]
    %v4215 = vld [vmem:[#allocation4 + $0x18] sm:$0xff]
    %v4216 = vld [vmem:[#allocation4 + $0x20] sm:$0xff]
    %v4217 = vld [vmem:[#allocation4 + $0x28] sm:$0xff]
    %v4218 = vld [vmem:[#allocation4 + $0x30] sm:$0xff]
    %v4219 = vld [vmem:[#allocation4 + $0x38] sm:$0xff]
    %v4220 = vld [vmem:[#allocation4 + $0x40] sm:$0xff]
    %v4221 = vld [vmem:[#allocation4 + $0x48] sm:$0xff]
    %v4222 = vld [vmem:[#allocation4 + $0x50] sm:$0xff]
    %v4223 = vld [vmem:[#allocation4 + $0x58] sm:$0xff]
    %v4224 = vld [vmem:[#allocation4 + $0x60] sm:$0xff]
    %v4225 = vld [vmem:[#allocation4 + $0x68] sm:$0xff]
    %v4226 = vld [vmem:[#allocation4 + $0x70] sm:$0xff]
    %v4227 = vld [vmem:[#allocation4 + $0x78] sm:$0xff]
    %v4228 = vld [vmem:[#allocation4 + $0x80] sm:$0xff]
    %v4229 = vld [vmem:[#allocation4 + $0x88] sm:$0xff]
    %v4230 = vld [vmem:[#allocation4 + $0x90] sm:$0xff]
    %v4231 = vld [vmem:[#allocation4 + $0x98] sm:$0xff]
    %v4232 = vld [vmem:[#allocation4 + $0xa0] sm:$0xff]
    %v4233 = vld [vmem:[#allocation4 + $0xa8] sm:$0xff]
    %v4234 = vld [vmem:[#allocation4 + $0xb0] sm:$0xff]
    %v4235 = vld [vmem:[#allocation4 + $0xb8] sm:$0xff]
    %v4236 = vld [vmem:[#allocation4 + $0xc0] sm:$0xff]
    %v4237 = vld [vmem:[#allocation4 + $0xc8] sm:$0xff]
    %v4238 = vld [vmem:[#allocation4 + $0xd0] sm:$0xff]
    %v4239 = vld [vmem:[#allocation4 + $0xd8] sm:$0xff]
    %v4240 = vld [vmem:[#allocation4 + $0xe0] sm:$0xff]
    %v4241 = vld [vmem:[#allocation4 + $0xe8] sm:$0xff]
    %v4242 = vld [vmem:[#allocation4 + $0xf0] sm:$0xff]
    %v4243 = vld [vmem:[#allocation4 + $0xf8] sm:$0xff]
    %v4244 = vld [vmem:[#allocation4 + $0x100] sm:$0xff]
    %v4245 = vld [vmem:[#allocation4 + $0x108] sm:$0xff]
    %v4246 = vld [vmem:[#allocation4 + $0x110] sm:$0xff]
    %v4247 = vld [vmem:[#allocation4 + $0x118] sm:$0xff]
    %v4248 = vld [vmem:[#allocation4 + $0x120] sm:$0xff]
    %v4249 = vld [vmem:[#allocation4 + $0x128] sm:$0xff]
    %v4250 = vld [vmem:[#allocation4 + $0x130] sm:$0xff]
    %v4251 = vld [vmem:[#allocation4 + $0x138] sm:$0xff]
    %v4252 = vld [vmem:[#allocation4 + $0x140] sm:$0xff]
    %v4253 = vld [vmem:[#allocation4 + $0x148] sm:$0xff]
    %v4254 = vld [vmem:[#allocation4 + $0x150] sm:$0xff]
    %v4255 = vld [vmem:[#allocation4 + $0x158] sm:$0xff]
    %v4256 = vld [vmem:[#allocation4 + $0x160] sm:$0xff]
    %v4257 = vld [vmem:[#allocation4 + $0x168] sm:$0xff]
    %v4258 = vld [vmem:[#allocation4 + $0x170] sm:$0xff]
    %v4259 = vld [vmem:[#allocation4 + $0x178] sm:$0xff]
    %v4260 = vld [vmem:[#allocation4 + $0x180] sm:$0xff]
    %v4261 = vld [vmem:[#allocation4 + $0x188] sm:$0xff]
    %v4262 = vld [vmem:[#allocation4 + $0x190] sm:$0xff]
    %v4263 = vld [vmem:[#allocation4 + $0x198] sm:$0xff]
    %v4264 = vld [vmem:[#allocation4 + $0x1a0] sm:$0xff]
    %v4265 = vld [vmem:[#allocation4 + $0x1a8] sm:$0xff]
    %v4266 = vld [vmem:[#allocation4 + $0x1b0] sm:$0xff]
    %v4267 = vld [vmem:[#allocation4 + $0x1b8] sm:$0xff]
    %v4268 = vld [vmem:[#allocation4 + $0x1c0] sm:$0xff]
    %v4269 = vld [vmem:[#allocation4 + $0x1c8] sm:$0xff]
    %v4270 = vld [vmem:[#allocation4 + $0x1d0] sm:$0xff]
    %v4271 = vld [vmem:[#allocation4 + $0x1d8] sm:$0xff]
    %v4272 = vld [vmem:[#allocation4 + $0x1e0] sm:$0xff]
    %v4273 = vld [vmem:[#allocation4 + $0x1e8] sm:$0xff]
    %v4274 = vld [vmem:[#allocation4 + $0x1f0] sm:$0xff]
    %v4275 = vld [vmem:[#allocation4 + $0x1f8] sm:$0xff]
    %v4276 = vld [vmem:[#allocation4 + $0x200] sm:$0xff]
    %v4277 = vld [vmem:[#allocation4 + $0x208] sm:$0xff]
    %v4278 = vld [vmem:[#allocation4 + $0x210] sm:$0xff]
    %v4279 = vld [vmem:[#allocation4 + $0x218] sm:$0xff]
    %v4280 = vld [vmem:[#allocation4 + $0x220] sm:$0xff]
    %v4281 = vld [vmem:[#allocation4 + $0x228] sm:$0xff]
    %v4282 = vld [vmem:[#allocation4 + $0x230] sm:$0xff]
    %v4283 = vld [vmem:[#allocation4 + $0x238] sm:$0xff]
    %v4284 = vld [vmem:[#allocation4 + $0x240] sm:$0xff]
    %v4285 = vld [vmem:[#allocation4 + $0x248] sm:$0xff]
    %v4286 = vld [vmem:[#allocation4 + $0x250] sm:$0xff]
    %v4287 = vld [vmem:[#allocation4 + $0x258] sm:$0xff]
    %v4288 = vld [vmem:[#allocation4 + $0x260] sm:$0xff]
    %v4289 = vld [vmem:[#allocation4 + $0x268] sm:$0xff]
    %v4290 = vld [vmem:[#allocation4 + $0x270] sm:$0xff]
    %v4291 = vld [vmem:[#allocation4 + $0x278] sm:$0xff]
    %v4292 = vld [vmem:[#allocation4 + $0x280] sm:$0xff]
    %v4293 = vld [vmem:[#allocation4 + $0x288] sm:$0xff]
    %v4294 = vld [vmem:[#allocation4 + $0x290] sm:$0xff]
    %v4295 = vld [vmem:[#allocation4 + $0x298] sm:$0xff]
    %v4296 = vld [vmem:[#allocation4 + $0x2a0] sm:$0xff]
    %v4297 = vld [vmem:[#allocation4 + $0x2a8] sm:$0xff]
    %v4298 = vld [vmem:[#allocation4 + $0x2b0] sm:$0xff]
    %v4299 = vld [vmem:[#allocation4 + $0x2b8] sm:$0xff]
    %v4300 = vld [vmem:[#allocation4 + $0x2c0] sm:$0xff]
    %v4301 = vld [vmem:[#allocation4 + $0x2c8] sm:$0xff]
    %v4302 = vld [vmem:[#allocation4 + $0x2d0] sm:$0xff]
    %v4303 = vld [vmem:[#allocation4 + $0x2d8] sm:$0xff]
    %v4304 = vld [vmem:[#allocation4 + $0x2e0] sm:$0xff]
    %v4305 = vld [vmem:[#allocation4 + $0x2e8] sm:$0xff]
    %v4306 = vld [vmem:[#allocation4 + $0x2f0] sm:$0xff]
    %v4307 = vld [vmem:[#allocation4 + $0x2f8] sm:$0xff]
    %v4308 = vld [vmem:[#allocation4 + $0x300] sm:$0xff]
    %v4309 = vld [vmem:[#allocation4 + $0x308] sm:$0xff]
    %v4310 = vld [vmem:[#allocation4 + $0x310] sm:$0xff]
    %v4311 = vld [vmem:[#allocation4 + $0x318] sm:$0xff]
    %v4312 = vld [vmem:[#allocation4 + $0x320] sm:$0xff]
    %v4313 = vld [vmem:[#allocation4 + $0x328] sm:$0xff]
    %v4314 = vld [vmem:[#allocation4 + $0x330] sm:$0xff]
    %v4315 = vld [vmem:[#allocation4 + $0x338] sm:$0xff]
    %v4316 = vld [vmem:[#allocation4 + $0x340] sm:$0xff]
    %v4317 = vld [vmem:[#allocation4 + $0x348] sm:$0xff]
    %v4318 = vld [vmem:[#allocation4 + $0x350] sm:$0xff]
    %v4319 = vld [vmem:[#allocation4 + $0x358] sm:$0xff]
    %v4320 = vld [vmem:[#allocation4 + $0x360] sm:$0xff]
    %v4321 = vld [vmem:[#allocation4 + $0x368] sm:$0xff]
    %v4322 = vld [vmem:[#allocation4 + $0x370] sm:$0xff]
    %v4323 = vld [vmem:[#allocation4 + $0x378] sm:$0xff]
    %v4324 = vld [vmem:[#allocation4 + $0x380] sm:$0xff]
    %v4325 = vld [vmem:[#allocation4 + $0x388] sm:$0xff]
    %v4326 = vld [vmem:[#allocation4 + $0x390] sm:$0xff]
    %v4327 = vld [vmem:[#allocation4 + $0x398] sm:$0xff]
    %v4328 = vld [vmem:[#allocation4 + $0x3a0] sm:$0xff]
    %v4329 = vld [vmem:[#allocation4 + $0x3a8] sm:$0xff]
    %v4330 = vld [vmem:[#allocation4 + $0x3b0] sm:$0xff]
    %v4331 = vld [vmem:[#allocation4 + $0x3b8] sm:$0xff]
    %v4332 = vld [vmem:[#allocation4 + $0x3c0] sm:$0xff]
    %v4333 = vld [vmem:[#allocation4 + $0x3c8] sm:$0xff]
    %v4334 = vld [vmem:[#allocation4 + $0x3d0] sm:$0xff]
    %v4335 = vld [vmem:[#allocation4 + $0x3d8] sm:$0xff]
    %v4336 = vld [vmem:[#allocation4 + $0x3e0] sm:$0xff]
    %v4337 = vld [vmem:[#allocation4 + $0x3e8] sm:$0xff]
    %v4338 = vld [vmem:[#allocation4 + $0x3f0] sm:$0xff]
    %v4339 = vld [vmem:[#allocation4 + $0x3f8] sm:$0xff]
    %v4340 = vld [vmem:[#allocation4 + $0x400] sm:$0xff]
    %v4341 = vld [vmem:[#allocation4 + $0x408] sm:$0xff]
    %v4342 = vld [vmem:[#allocation4 + $0x410] sm:$0xff]
    %v4343 = vld [vmem:[#allocation4 + $0x418] sm:$0xff]
    %v4344 = vld [vmem:[#allocation4 + $0x420] sm:$0xff]
    %v4345 = vld [vmem:[#allocation4 + $0x428] sm:$0xff]
    %v4346 = vld [vmem:[#allocation4 + $0x430] sm:$0xff]
    %v4347 = vld [vmem:[#allocation4 + $0x438] sm:$0xff]
    %v4348 = vld [vmem:[#allocation4 + $0x440] sm:$0xff]
    %v4349 = vld [vmem:[#allocation4 + $0x448] sm:$0xff]
    %v4350 = vld [vmem:[#allocation4 + $0x450] sm:$0xff]
    %v4351 = vld [vmem:[#allocation4 + $0x458] sm:$0xff]
    %v4352 = vld [vmem:[#allocation4 + $0x460] sm:$0xff]
    %v4353 = vld [vmem:[#allocation4 + $0x468] sm:$0xff]
    %v4354 = vld [vmem:[#allocation4 + $0x470] sm:$0xff]
    %v4355 = vld [vmem:[#allocation4 + $0x478] sm:$0xff]
    %v4356 = vld [vmem:[#allocation4 + $0x480] sm:$0xff]
    %v4357 = vld [vmem:[#allocation4 + $0x488] sm:$0xff]
    %v4358 = vld [vmem:[#allocation4 + $0x490] sm:$0xff]
    %v4359 = vld [vmem:[#allocation4 + $0x498] sm:$0xff]
    %v4360 = vld [vmem:[#allocation4 + $0x4a0] sm:$0xff]
    %v4361 = vld [vmem:[#allocation4 + $0x4a8] sm:$0xff]
    %v4362 = vld [vmem:[#allocation4 + $0x4b0] sm:$0xff]
    %v4363 = vld [vmem:[#allocation4 + $0x4b8] sm:$0xff]
    %v4364 = vld [vmem:[#allocation4 + $0x4c0] sm:$0xff]
    %v4365 = vld [vmem:[#allocation4 + $0x4c8] sm:$0xff]
    %v4366 = vld [vmem:[#allocation4 + $0x4d0] sm:$0xff]
    %v4367 = vld [vmem:[#allocation4 + $0x4d8] sm:$0xff]
    %v4368 = vld [vmem:[#allocation4 + $0x4e0] sm:$0xff]
    %v4369 = vld [vmem:[#allocation4 + $0x4e8] sm:$0xff]
    %v4370 = vld [vmem:[#allocation4 + $0x4f0] sm:$0xff]
    %v4371 = vld [vmem:[#allocation4 + $0x4f8] sm:$0xff]
    %v4372 = vld [vmem:[#allocation4 + $0x500] sm:$0xff]
    %v4373 = vld [vmem:[#allocation4 + $0x508] sm:$0xff]
    %v4374 = vld [vmem:[#allocation4 + $0x510] sm:$0xff]
    %v4375 = vld [vmem:[#allocation4 + $0x518] sm:$0xff]
    %v4376 = vld [vmem:[#allocation4 + $0x520] sm:$0xff]
    %v4377 = vld [vmem:[#allocation4 + $0x528] sm:$0xff]
    %v4378 = vld [vmem:[#allocation4 + $0x530] sm:$0xff]
    %v4379 = vld [vmem:[#allocation4 + $0x538] sm:$0xff]
    %v4380 = vld [vmem:[#allocation4 + $0x540] sm:$0xff]
    %v4381 = vld [vmem:[#allocation4 + $0x548] sm:$0xff]
    %v4382 = vld [vmem:[#allocation4 + $0x550] sm:$0xff]
    %v4383 = vld [vmem:[#allocation4 + $0x558] sm:$0xff]
    %v4384 = vld [vmem:[#allocation4 + $0x560] sm:$0xff]
    %v4385 = vld [vmem:[#allocation4 + $0x568] sm:$0xff]
    %v4386 = vld [vmem:[#allocation4 + $0x570] sm:$0xff]
    %v4387 = vld [vmem:[#allocation4 + $0x578] sm:$0xff]
    %v4388 = vld [vmem:[#allocation4 + $0x580] sm:$0xff]
    %v4389 = vld [vmem:[#allocation4 + $0x588] sm:$0xff]
    %v4390 = vld [vmem:[#allocation4 + $0x590] sm:$0xff]
    %v4391 = vld [vmem:[#allocation4 + $0x598] sm:$0xff]
    %v4392 = vld [vmem:[#allocation4 + $0x5a0] sm:$0xff]
    %v4393 = vld [vmem:[#allocation4 + $0x5a8] sm:$0xff]
    %v4394 = vld [vmem:[#allocation4 + $0x5b0] sm:$0xff]
    %v4395 = vld [vmem:[#allocation4 + $0x5b8] sm:$0xff]
    %v4396 = vld [vmem:[#allocation4 + $0x5c0] sm:$0xff]
    %v4397 = vld [vmem:[#allocation4 + $0x5c8] sm:$0xff]
    %v4398 = vld [vmem:[#allocation4 + $0x5d0] sm:$0xff]
    %v4399 = vld [vmem:[#allocation4 + $0x5d8] sm:$0xff]
    %v4400 = vld [vmem:[#allocation4 + $0x5e0] sm:$0xff]
    %v4401 = vld [vmem:[#allocation4 + $0x5e8] sm:$0xff]
    %v4402 = vld [vmem:[#allocation4 + $0x5f0] sm:$0xff]
    %v4403 = vld [vmem:[#allocation4 + $0x5f8] sm:$0xff]
    %v4404 = vld [vmem:[#allocation4 + $0x600] sm:$0xff]
    %v4405 = vld [vmem:[#allocation4 + $0x608] sm:$0xff]
    %v4406 = vld [vmem:[#allocation4 + $0x610] sm:$0xff]
    %v4407 = vld [vmem:[#allocation4 + $0x618] sm:$0xff]
    %v4408 = vld [vmem:[#allocation4 + $0x620] sm:$0xff]
    %v4409 = vld [vmem:[#allocation4 + $0x628] sm:$0xff]
    %v4410 = vld [vmem:[#allocation4 + $0x630] sm:$0xff]
    %v4411 = vld [vmem:[#allocation4 + $0x638] sm:$0xff]
    %v4412 = vld [vmem:[#allocation4 + $0x640] sm:$0xff]
    %v4413 = vld [vmem:[#allocation4 + $0x648] sm:$0xff]
    %v4414 = vld [vmem:[#allocation4 + $0x650] sm:$0xff]
    %v4415 = vld [vmem:[#allocation4 + $0x658] sm:$0xff]
    %v4416 = vld [vmem:[#allocation4 + $0x660] sm:$0xff]
    %v4417 = vld [vmem:[#allocation4 + $0x668] sm:$0xff]
    %v4418 = vld [vmem:[#allocation4 + $0x670] sm:$0xff]
    %v4419 = vld [vmem:[#allocation4 + $0x678] sm:$0xff]
    %v4420 = vld [vmem:[#allocation4 + $0x680] sm:$0xff]
    %v4421 = vld [vmem:[#allocation4 + $0x688] sm:$0xff]
    %v4422 = vld [vmem:[#allocation4 + $0x690] sm:$0xff]
    %v4423 = vld [vmem:[#allocation4 + $0x698] sm:$0xff]
    %v4424 = vld [vmem:[#allocation4 + $0x6a0] sm:$0xff]
    %v4425 = vld [vmem:[#allocation4 + $0x6a8] sm:$0xff]
    %v4426 = vld [vmem:[#allocation4 + $0x6b0] sm:$0xff]
    %v4427 = vld [vmem:[#allocation4 + $0x6b8] sm:$0xff]
    %v4428 = vld [vmem:[#allocation4 + $0x6c0] sm:$0xff]
    %v4429 = vld [vmem:[#allocation4 + $0x6c8] sm:$0xff]
    %v4430 = vld [vmem:[#allocation4 + $0x6d0] sm:$0xff]
    %v4431 = vld [vmem:[#allocation4 + $0x6d8] sm:$0xff]
    %v4432 = vld [vmem:[#allocation4 + $0x6e0] sm:$0xff]
    %v4433 = vld [vmem:[#allocation4 + $0x6e8] sm:$0xff]
    %v4434 = vld [vmem:[#allocation4 + $0x6f0] sm:$0xff]
    %v4435 = vld [vmem:[#allocation4 + $0x6f8] sm:$0xff]
    %v4436 = vld [vmem:[#allocation4 + $0x700] sm:$0xff]
    %v4437 = vld [vmem:[#allocation4 + $0x708] sm:$0xff]
    %v4438 = vld [vmem:[#allocation4 + $0x710] sm:$0xff]
    %v4439 = vld [vmem:[#allocation4 + $0x718] sm:$0xff]
    %v4440 = vld [vmem:[#allocation4 + $0x720] sm:$0xff]
    %v4441 = vld [vmem:[#allocation4 + $0x728] sm:$0xff]
    %v4442 = vld [vmem:[#allocation4 + $0x730] sm:$0xff]
    %v4443 = vld [vmem:[#allocation4 + $0x738] sm:$0xff]
    %v4444 = vld [vmem:[#allocation4 + $0x740] sm:$0xff]
    %v4445 = vld [vmem:[#allocation4 + $0x748] sm:$0xff]
    %v4446 = vld [vmem:[#allocation4 + $0x750] sm:$0xff]
    %v4447 = vld [vmem:[#allocation4 + $0x758] sm:$0xff]
    %v4448 = vld [vmem:[#allocation4 + $0x760] sm:$0xff]
    %v4449 = vld [vmem:[#allocation4 + $0x768] sm:$0xff]
    %v4450 = vld [vmem:[#allocation4 + $0x770] sm:$0xff]
    %v4451 = vld [vmem:[#allocation4 + $0x778] sm:$0xff]
    %v4452 = vld [vmem:[#allocation4 + $0x780] sm:$0xff]
    %v4453 = vld [vmem:[#allocation4 + $0x788] sm:$0xff]
    %v4454 = vld [vmem:[#allocation4 + $0x790] sm:$0xff]
    %v4455 = vld [vmem:[#allocation4 + $0x798] sm:$0xff]
    %v4456 = vld [vmem:[#allocation4 + $0x7a0] sm:$0xff]
    %v4457 = vld [vmem:[#allocation4 + $0x7a8] sm:$0xff]
    %v4458 = vld [vmem:[#allocation4 + $0x7b0] sm:$0xff]
    %v4459 = vld [vmem:[#allocation4 + $0x7b8] sm:$0xff]
    %v4460 = vld [vmem:[#allocation4 + $0x7c0] sm:$0xff]
    %v4461 = vld [vmem:[#allocation4 + $0x7c8] sm:$0xff]
    %v4462 = vld [vmem:[#allocation4 + $0x7d0] sm:$0xff]
    %v4463 = vld [vmem:[#allocation4 + $0x7d8] sm:$0xff]
    %v4464 = vld [vmem:[#allocation4 + $0x7e0] sm:$0xff]
    %v4465 = vld [vmem:[#allocation4 + $0x7e8] sm:$0xff]
    %v4466 = vld [vmem:[#allocation4 + $0x7f0] sm:$0xff]
    %v4467 = vld [vmem:[#allocation4 + $0x7f8] sm:$0xff]
    %v4468 = vld [vmem:[%s6] sm:$0xf]
    %v4485 = vunpack.c.l.b16 %v4196
    %v4486 = vunpack.c.l.b16 %v4197
    %v4487 = vunpack.c.l.b16 %v4198
    %v4488 = vunpack.c.l.b16 %v4199
    %v4489 = vunpack.c.l.b16 %v4200
    %v4490 = vunpack.c.l.b16 %v4201
    %v4491 = vunpack.c.l.b16 %v4202
    %v4492 = vunpack.c.l.b16 %v4203
    %v4493 = vunpack.c.l.b16 %v4204
    %v4494 = vunpack.c.l.b16 %v4205
    %v4495 = vunpack.c.l.b16 %v4206
    %v4496 = vunpack.c.l.b16 %v4207
    %v4497 = vunpack.c.l.b16 %v4208
    %v4498 = vunpack.c.l.b16 %v4209
    %v4499 = vunpack.c.l.b16 %v4210
    %v4500 = vunpack.c.l.b16 %v4211
    %v4501 = vrot.slane %v4493, 7
    %v4502 = vsel %vm3205, %v4501, %v4485
    %v4503 = vrot.slane %v4494, 7
    %v4504 = vsel %vm3205, %v4503, %v4486
    %v4505 = vrot.slane %v4495, 7
    %v4506 = vsel %vm3205, %v4505, %v4487
    %v4507 = vrot.slane %v4496, 7
    %v4508 = vsel %vm3205, %v4507, %v4488
    %v4509 = vrot.slane %v4497, 7
    %v4510 = vsel %vm3205, %v4509, %v4489
    %v4511 = vrot.slane %v4498, 7
    %v4512 = vsel %vm3205, %v4511, %v4490
    %v4513 = vrot.slane %v4499, 7
    %v4514 = vsel %vm3205, %v4513, %v4491
    %v4515 = vrot.slane %v4500, 7
    %v4516 = vsel %vm3205, %v4515, %v4492
    %v4517 = vpack.c.b16 %v4502, %v4502
    %v4518 = vpack.c.b16 %v4504, %v4504
    %v4519 = vpack.c.b16 %v4506, %v4506
    %v4520 = vpack.c.b16 %v4508, %v4508
    %v4521 = vpack.c.b16 %v4510, %v4510
    %v4522 = vpack.c.b16 %v4512, %v4512
    %v4523 = vpack.c.b16 %v4514, %v4514
    %v4524 = vpack.c.b16 %v4516, %v4516
    %v4534 = vcombine.low %v4468, %v4468
    %v4536 = vunpack.c.l.s4 1966171168
    %v4537 = vunpack.c.0.s8 %v4536
    %v4538 = vlaneseq
    %v4539 = vshrl.u32 %v4538, 7
    %v4540 = vsub.s32 %v4537, %v4539
    %v4541 = vrot.slane %v4534, %v4540
    %v4542 = vcombine.high %v4541, %v4541
    %v4544 = vunpack.c.l.s4 1966171168
    %v4545 = vunpack.c.0.s8 %v4544
    %v4546 = vlaneseq
    %v4547 = vshrl.u32 %v4546, 7
    %v4548 = vsub.s32 %v4545, %v4547
    %v4549 = vrot.slane %v4541, %v4548
    %v4551 = vunpack.c.l.s4 1966171168
    %v4552 = vunpack.c.0.s8 %v4551
    %v4553 = vlaneseq
    %v4554 = vshrl.u32 %v4553, 7
    %v4555 = vsub.s32 %v4552, %v4554
    %v4556 = vrot.slane %v4542, %v4555
    %v4557 = vcombine.high %v4549, %v4549
    %v4558 = vcombine.high %v4556, %v4556
    %4563 = vmatprep.subr.bf16.mxu0 %v4213
    %4564 = vmatpush1.bf16.msra.mxu0 %v4212
    %4565 = vmatprep.subr.bf16.mxu0 %v4217
    %4566 = vmatpush1.bf16.msra.mxu0 %v4216
    %4567 = vmatprep.subr.bf16.mxu0 %v4221
    %4568 = vmatpush1.bf16.msra.mxu0 %v4220
    %4569 = vmatprep.subr.bf16.mxu0 %v4225
    %4570 = vmatpush1.bf16.msra.mxu0 %v4224
    %4571 = vmatprep.subr.bf16.mxu0 %v4229
    %4572 = vmatpush1.bf16.msra.mxu0 %v4228
    %4573 = vmatprep.subr.bf16.mxu0 %v4233
    %4574 = vmatpush1.bf16.msra.mxu0 %v4232
    %4575 = vmatprep.subr.bf16.mxu0 %v4237
    %4576 = vmatpush1.bf16.msra.mxu0 %v4236
    %4577 = vmatprep.subr.bf16.mxu0 %v4241
    %4578 = vmatpush1.bf16.msra.mxu0 %v4240
    %4579 = vmatprep.subr.bf16.mxu0 %v4245
    %4580 = vmatpush1.bf16.msra.mxu0 %v4244
    %4581 = vmatprep.subr.bf16.mxu0 %v4249
    %4582 = vmatpush1.bf16.msra.mxu0 %v4248
    %4583 = vmatprep.subr.bf16.mxu0 %v4253
    %4584 = vmatpush1.bf16.msra.mxu0 %v4252
    %4585 = vmatprep.subr.bf16.mxu0 %v4257
    %4586 = vmatpush1.bf16.msra.mxu0 %v4256
    %4587 = vmatprep.subr.bf16.mxu0 %v4261
    %4588 = vmatpush1.bf16.msra.mxu0 %v4260
    %4589 = vmatprep.subr.bf16.mxu0 %v4265
    %4590 = vmatpush1.bf16.msra.mxu0 %v4264
    %4591 = vmatprep.subr.bf16.mxu0 %v4269
    %4592 = vmatpush1.bf16.msra.mxu0 %v4268
    %4593 = vmatprep.subr.bf16.mxu0 %v4273
    %4594 = vmatpush1.bf16.msra.mxu0 %v4272
    %4595 = vmatprep.mubr.bf16.mxu0 %v4518
    %4596 = vmatmul.mubr.bf16.gmra.mrb[0].mxu0 %v4517
    %v4597 = vpop.f32.mrb[0].mxu0
    %v4598 = vadd.f32 %v4549, %v4597
    %v4599 = vpop.f32.mrb[0].mxu0
    %v4600 = vadd.f32 %v4556, %v4599
    %v4601 = vpop.f32.mrb[0].mxu0
    %v4602 = vpop.f32.mrb[0].mxu0
    %4603 = vdwg.mxu0
    %4604 = vmatprep.subr.bf16.mxu0 %v4277
    %4605 = vmatpush1.bf16.msra.mxu0 %v4276
    %4606 = vmatprep.subr.bf16.mxu0 %v4281
    %4607 = vmatpush1.bf16.msra.mxu0 %v4280
    %4608 = vmatprep.subr.bf16.mxu0 %v4285
    %4609 = vmatpush1.bf16.msra.mxu0 %v4284
    %4610 = vmatprep.subr.bf16.mxu0 %v4289
    %4611 = vmatpush1.bf16.msra.mxu0 %v4288
    %4612 = vmatprep.subr.bf16.mxu0 %v4293
    %4613 = vmatpush1.bf16.msra.mxu0 %v4292
    %4614 = vmatprep.subr.bf16.mxu0 %v4297
    %4615 = vmatpush1.bf16.msra.mxu0 %v4296
    %4616 = vmatprep.subr.bf16.mxu0 %v4301
    %4617 = vmatpush1.bf16.msra.mxu0 %v4300
    %4618 = vmatprep.subr.bf16.mxu0 %v4305
    %4619 = vmatpush1.bf16.msra.mxu0 %v4304
    %4620 = vmatprep.subr.bf16.mxu0 %v4309
    %4621 = vmatpush1.bf16.msra.mxu0 %v4308
    %4622 = vmatprep.subr.bf16.mxu0 %v4313
    %4623 = vmatpush1.bf16.msra.mxu0 %v4312
    %4624 = vmatprep.subr.bf16.mxu0 %v4317
    %4625 = vmatpush1.bf16.msra.mxu0 %v4316
    %4626 = vmatprep.subr.bf16.mxu0 %v4321
    %4627 = vmatpush1.bf16.msra.mxu0 %v4320
    %4628 = vmatprep.subr.bf16.mxu0 %v4325
    %4629 = vmatpush1.bf16.msra.mxu0 %v4324
    %4630 = vmatprep.subr.bf16.mxu0 %v4329
    %4631 = vmatpush1.bf16.msra.mxu0 %v4328
    %4632 = vmatprep.subr.bf16.mxu0 %v4333
    %4633 = vmatpush1.bf16.msra.mxu0 %v4332
    %4634 = vmatprep.subr.bf16.mxu0 %v4337
    %4635 = vmatpush1.bf16.msra.mxu0 %v4336
    %4636 = vmatprep.mubr.bf16.mxu0 %v4520
    %4637 = vmatmul.mubr.bf16.gmra.mrb[0].mxu0 %v4519
    %v4638 = vpop.f32.mrb[0].mxu0
    %v4639 = vadd.f32 %v4598, %v4638
    %v4640 = vpop.f32.mrb[0].mxu0
    %v4641 = vadd.f32 %v4600, %v4640
    %v4642 = vpop.f32.mrb[0].mxu0
    %v4643 = vpop.f32.mrb[0].mxu0
    %4644 = vdwg.mxu0
    %4645 = vmatprep.subr.bf16.mxu0 %v4341
    %4646 = vmatpush1.bf16.msra.mxu0 %v4340
    %4647 = vmatprep.subr.bf16.mxu0 %v4345
    %4648 = vmatpush1.bf16.msra.mxu0 %v4344
    %4649 = vmatprep.subr.bf16.mxu0 %v4349
    %4650 = vmatpush1.bf16.msra.mxu0 %v4348
    %4651 = vmatprep.subr.bf16.mxu0 %v4353
    %4652 = vmatpush1.bf16.msra.mxu0 %v4352
    %4653 = vmatprep.subr.bf16.mxu0 %v4357
    %4654 = vmatpush1.bf16.msra.mxu0 %v4356
    %4655 = vmatprep.subr.bf16.mxu0 %v4361
    %4656 = vmatpush1.bf16.msra.mxu0 %v4360
    %4657 = vmatprep.subr.bf16.mxu0 %v4365
    %4658 = vmatpush1.bf16.msra.mxu0 %v4364
    %4659 = vmatprep.subr.bf16.mxu0 %v4369
    %4660 = vmatpush1.bf16.msra.mxu0 %v4368
    %4661 = vmatprep.subr.bf16.mxu0 %v4373
    %4662 = vmatpush1.bf16.msra.mxu0 %v4372
    %4663 = vmatprep.subr.bf16.mxu0 %v4377
    %4664 = vmatpush1.bf16.msra.mxu0 %v4376
    %4665 = vmatprep.subr.bf16.mxu0 %v4381
    %4666 = vmatpush1.bf16.msra.mxu0 %v4380
    %4667 = vmatprep.subr.bf16.mxu0 %v4385
    %4668 = vmatpush1.bf16.msra.mxu0 %v4384
    %4669 = vmatprep.subr.bf16.mxu0 %v4389
    %4670 = vmatpush1.bf16.msra.mxu0 %v4388
    %4671 = vmatprep.subr.bf16.mxu0 %v4393
    %4672 = vmatpush1.bf16.msra.mxu0 %v4392
    %4673 = vmatprep.subr.bf16.mxu0 %v4397
    %4674 = vmatpush1.bf16.msra.mxu0 %v4396
    %4675 = vmatprep.subr.bf16.mxu0 %v4401
    %4676 = vmatpush1.bf16.msra.mxu0 %v4400
    %4677 = vmatprep.mubr.bf16.mxu0 %v4522
    %4678 = vmatmul.mubr.bf16.gmra.mrb[0].mxu0 %v4521
    %v4679 = vpop.f32.mrb[0].mxu0
    %v4680 = vadd.f32 %v4639, %v4679
    %v4681 = vpop.f32.mrb[0].mxu0
    %v4682 = vadd.f32 %v4641, %v4681
    %v4683 = vpop.f32.mrb[0].mxu0
    %v4684 = vpop.f32.mrb[0].mxu0
    %4685 = vdwg.mxu0
    %4686 = vmatprep.subr.bf16.mxu0 %v4405
    %4687 = vmatpush1.bf16.msra.mxu0 %v4404
    %4688 = vmatprep.subr.bf16.mxu0 %v4409
    %4689 = vmatpush1.bf16.msra.mxu0 %v4408
    %4690 = vmatprep.subr.bf16.mxu0 %v4413
    %4691 = vmatpush1.bf16.msra.mxu0 %v4412
    %4692 = vmatprep.subr.bf16.mxu0 %v4417
    %4693 = vmatpush1.bf16.msra.mxu0 %v4416
    %4694 = vmatprep.subr.bf16.mxu0 %v4421
    %4695 = vmatpush1.bf16.msra.mxu0 %v4420
    %4696 = vmatprep.subr.bf16.mxu0 %v4425
    %4697 = vmatpush1.bf16.msra.mxu0 %v4424
    %4698 = vmatprep.subr.bf16.mxu0 %v4429
    %4699 = vmatpush1.bf16.msra.mxu0 %v4428
    %4700 = vmatprep.subr.bf16.mxu0 %v4433
    %4701 = vmatpush1.bf16.msra.mxu0 %v4432
    %4702 = vmatprep.subr.bf16.mxu0 %v4437
    %4703 = vmatpush1.bf16.msra.mxu0 %v4436
    %4704 = vmatprep.subr.bf16.mxu0 %v4441
    %4705 = vmatpush1.bf16.msra.mxu0 %v4440
    %4706 = vmatprep.subr.bf16.mxu0 %v4445
    %4707 = vmatpush1.bf16.msra.mxu0 %v4444
    %4708 = vmatprep.subr.bf16.mxu0 %v4449
    %4709 = vmatpush1.bf16.msra.mxu0 %v4448
    %4710 = vmatprep.subr.bf16.mxu0 %v4453
    %4711 = vmatpush1.bf16.msra.mxu0 %v4452
    %4712 = vmatprep.subr.bf16.mxu0 %v4457
    %4713 = vmatpush1.bf16.msra.mxu0 %v4456
    %4714 = vmatprep.subr.bf16.mxu0 %v4461
    %4715 = vmatpush1.bf16.msra.mxu0 %v4460
    %4716 = vmatprep.subr.bf16.mxu0 %v4465
    %4717 = vmatpush1.bf16.msra.mxu0 %v4464
    %4718 = vmatprep.mubr.bf16.mxu0 %v4524
    %4719 = vmatmul.mubr.bf16.gmra.mrb[0].mxu0 %v4523
    %v4720 = vpop.f32.mrb[0].mxu0
    %v4721 = vadd.f32 %v4680, %v4720
    %v4722 = vpop.f32.mrb[0].mxu0
    %v4723 = vadd.f32 %v4682, %v4722
    %v4724 = vpop.f32.mrb[0].mxu0
    %v4725 = vpop.f32.mrb[0].mxu0
    %4726 = vdwg.mxu0
    %4727 = vmatprep.subr.bf16.mxu0 %v4215
    %4728 = vmatpush1.bf16.msra.mxu0 %v4214
    %4729 = vmatprep.subr.bf16.mxu0 %v4219
    %4730 = vmatpush1.bf16.msra.mxu0 %v4218
    %4731 = vmatprep.subr.bf16.mxu0 %v4223
    %4732 = vmatpush1.bf16.msra.mxu0 %v4222
    %4733 = vmatprep.subr.bf16.mxu0 %v4227
    %4734 = vmatpush1.bf16.msra.mxu0 %v4226
    %4735 = vmatprep.subr.bf16.mxu0 %v4231
    %4736 = vmatpush1.bf16.msra.mxu0 %v4230
    %4737 = vmatprep.subr.bf16.mxu0 %v4235
    %4738 = vmatpush1.bf16.msra.mxu0 %v4234
    %4739 = vmatprep.subr.bf16.mxu0 %v4239
    %4740 = vmatpush1.bf16.msra.mxu0 %v4238
    %4741 = vmatprep.subr.bf16.mxu0 %v4243
    %4742 = vmatpush1.bf16.msra.mxu0 %v4242
    %4743 = vmatprep.subr.bf16.mxu0 %v4247
    %4744 = vmatpush1.bf16.msra.mxu0 %v4246
    %4745 = vmatprep.subr.bf16.mxu0 %v4251
    %4746 = vmatpush1.bf16.msra.mxu0 %v4250
    %4747 = vmatprep.subr.bf16.mxu0 %v4255
    %4748 = vmatpush1.bf16.msra.mxu0 %v4254
    %4749 = vmatprep.subr.bf16.mxu0 %v4259
    %4750 = vmatpush1.bf16.msra.mxu0 %v4258
    %4751 = vmatprep.subr.bf16.mxu0 %v4263
    %4752 = vmatpush1.bf16.msra.mxu0 %v4262
    %4753 = vmatprep.subr.bf16.mxu0 %v4267
    %4754 = vmatpush1.bf16.msra.mxu0 %v4266
    %4755 = vmatprep.subr.bf16.mxu0 %v4271
    %4756 = vmatpush1.bf16.msra.mxu0 %v4270
    %4757 = vmatprep.subr.bf16.mxu0 %v4275
    %4758 = vmatpush1.bf16.msra.mxu0 %v4274
    %4759 = vmatprep.mubr.bf16.mxu0 %v4518
    %4760 = vmatmul.mubr.bf16.gmra.mrb[0].mxu0 %v4517
    %v4761 = vpop.f32.mrb[0].mxu0
    %v4762 = vadd.f32 %v4557, %v4761
    %v4763 = vpop.f32.mrb[0].mxu0
    %v4764 = vadd.f32 %v4558, %v4763
    %v4765 = vpop.f32.mrb[0].mxu0
    %v4766 = vpop.f32.mrb[0].mxu0
    %4767 = vdwg.mxu0
    %4768 = vmatprep.subr.bf16.mxu0 %v4279
    %4769 = vmatpush1.bf16.msra.mxu0 %v4278
    %4770 = vmatprep.subr.bf16.mxu0 %v4283
    %4771 = vmatpush1.bf16.msra.mxu0 %v4282
    %4772 = vmatprep.subr.bf16.mxu0 %v4287
    %4773 = vmatpush1.bf16.msra.mxu0 %v4286
    %4774 = vmatprep.subr.bf16.mxu0 %v4291
    %4775 = vmatpush1.bf16.msra.mxu0 %v4290
    %4776 = vmatprep.subr.bf16.mxu0 %v4295
    %4777 = vmatpush1.bf16.msra.mxu0 %v4294
    %4778 = vmatprep.subr.bf16.mxu0 %v4299
    %4779 = vmatpush1.bf16.msra.mxu0 %v4298
    %4780 = vmatprep.subr.bf16.mxu0 %v4303
    %4781 = vmatpush1.bf16.msra.mxu0 %v4302
    %4782 = vmatprep.subr.bf16.mxu0 %v4307
    %4783 = vmatpush1.bf16.msra.mxu0 %v4306
    %4784 = vmatprep.subr.bf16.mxu0 %v4311
    %4785 = vmatpush1.bf16.msra.mxu0 %v4310
    %4786 = vmatprep.subr.bf16.mxu0 %v4315
    %4787 = vmatpush1.bf16.msra.mxu0 %v4314
    %4788 = vmatprep.subr.bf16.mxu0 %v4319
    %4789 = vmatpush1.bf16.msra.mxu0 %v4318
    %4790 = vmatprep.subr.bf16.mxu0 %v4323
    %4791 = vmatpush1.bf16.msra.mxu0 %v4322
    %4792 = vmatprep.subr.bf16.mxu0 %v4327
    %4793 = vmatpush1.bf16.msra.mxu0 %v4326
    %4794 = vmatprep.subr.bf16.mxu0 %v4331
    %4795 = vmatpush1.bf16.msra.mxu0 %v4330
    %4796 = vmatprep.subr.bf16.mxu0 %v4335
    %4797 = vmatpush1.bf16.msra.mxu0 %v4334
    %4798 = vmatprep.subr.bf16.mxu0 %v4339
    %4799 = vmatpush1.bf16.msra.mxu0 %v4338
    %4800 = vmatprep.mubr.bf16.mxu0 %v4520
    %4801 = vmatmul.mubr.bf16.gmra.mrb[0].mxu0 %v4519
    %v4802 = vpop.f32.mrb[0].mxu0
    %v4803 = vadd.f32 %v4762, %v4802
    %v4804 = vpop.f32.mrb[0].mxu0
    %v4805 = vadd.f32 %v4764, %v4804
    %v4806 = vpop.f32.mrb[0].mxu0
    %v4807 = vpop.f32.mrb[0].mxu0
    %4808 = vdwg.mxu0
    %4809 = vmatprep.subr.bf16.mxu0 %v4343
    %4810 = vmatpush1.bf16.msra.mxu0 %v4342
    %4811 = vmatprep.subr.bf16.mxu0 %v4347
    %4812 = vmatpush1.bf16.msra.mxu0 %v4346
    %4813 = vmatprep.subr.bf16.mxu0 %v4351
    %4814 = vmatpush1.bf16.msra.mxu0 %v4350
    %4815 = vmatprep.subr.bf16.mxu0 %v4355
    %4816 = vmatpush1.bf16.msra.mxu0 %v4354
    %4817 = vmatprep.subr.bf16.mxu0 %v4359
    %4818 = vmatpush1.bf16.msra.mxu0 %v4358
    %4819 = vmatprep.subr.bf16.mxu0 %v4363
    %4820 = vmatpush1.bf16.msra.mxu0 %v4362
    %4821 = vmatprep.subr.bf16.mxu0 %v4367
    %4822 = vmatpush1.bf16.msra.mxu0 %v4366
    %4823 = vmatprep.subr.bf16.mxu0 %v4371
    %4824 = vmatpush1.bf16.msra.mxu0 %v4370
    %4825 = vmatprep.subr.bf16.mxu0 %v4375
    %4826 = vmatpush1.bf16.msra.mxu0 %v4374
    %4827 = vmatprep.subr.bf16.mxu0 %v4379
    %4828 = vmatpush1.bf16.msra.mxu0 %v4378
    %4829 = vmatprep.subr.bf16.mxu0 %v4383
    %4830 = vmatpush1.bf16.msra.mxu0 %v4382
    %4831 = vmatprep.subr.bf16.mxu0 %v4387
    %4832 = vmatpush1.bf16.msra.mxu0 %v4386
    %4833 = vmatprep.subr.bf16.mxu0 %v4391
    %4834 = vmatpush1.bf16.msra.mxu0 %v4390
    %4835 = vmatprep.subr.bf16.mxu0 %v4395
    %4836 = vmatpush1.bf16.msra.mxu0 %v4394
    %4837 = vmatprep.subr.bf16.mxu0 %v4399
    %4838 = vmatpush1.bf16.msra.mxu0 %v4398
    %4839 = vmatprep.subr.bf16.mxu0 %v4403
    %4840 = vmatpush1.bf16.msra.mxu0 %v4402
    %4841 = vmatprep.mubr.bf16.mxu0 %v4522
    %4842 = vmatmul.mubr.bf16.gmra.mrb[0].mxu0 %v4521
    %v4843 = vpop.f32.mrb[0].mxu0
    %v4844 = vadd.f32 %v4803, %v4843
    %v4845 = vpop.f32.mrb[0].mxu0
    %v4846 = vadd.f32 %v4805, %v4845
    %v4847 = vpop.f32.mrb[0].mxu0
    %v4848 = vpop.f32.mrb[0].mxu0
    %4849 = vdwg.mxu0
    %4850 = vmatprep.subr.bf16.mxu0 %v4407
    %4851 = vmatpush1.bf16.msra.mxu0 %v4406
    %4852 = vmatprep.subr.bf16.mxu0 %v4411
    %4853 = vmatpush1.bf16.msra.mxu0 %v4410
    %4854 = vmatprep.subr.bf16.mxu0 %v4415
    %4855 = vmatpush1.bf16.msra.mxu0 %v4414
    %4856 = vmatprep.subr.bf16.mxu0 %v4419
    %4857 = vmatpush1.bf16.msra.mxu0 %v4418
    %4858 = vmatprep.subr.bf16.mxu0 %v4423
    %4859 = vmatpush1.bf16.msra.mxu0 %v4422
    %4860 = vmatprep.subr.bf16.mxu0 %v4427
    %4861 = vmatpush1.bf16.msra.mxu0 %v4426
    %4862 = vmatprep.subr.bf16.mxu0 %v4431
    %4863 = vmatpush1.bf16.msra.mxu0 %v4430
    %4864 = vmatprep.subr.bf16.mxu0 %v4435
    %4865 = vmatpush1.bf16.msra.mxu0 %v4434
    %4866 = vmatprep.subr.bf16.mxu0 %v4439
    %4867 = vmatpush1.bf16.msra.mxu0 %v4438
    %4868 = vmatprep.subr.bf16.mxu0 %v4443
    %4869 = vmatpush1.bf16.msra.mxu0 %v4442
    %4870 = vmatprep.subr.bf16.mxu0 %v4447
    %4871 = vmatpush1.bf16.msra.mxu0 %v4446
    %4872 = vmatprep.subr.bf16.mxu0 %v4451
    %4873 = vmatpush1.bf16.msra.mxu0 %v4450
    %4874 = vmatprep.subr.bf16.mxu0 %v4455
    %4875 = vmatpush1.bf16.msra.mxu0 %v4454
    %4876 = vmatprep.subr.bf16.mxu0 %v4459
    %4877 = vmatpush1.bf16.msra.mxu0 %v4458
    %4878 = vmatprep.subr.bf16.mxu0 %v4463
    %4879 = vmatpush1.bf16.msra.mxu0 %v4462
    %4880 = vmatprep.subr.bf16.mxu0 %v4467
    %4881 = vmatpush1.bf16.msra.mxu0 %v4466
    %4882 = vmatprep.mubr.bf16.mxu0 %v4524
    %4883 = vmatmul.mubr.bf16.gmra.mrb[0].mxu0 %v4523
    %v4884 = vpop.f32.mrb[0].mxu0
    %v4885 = vadd.f32 %v4844, %v4884
    %v4886 = vpop.f32.mrb[0].mxu0
    %v4887 = vadd.f32 %v4846, %v4886
    %v4888 = vpop.f32.mrb[0].mxu0
    %v4889 = vpop.f32.mrb[0].mxu0
    %4890 = vdwg.mxu0
    %v4895 = vcombine.low %v4721, %v4723
    %v4896 = vcombine.low %v4885, %v4887
    %v4898 = vunpack.c.l.s4 1966171168
    %v4899 = vunpack.c.0.s8 %v4898
    %v4900 = vlaneseq
    %v4901 = vshrl.u32 %v4900, 7
    %v4902 = vsub.s32 %v4899, %v4901
    %v4903 = vrot.slane %v4895, %v4902
    %v4905 = vunpack.c.l.s4 1966171168
    %v4906 = vunpack.c.0.s8 %v4905
    %v4907 = vlaneseq
    %v4908 = vshrl.u32 %v4907, 7
    %v4909 = vsub.s32 %v4906, %v4908
    %v4910 = vrot.slane %v4896, %v4909
    %v4911 = vcombine.low %v4903, %v4910
    %v4912 = vcombine.high %v4903, %v4910
    %v4914 = vunpack.c.l.s4 1966171168
    %v4915 = vunpack.c.0.s8 %v4914
    %v4916 = vlaneseq
    %v4917 = vshrl.u32 %v4916, 7
    %v4918 = vsub.s32 %v4915, %v4917
    %v4919 = vrot.slane %v4911, %v4918
    %v4921 = vunpack.c.l.s4 1966171168
    %v4922 = vunpack.c.0.s8 %v4921
    %v4923 = vlaneseq
    %v4924 = vshrl.u32 %v4923, 7
    %v4925 = vsub.s32 %v4922, %v4924
    %v4926 = vrot.slane %v4912, %v4925
    %v4929 = vmax.f32 %v4919, 0.0
    %v4930 = vmax.f32 %v4926, 0.0
    %v4933 = vlaneseq
    %v4934 = vshrl.u32 %v4933, 7
    %v4935 = vsub.s32 0, %v4934
    %v4936 = vrot.slane %v4929, %v4935
    %v4937 = vlaneseq
    %v4938 = vshrl.u32 %v4937, 7
    %v4939 = vsub.s32 1, %v4938
    %v4940 = vrot.slane %v4929, %v4939
    %v4941 = vlaneseq
    %v4942 = vshrl.u32 %v4941, 7
    %v4943 = vsub.s32 2, %v4942
    %v4944 = vrot.slane %v4929, %v4943
    %v4945 = vlaneseq
    %v4946 = vshrl.u32 %v4945, 7
    %v4947 = vsub.s32 3, %v4946
    %v4948 = vrot.slane %v4929, %v4947
    %v4949 = vlaneseq
    %v4950 = vshrl.u32 %v4949, 7
    %v4951 = vsub.s32 0, %v4950
    %v4952 = vrot.slane %v4930, %v4951
    %v4953 = vlaneseq
    %v4954 = vshrl.u32 %v4953, 7
    %v4955 = vsub.s32 1, %v4954
    %v4956 = vrot.slane %v4930, %v4955
    %v4957 = vlaneseq
    %v4958 = vshrl.u32 %v4957, 7
    %v4959 = vsub.s32 2, %v4958
    %v4960 = vrot.slane %v4930, %v4959
    %v4961 = vlaneseq
    %v4962 = vshrl.u32 %v4961, 7
    %v4963 = vsub.s32 3, %v4962
    %v4964 = vrot.slane %v4930, %v4963
    %v4973 = vpack.c.bf16 %v4936, %v4936
    %v4974 = vpack.c.bf16 %v4940, %v4940
    %v4975 = vpack.c.bf16 %v4944, %v4944
    %v4976 = vpack.c.bf16 %v4948, %v4948
    %v4977 = vpack.c.bf16 %v4952, %v4952
    %v4978 = vpack.c.bf16 %v4956, %v4956
    %v4979 = vpack.c.bf16 %v4960, %v4960
    %v4980 = vpack.c.bf16 %v4964, %v4964
    %v4981 = vld [vmem:[#allocation9] sm:$0xf]
    %v4982 = vld [vmem:[#allocation9 + $0x4] sm:$0xf]
    %v4983 = vld [vmem:[#allocation9 + $0x8] sm:$0xf]
    %v4984 = vld [vmem:[#allocation9 + $0xc] sm:$0xf]
    %v4985 = vld [vmem:[#allocation9 + $0x10] sm:$0xf]
    %v4986 = vld [vmem:[#allocation9 + $0x14] sm:$0xf]
    %v4987 = vld [vmem:[#allocation9 + $0x18] sm:$0xf]
    %v4988 = vld [vmem:[#allocation9 + $0x1c] sm:$0xf]
    %v4989 = vld [vmem:[#allocation9 + $0x20] sm:$0xf]
    %v4990 = vld [vmem:[#allocation9 + $0x24] sm:$0xf]
    %v4991 = vld [vmem:[#allocation9 + $0x28] sm:$0xf]
    %v4992 = vld [vmem:[#allocation9 + $0x2c] sm:$0xf]
    %v4993 = vld [vmem:[#allocation9 + $0x30] sm:$0xf]
    %v4994 = vld [vmem:[#allocation9 + $0x34] sm:$0xf]
    %v4995 = vld [vmem:[#allocation9 + $0x38] sm:$0xf]
    %v4996 = vld [vmem:[#allocation9 + $0x3c] sm:$0xf]
    %v4997 = vld [vmem:[#allocation9 + $0x40] sm:$0xf]
    %v4998 = vld [vmem:[#allocation9 + $0x44] sm:$0xf]
    %v4999 = vld [vmem:[#allocation9 + $0x48] sm:$0xf]
    %v5000 = vld [vmem:[#allocation9 + $0x4c] sm:$0xf]
    %v5001 = vld [vmem:[#allocation9 + $0x50] sm:$0xf]
    %v5002 = vld [vmem:[#allocation9 + $0x54] sm:$0xf]
    %v5003 = vld [vmem:[#allocation9 + $0x58] sm:$0xf]
    %v5004 = vld [vmem:[#allocation9 + $0x5c] sm:$0xf]
    %v5005 = vld [vmem:[#allocation9 + $0x60] sm:$0xf]
    %v5006 = vld [vmem:[#allocation9 + $0x64] sm:$0xf]
    %v5007 = vld [vmem:[#allocation9 + $0x68] sm:$0xf]
    %v5008 = vld [vmem:[#allocation9 + $0x6c] sm:$0xf]
    %v5009 = vld [vmem:[#allocation9 + $0x70] sm:$0xf]
    %v5010 = vld [vmem:[#allocation9 + $0x74] sm:$0xf]
    %v5011 = vld [vmem:[#allocation9 + $0x78] sm:$0xf]
    %v5012 = vld [vmem:[#allocation9 + $0x7c] sm:$0xf]
    %v5013 = vld [vmem:[#allocation9 + $0x80] sm:$0xf]
    %v5014 = vld [vmem:[#allocation9 + $0x84] sm:$0xf]
    %v5015 = vld [vmem:[#allocation9 + $0x88] sm:$0xf]
    %v5016 = vld [vmem:[#allocation9 + $0x8c] sm:$0xf]
    %v5017 = vld [vmem:[#allocation9 + $0x90] sm:$0xf]
    %v5018 = vld [vmem:[#allocation9 + $0x94] sm:$0xf]
    %v5019 = vld [vmem:[#allocation9 + $0x98] sm:$0xf]
    %v5020 = vld [vmem:[#allocation9 + $0x9c] sm:$0xf]
    %v5021 = vld [vmem:[#allocation9 + $0xa0] sm:$0xf]
    %v5022 = vld [vmem:[#allocation9 + $0xa4] sm:$0xf]
    %v5023 = vld [vmem:[#allocation9 + $0xa8] sm:$0xf]
    %v5024 = vld [vmem:[#allocation9 + $0xac] sm:$0xf]
    %v5025 = vld [vmem:[#allocation9 + $0xb0] sm:$0xf]
    %v5026 = vld [vmem:[#allocation9 + $0xb4] sm:$0xf]
    %v5027 = vld [vmem:[#allocation9 + $0xb8] sm:$0xf]
    %v5028 = vld [vmem:[#allocation9 + $0xbc] sm:$0xf]
    %v5029 = vld [vmem:[#allocation9 + $0xc0] sm:$0xf]
    %v5030 = vld [vmem:[#allocation9 + $0xc4] sm:$0xf]
    %v5031 = vld [vmem:[#allocation9 + $0xc8] sm:$0xf]
    %v5032 = vld [vmem:[#allocation9 + $0xcc] sm:$0xf]
    %v5033 = vld [vmem:[#allocation9 + $0xd0] sm:$0xf]
    %v5034 = vld [vmem:[#allocation9 + $0xd4] sm:$0xf]
    %v5035 = vld [vmem:[#allocation9 + $0xd8] sm:$0xf]
    %v5036 = vld [vmem:[#allocation9 + $0xdc] sm:$0xf]
    %v5037 = vld [vmem:[#allocation9 + $0xe0] sm:$0xf]
    %v5038 = vld [vmem:[#allocation9 + $0xe4] sm:$0xf]
    %v5039 = vld [vmem:[#allocation9 + $0xe8] sm:$0xf]
    %v5040 = vld [vmem:[#allocation9 + $0xec] sm:$0xf]
    %v5041 = vld [vmem:[#allocation9 + $0xf0] sm:$0xf]
    %v5042 = vld [vmem:[#allocation9 + $0xf4] sm:$0xf]
    %v5043 = vld [vmem:[#allocation9 + $0xf8] sm:$0xf]
    %v5044 = vld [vmem:[#allocation9 + $0xfc] sm:$0xf]
    %v5045 = vld [vmem:[%s8] sm:$0x1]
    %v5054 = vunpack.c.l.b16 %v4973
    %v5055 = vunpack.c.l.b16 %v4974
    %v5056 = vunpack.c.l.b16 %v4975
    %v5057 = vunpack.c.l.b16 %v4976
    %v5058 = vunpack.c.l.b16 %v4977
    %v5059 = vunpack.c.l.b16 %v4978
    %v5060 = vunpack.c.l.b16 %v4979
    %v5061 = vunpack.c.l.b16 %v4980
    %v5062 = vrot.slane %v5058, 7
    %v5063 = vsel %vm3205, %v5062, %v5054
    %v5064 = vrot.slane %v5059, 7
    %v5065 = vsel %vm3205, %v5064, %v5055
    %v5066 = vrot.slane %v5060, 7
    %v5067 = vsel %vm3205, %v5066, %v5056
    %v5068 = vrot.slane %v5061, 7
    %v5069 = vsel %vm3205, %v5068, %v5057
    %v5070 = vpack.c.b16 %v5063, %v5063
    %v5071 = vpack.c.b16 %v5065, %v5065
    %v5072 = vpack.c.b16 %v5067, %v5067
    %v5073 = vpack.c.b16 %v5069, %v5069
    %v5142 = vunpack.c.l.b16 %v4981
    %v5143 = vunpack.c.l.b16 %v4982
    %v5144 = vunpack.c.l.b16 %v4983
    %v5145 = vunpack.c.l.b16 %v4984
    %v5146 = vunpack.c.l.b16 %v4985
    %v5147 = vunpack.c.l.b16 %v4986
    %v5148 = vunpack.c.l.b16 %v4987
    %v5149 = vunpack.c.l.b16 %v4988
    %v5150 = vunpack.c.l.b16 %v4989
    %v5151 = vunpack.c.l.b16 %v4990
    %v5152 = vunpack.c.l.b16 %v4991
    %v5153 = vunpack.c.l.b16 %v4992
    %v5154 = vunpack.c.l.b16 %v4993
    %v5155 = vunpack.c.l.b16 %v4994
    %v5156 = vunpack.c.l.b16 %v4995
    %v5157 = vunpack.c.l.b16 %v4996
    %v5158 = vunpack.c.l.b16 %v4997
    %v5159 = vunpack.c.l.b16 %v4998
    %v5160 = vunpack.c.l.b16 %v4999
    %v5161 = vunpack.c.l.b16 %v5000
    %v5162 = vunpack.c.l.b16 %v5001
    %v5163 = vunpack.c.l.b16 %v5002
    %v5164 = vunpack.c.l.b16 %v5003
    %v5165 = vunpack.c.l.b16 %v5004
    %v5166 = vunpack.c.l.b16 %v5005
    %v5167 = vunpack.c.l.b16 %v5006
    %v5168 = vunpack.c.l.b16 %v5007
    %v5169 = vunpack.c.l.b16 %v5008
    %v5170 = vunpack.c.l.b16 %v5009
    %v5171 = vunpack.c.l.b16 %v5010
    %v5172 = vunpack.c.l.b16 %v5011
    %v5173 = vunpack.c.l.b16 %v5012
    %v5174 = vunpack.c.l.b16 %v5013
    %v5175 = vunpack.c.l.b16 %v5014
    %v5176 = vunpack.c.l.b16 %v5015
    %v5177 = vunpack.c.l.b16 %v5016
    %v5178 = vunpack.c.l.b16 %v5017
    %v5179 = vunpack.c.l.b16 %v5018
    %v5180 = vunpack.c.l.b16 %v5019
    %v5181 = vunpack.c.l.b16 %v5020
    %v5182 = vunpack.c.l.b16 %v5021
    %v5183 = vunpack.c.l.b16 %v5022
    %v5184 = vunpack.c.l.b16 %v5023
    %v5185 = vunpack.c.l.b16 %v5024
    %v5186 = vunpack.c.l.b16 %v5025
    %v5187 = vunpack.c.l.b16 %v5026
    %v5188 = vunpack.c.l.b16 %v5027
    %v5189 = vunpack.c.l.b16 %v5028
    %v5190 = vunpack.c.l.b16 %v5029
    %v5191 = vunpack.c.l.b16 %v5030
    %v5192 = vunpack.c.l.b16 %v5031
    %v5193 = vunpack.c.l.b16 %v5032
    %v5194 = vunpack.c.l.b16 %v5033
    %v5195 = vunpack.c.l.b16 %v5034
    %v5196 = vunpack.c.l.b16 %v5035
    %v5197 = vunpack.c.l.b16 %v5036
    %v5198 = vunpack.c.l.b16 %v5037
    %v5199 = vunpack.c.l.b16 %v5038
    %v5200 = vunpack.c.l.b16 %v5039
    %v5201 = vunpack.c.l.b16 %v5040
    %v5202 = vunpack.c.l.b16 %v5041
    %v5203 = vunpack.c.l.b16 %v5042
    %v5204 = vunpack.c.l.b16 %v5043
    %v5205 = vunpack.c.l.b16 %v5044
    %v5206 = vpack.c.b16 %v5143, %v5142
    %v5207 = vpack.c.b16 %v5145, %v5144
    %v5208 = vpack.c.b16 %v5147, %v5146
    %v5209 = vpack.c.b16 %v5149, %v5148
    %v5210 = vpack.c.b16 %v5151, %v5150
    %v5211 = vpack.c.b16 %v5153, %v5152
    %v5212 = vpack.c.b16 %v5155, %v5154
    %v5213 = vpack.c.b16 %v5157, %v5156
    %v5214 = vpack.c.b16 %v5159, %v5158
    %v5215 = vpack.c.b16 %v5161, %v5160
    %v5216 = vpack.c.b16 %v5163, %v5162
    %v5217 = vpack.c.b16 %v5165, %v5164
    %v5218 = vpack.c.b16 %v5167, %v5166
    %v5219 = vpack.c.b16 %v5169, %v5168
    %v5220 = vpack.c.b16 %v5171, %v5170
    %v5221 = vpack.c.b16 %v5173, %v5172
    %v5222 = vpack.c.b16 %v5175, %v5174
    %v5223 = vpack.c.b16 %v5177, %v5176
    %v5224 = vpack.c.b16 %v5179, %v5178
    %v5225 = vpack.c.b16 %v5181, %v5180
    %v5226 = vpack.c.b16 %v5183, %v5182
    %v5227 = vpack.c.b16 %v5185, %v5184
    %v5228 = vpack.c.b16 %v5187, %v5186
    %v5229 = vpack.c.b16 %v5189, %v5188
    %v5230 = vpack.c.b16 %v5191, %v5190
    %v5231 = vpack.c.b16 %v5193, %v5192
    %v5232 = vpack.c.b16 %v5195, %v5194
    %v5233 = vpack.c.b16 %v5197, %v5196
    %v5234 = vpack.c.b16 %v5199, %v5198
    %v5235 = vpack.c.b16 %v5201, %v5200
    %v5236 = vpack.c.b16 %v5203, %v5202
    %v5237 = vpack.c.b16 %v5205, %v5204
    %v5271 = vcombine.low %v5045, %v5045
    %v5273 = vunpack.c.l.s4 1966171168
    %v5274 = vunpack.c.0.s8 %v5273
    %v5275 = vlaneseq
    %v5276 = vshrl.u32 %v5275, 7
    %v5277 = vsub.s32 %v5274, %v5276
    %v5278 = vrot.slane %v5271, %v5277
    %v5280 = vunpack.c.l.s4 1966171168
    %v5281 = vunpack.c.0.s8 %v5280
    %v5282 = vlaneseq
    %v5283 = vshrl.u32 %v5282, 7
    %v5284 = vsub.s32 %v5281, %v5283
    %v5285 = vrot.slane %v5278, %v5284
    %5287 = vmatprep.subr.bf16.mxu0 0
    %5288 = vmatpush1.bf16.msra.mxu0 %v5206
    %5289 = vmatprep.subr.bf16.mxu0 0
    %5290 = vmatpush1.bf16.msra.mxu0 %v5207
    %5291 = vmatprep.subr.bf16.mxu0 0
    %5292 = vmatpush1.bf16.msra.mxu0 %v5208
    %5293 = vmatprep.subr.bf16.mxu0 0
    %5294 = vmatpush1.bf16.msra.mxu0 %v5209
    %5295 = vmatprep.subr.bf16.mxu0 0
    %5296 = vmatpush1.bf16.msra.mxu0 %v5210
    %5297 = vmatprep.subr.bf16.mxu0 0
    %5298 = vmatpush1.bf16.msra.mxu0 %v5211
    %5299 = vmatprep.subr.bf16.mxu0 0
    %5300 = vmatpush1.bf16.msra.mxu0 %v5212
    %5301 = vmatprep.subr.bf16.mxu0 0
    %5302 = vmatpush1.bf16.msra.mxu0 %v5213
    %5303 = vmatprep.subr.bf16.mxu0 0
    %5304 = vmatpush1.bf16.msra.mxu0 %v5214
    %5305 = vmatprep.subr.bf16.mxu0 0
    %5306 = vmatpush1.bf16.msra.mxu0 %v5215
    %5307 = vmatprep.subr.bf16.mxu0 0
    %5308 = vmatpush1.bf16.msra.mxu0 %v5216
    %5309 = vmatprep.subr.bf16.mxu0 0
    %5310 = vmatpush1.bf16.msra.mxu0 %v5217
    %5311 = vmatprep.subr.bf16.mxu0 0
    %5312 = vmatpush1.bf16.msra.mxu0 %v5218
    %5313 = vmatprep.subr.bf16.mxu0 0
    %5314 = vmatpush1.bf16.msra.mxu0 %v5219
    %5315 = vmatprep.subr.bf16.mxu0 0
    %5316 = vmatpush1.bf16.msra.mxu0 %v5220
    %5317 = vmatprep.subr.bf16.mxu0 0
    %5318 = vmatpush1.bf16.msra.mxu0 %v5221
    %5319 = vmatprep.mubr.bf16.mxu0 %v5071
    %5320 = vmatmul.mubr.bf16.gmra.mrb[0].mxu0 %v5070
    %v5321 = vpop.f32.mrb[0].mxu0
    %v5322 = vadd.f32 %v5285, %v5321
    %v5323 = vpop.f32.mrb[0].mxu0
    %v5324 = vpop.f32.mrb[0].mxu0
    %v5325 = vpop.f32.mrb[0].mxu0
    %5326 = vdwg.mxu0
    %5327 = vmatprep.subr.bf16.mxu0 0
    %5328 = vmatpush1.bf16.msra.mxu0 %v5222
    %5329 = vmatprep.subr.bf16.mxu0 0
    %5330 = vmatpush1.bf16.msra.mxu0 %v5223
    %5331 = vmatprep.subr.bf16.mxu0 0
    %5332 = vmatpush1.bf16.msra.mxu0 %v5224
    %5333 = vmatprep.subr.bf16.mxu0 0
    %5334 = vmatpush1.bf16.msra.mxu0 %v5225
    %5335 = vmatprep.subr.bf16.mxu0 0
    %5336 = vmatpush1.bf16.msra.mxu0 %v5226
    %5337 = vmatprep.subr.bf16.mxu0 0
    %5338 = vmatpush1.bf16.msra.mxu0 %v5227
    %5339 = vmatprep.subr.bf16.mxu0 0
    %5340 = vmatpush1.bf16.msra.mxu0 %v5228
    %5341 = vmatprep.subr.bf16.mxu0 0
    %5342 = vmatpush1.bf16.msra.mxu0 %v5229
    %5343 = vmatprep.subr.bf16.mxu0 0
    %5344 = vmatpush1.bf16.msra.mxu0 %v5230
    %5345 = vmatprep.subr.bf16.mxu0 0
    %5346 = vmatpush1.bf16.msra.mxu0 %v5231
    %5347 = vmatprep.subr.bf16.mxu0 0
    %5348 = vmatpush1.bf16.msra.mxu0 %v5232
    %5349 = vmatprep.subr.bf16.mxu0 0
    %5350 = vmatpush1.bf16.msra.mxu0 %v5233
    %5351 = vmatprep.subr.bf16.mxu0 0
    %5352 = vmatpush1.bf16.msra.mxu0 %v5234
    %5353 = vmatprep.subr.bf16.mxu0 0
    %5354 = vmatpush1.bf16.msra.mxu0 %v5235
    %5355 = vmatprep.subr.bf16.mxu0 0
    %5356 = vmatpush1.bf16.msra.mxu0 %v5236
    %5357 = vmatprep.subr.bf16.mxu0 0
    %5358 = vmatpush1.bf16.msra.mxu0 %v5237
    %5359 = vmatprep.mubr.bf16.mxu0 %v5073
    %5360 = vmatmul.mubr.bf16.gmra.mrb[0].mxu0 %v5072
    %v5361 = vpop.f32.mrb[0].mxu0
    %v5362 = vadd.f32 %v5322, %v5361
    %v5363 = vpop.f32.mrb[0].mxu0
    %v5364 = vpop.f32.mrb[0].mxu0
    %v5365 = vpop.f32.mrb[0].mxu0
    %5366 = vdwg.mxu0
    %v5369 = vunpack.c.l.s4 1966171168
    %v5370 = vunpack.c.0.s8 %v5369
    %v5371 = vlaneseq
    %v5372 = vshrl.u32 %v5371, 7
    %v5373 = vsub.s32 %v5370, %v5372
    %v5374 = vrot.slane %v5362, %v5373
    %v5375 = vcombine.high %v5374, %v5374
    %v5377 = vunpack.c.l.s4 1966171168
    %v5378 = vunpack.c.0.s8 %v5377
    %v5379 = vlaneseq
    %v5380 = vshrl.u32 %v5379, 7
    %v5381 = vsub.s32 %v5378, %v5380
    %v5382 = vrot.slane %v5374, %v5381
    %v5384 = vunpack.c.l.s4 1966171168
    %v5385 = vunpack.c.0.s8 %v5384
    %v5386 = vlaneseq
    %v5387 = vshrl.u32 %v5386, 7
    %v5388 = vsub.s32 %v5385, %v5387
    %v5389 = vrot.slane %v5375, %v5388
    %5392 = vst [vmem:[#allocation11] sm:$0x1] %v5382
    %5393 = vst [vmem:[#allocation11 + $0x1] sm:$0x1] %v5389
    // Predicated region
    $region38: #{audionet_forward.1} parent=1 // pred_check
      _
    $region39: #{audionet_forward.1} parent=1 // pred_check_branch
      %5395 = sbr.rel (0) target = $region41
    $region40: #{audionet_forward.1} parent=1 // pred_region
      %s5397 = ssub.s32 32, 32
      %5398 = vsyncadd [#allocation8], %s5397
      %s5399 = sshll.u32 [#allocation11], 4
      %s5400 = int_to_ptr.vmem [resolvable:$true] %s5399
      %5405 = dma.vmem_to_hbm [thread:$0]  %s5400, 32, %s9, [#allocation8], 16, 16, 1
    $region41: #{audionet_forward.1} parent=1 // pred_fallthru
      _
    // Predicated region
    $region42: #{audionet_forward.1} parent=1 // pred_check
      _
    $region43: #{audionet_forward.1} parent=1 // pred_check_branch
      %5407 = sbr.rel (0) target = $region45
    $region44: #{audionet_forward.1} parent=1 // pred_region
      %5408 = dma.done [#allocation8], 32
    $region45: #{audionet_forward.1} parent=1 // pred_fallthru
      _
    %5409 = vsyncpa [#allocation7], 1
    %5410 = vsyncpa [#allocation10], 1
    %5411 = vsyncpa [#allocation8], 1
  %5412 = vsyncmov [#allocation5]
  %s5413 = vpop.sfrf %5412
  %p5414 = scmp.eq.s32.totalorder %s5413, 0
  %p5415 = pneg %p5414
  %5417 = shalt.err (%p5415)
  %s5418 = scalar_lea.sflag [#allocation5], 1
  %5419 = vsyncmov %s5418
  %s5420 = vpop.sfrf %5419
  %p5421 = scmp.eq.s32.totalorder %s5420, 0
  %p5422 = pneg %p5421
  %5424 = shalt.err (%p5422)

</llo_original>
